<compile_context>
chip_gen: v7x
topology: tpu7x:2x2x1
jax: 0.10.0
libtpu: 0.0.40
codegen_flags: <defaults>
</compile_context>

<pallas_src>
import functools

import jax
import jax.numpy as jnp
from jax.experimental import pallas as pl
from jax.experimental.pallas import tpu as pltpu

D_IN = 784          # flattened 28x28 MNIST image
H1 = 512
H2 = 256


def _leaky_relu(x, slope=0.2):
    return jnp.where(x >= 0, x, slope * x)


def _round_up(n, m):
    return ((n + m - 1) // m) * m


def _disc_kernel(b3_sref,                       # scalar prefetch: (1,) f32 in SMEM
                 x_ref, w1_ref, b1_ref, w2_ref, b2_ref, w3r_ref,
                 o_ref):
    """One batch tile (TB rows) of the full 3-layer MLP."""
    # In-kernel bf16 downcast of the raw f32 input tile (no wrapper copy).
    x = x_ref[...].astype(w1_ref.dtype)                               # (TB, 784) bf16

    # Layer 1: (TB, 784) @ (784, 512) on the MXU, f32 accumulation.
    # Fused epilogue: bias + LeakyReLU + bf16 downcast in one pass.
    h1 = _leaky_relu(
        jnp.dot(x, w1_ref[...], preferred_element_type=jnp.float32)
        + b1_ref[...]).astype(w2_ref.dtype)                           # (TB, 512) bf16

    # Layer 2: (TB, 512) @ (512, 256).
    h2 = _leaky_relu(
        jnp.dot(h1, w2_ref[...], preferred_element_type=jnp.float32)
        + b2_ref[...]).astype(w3r_ref.dtype)                          # (TB, 256) bf16

    # Layer 3 (256 -> 1), computed lane-major:
    #   out[0, b] = sum_f w3[f] * h2[b, f]
    # w3r holds w3 in its first row (rows 1..7 are zero padding so the LHS is
    # an aligned 8-row tile).  Contracting the last dims of both operands
    # yields an (8, TB) result directly in lane-dense orientation; keep row 0.
    h3 = jax.lax.dot_general(
        w3r_ref[...], h2,
        dimension_numbers=(((1,), (1,)), ((), ())),
        preferred_element_type=jnp.float32)                           # (8, TB)
    logits = h3[0:1, :] + b3_sref[0]                                  # (1, TB)
    o_ref[...] = jax.nn.sigmoid(logits).astype(o_ref.dtype)


def prepare_params(params, compute_dtype=jnp.bfloat16):
    """One-time (out of the forward path) weight prep: bf16 casts, w3 row
    packing, bias reshapes.  Call once at parameter load / update time."""
    w1, b1, w2, b2, w3, b3 = params
    w1_p = w1.astype(compute_dtype)                                   # (784, 512)
    w2_p = w2.astype(compute_dtype)                                   # (512, 256)
    # Final layer stored lane-major: row 0 = w3[:, 0], rows 1..7 zero.
    w3r = jnp.zeros((8, H2), compute_dtype).at[0].set(
        w3[:, 0].astype(compute_dtype))
    b1_p = b1.reshape(1, H1).astype(jnp.float32)
    b2_p = b2.reshape(1, H2).astype(jnp.float32)
    b3_p = b3.reshape(1).astype(jnp.float32)      # scalar-prefetch operand
    return (w1_p, b1_p, w2_p, b2_p, w3r, b3_p)


@functools.partial(jax.jit, static_argnames=("batch_tile",))
def _forward_impl(x, prepped, batch_tile):
    w1_p, b1_p, w2_p, b2_p, w3r, b3_p = prepped
    B = x.shape[0]

    n_tiles = pl.cdiv(B, batch_tile)
    b_pad = n_tiles * batch_tile
    if b_pad != B:
        # Only the ragged tail tile needs padding (zero rows, no lane pad,
        # no dtype change).  Skipped entirely when B is a tile multiple.
        x = jnp.pad(x, ((0, b_pad - B), (0, 0)))

    const = lambda shape: pl.BlockSpec(shape, lambda i, b3s: (0,) * len(shape))

    out = pl.pallas_call(
        _disc_kernel,
        out_shape=jax.ShapeDtypeStruct((1, b_pad), jnp.float32),
        grid_spec=pltpu.PrefetchScalarGridSpec(
            num_scalar_prefetch=1,
            grid=(n_tiles,),
            in_specs=[
                pl.BlockSpec((batch_tile, D_IN), lambda i, b3s: (i, 0)),  # x tile
                const((D_IN, H1)), const((1, H1)),                        # layer 1
                const((H1, H2)),   const((1, H2)),                        # layer 2
                const((8, H2)),                                           # layer 3
            ],
            out_specs=pl.BlockSpec((1, batch_tile), lambda i, b3s: (0, i)),
        ),
        compiler_params=pltpu.CompilerParams(
            dimension_semantics=("parallel",),
            vmem_limit_bytes=32 * 1024 * 1024,
        ),
    )(b3_p, x, w1_p, b1_p, w2_p, b2_p, w3r)

    return out[0, :B][:, None]                    # (B, 1)


def discriminator_forward(x, prepped, *, max_batch_tile=512):
    """x: (B, 784) float32.  prepped: output of prepare_params().
    Returns (B, 1) float32 probabilities in [0, 1]."""
    B = x.shape[0]
    # Lane-dense output blocks need batch_tile % 128 == 0.  Pick the tile so
    # the grid has >= 2 "parallel" steps whenever B > 128 (v7x: both TCs),
    # capped at max_batch_tile to amortize per-step overhead on v6e/v5e.
    tile = min(max_batch_tile, max(128, _round_up(pl.cdiv(B, 2), 128)))
    return _forward_impl(x, prepped, batch_tile=tile)


def init_params(key):
    """Deterministic synthetic parameters with nn.Linear-like fan-in scaling."""
    keys = jax.random.split(key, 6)

    def linear(kw, kb, fan_in, fan_out):
        bound = 1.0 / jnp.sqrt(fan_in)
        w = jax.random.uniform(kw, (fan_in, fan_out), jnp.float32, -bound, bound)
        b = jax.random.uniform(kb, (1, fan_out), jnp.float32, -bound, bound)
        return w, b

    w1, b1 = linear(keys[0], keys[1], D_IN, H1)
    w2, b2 = linear(keys[2], keys[3], H1, H2)
    w3, b3 = linear(keys[4], keys[5], H2, 1)
    return (w1, b1, w2, b2, w3, b3)


def discriminator_ref(x, params):
    w1, b1, w2, b2, w3, b3 = params
    h = _leaky_relu(x @ w1 + b1)
    h = _leaky_relu(h @ w2 + b2)
    return jax.nn.sigmoid(h @ w3 + b3)


if __name__ == "__main__":
    key = jax.random.PRNGKey(0)
    k_x, k_p = jax.random.split(key)

    # Deliberately not a multiple of the batch tile: exercises the ragged
    # batch-padding path; adaptive tiling gives a 2-step parallel grid.
    B = 300
    x = jax.random.normal(k_x, (B, D_IN), jnp.float32)
    params = init_params(k_p)
    prepped = prepare_params(params)          # one-time weight prep (hoisted)

    out = discriminator_forward(x, prepped)
    out = jax.block_until_ready(out)

    ref = discriminator_ref(x, params)
    assert out.shape == (B, 1)
    max_err = float(jnp.max(jnp.abs(out - ref)))
    # bf16 MXU operands with f32 accumulation: loosened tolerance vs f32 ref.
    assert max_err < 3e-2, f"mismatch vs JAX reference (max abs err {max_err})"

    print("KERNEL_OK")
</pallas_src>

<mosaic_0001>
module attributes {stable_mosaic.version = 11 : i64} {
  func.func @_disc_kernel(%arg0: i32, %arg1: memref<1xf32, #tpu.memory_space<smem>>, %arg2: memref<256x784xf32, #tpu.memory_space<vmem>>, %arg3: memref<784x512xbf16, #tpu.memory_space<vmem>>, %arg4: memref<1x512xf32, #tpu.memory_space<vmem>>, %arg5: memref<512x256xbf16, #tpu.memory_space<vmem>>, %arg6: memref<1x256xf32, #tpu.memory_space<vmem>>, %arg7: memref<8x256xbf16, #tpu.memory_space<vmem>>, %arg8: memref<1x256xf32, #tpu.memory_space<vmem>>) attributes {dimension_semantics = [#tpu.dimension_semantics<parallel>], iteration_bounds = array<i64: 2>, scalar_prefetch = 1 : i64, scratch_operands = 0 : i64, tpu.core_type = #tpu.core_type<tc>, window_params = [{transform_indices = @transform_0, window_bounds = array<i64: 256, 784>}, {pipeline_mode = #tpu.pipeline_mode<synchronous>, transform_indices = @transform_1, window_bounds = array<i64: 784, 512>}, {pipeline_mode = #tpu.pipeline_mode<synchronous>, transform_indices = @transform_2, window_bounds = array<i64: 1, 512>}, {pipeline_mode = #tpu.pipeline_mode<synchronous>, transform_indices = @transform_3, window_bounds = array<i64: 512, 256>}, {pipeline_mode = #tpu.pipeline_mode<synchronous>, transform_indices = @transform_4, window_bounds = array<i64: 1, 256>}, {pipeline_mode = #tpu.pipeline_mode<synchronous>, transform_indices = @transform_5, window_bounds = array<i64: 8, 256>}, {transform_indices = @transform_6, window_bounds = array<i64: 1, 256>}]} {
    %c0 = arith.constant 0 : index
    %c0_0 = arith.constant 0 : index
    %0 = vector.load %arg2[%c0, %c0_0] : memref<256x784xf32, #tpu.memory_space<vmem>>, vector<256x784xf32>
    %1 = arith.truncf %0 : vector<256x784xf32> to vector<256x784xbf16>
    %c0_1 = arith.constant 0 : index
    %c0_2 = arith.constant 0 : index
    %2 = vector.load %arg3[%c0_1, %c0_2] : memref<784x512xbf16, #tpu.memory_space<vmem>>, vector<784x512xbf16>
    %cst = arith.constant dense<0.000000e+00> : vector<256x512xf32>
    %3 = tpu.matmul %1, %2, %cst {dimension_numbers = #tpu.dot_dimension_numbers<[1], [0], [0], [1], [0, 0, 1, 1], [], []>} : vector<256x784xbf16>, vector<784x512xbf16>, vector<256x512xf32> -> vector<256x512xf32>
    %c0_3 = arith.constant 0 : index
    %c0_4 = arith.constant 0 : index
    %4 = vector.load %arg4[%c0_3, %c0_4] : memref<1x512xf32, #tpu.memory_space<vmem>>, vector<1x512xf32>
    %5 = vector.broadcast %4 : vector<1x512xf32> to vector<256x512xf32>
    %6 = arith.addf %3, %5 : vector<256x512xf32>
    %cst_5 = arith.constant 0.000000e+00 : f32
    %7 = vector.broadcast %cst_5 : f32 to vector<256x512xf32>
    %8 = arith.cmpf oge, %6, %7 : vector<256x512xf32>
    %cst_6 = arith.constant 2.000000e-01 : f32
    %9 = vector.broadcast %cst_6 : f32 to vector<256x512xf32>
    %10 = arith.mulf %9, %6 : vector<256x512xf32>
    %11 = arith.select %8, %6, %10 : vector<256x512xi1>, vector<256x512xf32>
    %12 = arith.truncf %11 : vector<256x512xf32> to vector<256x512xbf16>
    %c0_7 = arith.constant 0 : index
    %c0_8 = arith.constant 0 : index
    %13 = vector.load %arg5[%c0_7, %c0_8] : memref<512x256xbf16, #tpu.memory_space<vmem>>, vector<512x256xbf16>
    %cst_9 = arith.constant dense<0.000000e+00> : vector<256x256xf32>
    %14 = tpu.matmul %12, %13, %cst_9 {dimension_numbers = #tpu.dot_dimension_numbers<[1], [0], [0], [1], [0, 0, 1, 1], [], []>} : vector<256x512xbf16>, vector<512x256xbf16>, vector<256x256xf32> -> vector<256x256xf32>
    %c0_10 = arith.constant 0 : index
    %c0_11 = arith.constant 0 : index
    %15 = vector.load %arg6[%c0_10, %c0_11] : memref<1x256xf32, #tpu.memory_space<vmem>>, vector<1x256xf32>
    %16 = vector.broadcast %15 : vector<1x256xf32> to vector<256x256xf32>
    %17 = arith.addf %14, %16 : vector<256x256xf32>
    %cst_12 = arith.constant 0.000000e+00 : f32
    %18 = vector.broadcast %cst_12 : f32 to vector<256x256xf32>
    %19 = arith.cmpf oge, %17, %18 : vector<256x256xf32>
    %cst_13 = arith.constant 2.000000e-01 : f32
    %20 = vector.broadcast %cst_13 : f32 to vector<256x256xf32>
    %21 = arith.mulf %20, %17 : vector<256x256xf32>
    %22 = arith.select %19, %17, %21 : vector<256x256xi1>, vector<256x256xf32>
    %23 = arith.truncf %22 : vector<256x256xf32> to vector<256x256xbf16>
    %c0_14 = arith.constant 0 : index
    %c0_15 = arith.constant 0 : index
    %24 = vector.load %arg7[%c0_14, %c0_15] : memref<8x256xbf16, #tpu.memory_space<vmem>>, vector<8x256xbf16>
    %cst_16 = arith.constant dense<0.000000e+00> : vector<8x256xf32>
    %25 = tpu.matmul %24, %23, %cst_16 {dimension_numbers = #tpu.dot_dimension_numbers<[1], [1], [0], [0], [0, 0, 1, 0], [], []>} : vector<8x256xbf16>, vector<256x256xbf16>, vector<8x256xf32> -> vector<8x256xf32>
    %26 = vector.extract_strided_slice %25 {offsets = [0, 0], sizes = [1, 256], strides = [1, 1]} : vector<8x256xf32> to vector<1x256xf32>
    %c0_17 = arith.constant 0 : index
    %27 = memref.load %arg1[%c0_17] : memref<1xf32, #tpu.memory_space<smem>>
    %28 = vector.broadcast %27 : f32 to vector<1x256xf32>
    %29 = arith.addf %26, %28 : vector<1x256xf32>
    %30 = arith.negf %29 : vector<1x256xf32>
    %31 = math.exp %30 : vector<1x256xf32>
    %cst_18 = arith.constant 1.000000e+00 : f32
    %32 = vector.broadcast %cst_18 : f32 to vector<1x256xf32>
    %33 = arith.addf %32, %31 : vector<1x256xf32>
    %34 = arith.divf %32, %33 : vector<1x256xf32>
    %c0_19 = arith.constant 0 : index
    %c0_20 = arith.constant 0 : index
    %35 = vector.load %arg8[%c0_19, %c0_20] : memref<1x256xf32, #tpu.memory_space<vmem>>, vector<1x256xf32>
    tpu.vector_store %arg8[%c0_19, %c0_20], %34 {strides = array<i32>} : memref<1x256xf32, #tpu.memory_space<vmem>>, vector<1x256xf32>,
    return
  }
  func.func @transform_0(%arg0: i32, %arg1: memref<1xf32, #tpu.memory_space<smem>>) -> (i32, i32) {
    %c0_i32 = arith.constant 0 : i32
    %c0_i32_0 = arith.constant 0 : i32
    return %arg0, %c0_i32 : i32, i32
  }
  func.func @transform_1(%arg0: i32, %arg1: memref<1xf32, #tpu.memory_space<smem>>) -> (i32, i32) {
    %c0_i32 = arith.constant 0 : i32
    %c0_i32_0 = arith.constant 0 : i32
    %c0_i32_1 = arith.constant 0 : i32
    return %c0_i32, %c0_i32_0 : i32, i32
  }
  func.func @transform_2(%arg0: i32, %arg1: memref<1xf32, #tpu.memory_space<smem>>) -> (i32, i32) {
    %c0_i32 = arith.constant 0 : i32
    %c0_i32_0 = arith.constant 0 : i32
    %c0_i32_1 = arith.constant 0 : i32
    return %c0_i32, %c0_i32_0 : i32, i32
  }
  func.func @transform_3(%arg0: i32, %arg1: memref<1xf32, #tpu.memory_space<smem>>) -> (i32, i32) {
    %c0_i32 = arith.constant 0 : i32
    %c0_i32_0 = arith.constant 0 : i32
    %c0_i32_1 = arith.constant 0 : i32
    return %c0_i32, %c0_i32_0 : i32, i32
  }
  func.func @transform_4(%arg0: i32, %arg1: memref<1xf32, #tpu.memory_space<smem>>) -> (i32, i32) {
    %c0_i32 = arith.constant 0 : i32
    %c0_i32_0 = arith.constant 0 : i32
    %c0_i32_1 = arith.constant 0 : i32
    return %c0_i32, %c0_i32_0 : i32, i32
  }
  func.func @transform_5(%arg0: i32, %arg1: memref<1xf32, #tpu.memory_space<smem>>) -> (i32, i32) {
    %c0_i32 = arith.constant 0 : i32
    %c0_i32_0 = arith.constant 0 : i32
    %c0_i32_1 = arith.constant 0 : i32
    return %c0_i32, %c0_i32_0 : i32, i32
  }
  func.func @transform_6(%arg0: i32, %arg1: memref<1xf32, #tpu.memory_space<smem>>) -> (i32, i32) {
    %c0_i32 = arith.constant 0 : i32
    %c0_i32_0 = arith.constant 0 : i32
    return %c0_i32, %arg0 : i32, i32
  }
}

</mosaic_0001>

<llo_original>
// kernel: _forward_impl.1
$region0: #{_forward_impl.1}
  #allocation0 [shape = 'u32[]', space=smem, size = 0x4, offset = 0x4, fixed_abs, tag = 'smem constant byte address 0x4 - core index']
  #allocation1 [shape = 'u32[144,128]{1,0:T(1,128)}', space=vmem, size = 0x12000, scoped, tag = 'internal scratch']
  #allocation2 [shape = 's32[1]{0}', space=sflag, size = 0x4, scoped, tag = 'scoped memory for _forward_impl.1']
  #allocation3 [shape = 'f32[1]{0:T(128)S(6)}', space=smem, size = 0x200, scoped, tag = 'prefetched SMEM operand 0']
  %s0 = inlined_call_operand.<no memory space> [shape: f32[1], index: 0, kind: input, shape index: {}]
  %s1 = inlined_call_operand.vmem [shape: f32[512,784], index: 1, kind: input, shape index: {}]
  %s2 = inlined_call_operand.vmem [shape: bf16[784,512], index: 2, kind: input, shape index: {}]
  %s3 = inlined_call_operand.vmem [shape: f32[1,512], index: 3, kind: input, shape index: {}]
  %s4 = inlined_call_operand.vmem [shape: bf16[512,256], index: 4, kind: input, shape index: {}]
  %s5 = inlined_call_operand.vmem [shape: f32[1,256], index: 5, kind: input, shape index: {}]
  %s6 = inlined_call_operand.vmem [shape: bf16[8,256], index: 6, kind: input, shape index: {}]
  %s7 = inlined_call_operand.vmem [shape: f32[1,512], index: 7, kind: output, shape index: {}]
  %s8 = sld [smem:[#allocation0]]
  $region57: #{_forward_impl.1} parent=0
    _
  %s10 = ssub.s32 1, %s8
  %s11 = scalar_select 0, %s10, %s8
  %12 = sst [smem:[#allocation3]] %s0
  loop: start=0, step=1, limit=4
  $region2: #{_forward_impl.1} parent=0 // loop_pre_header
    _
  $region3: #{_forward_impl.1} parent=0 // loop_header
    %s14 = sphi 0, %s18
    %p15 = scmp.ge.s32.totalorder %s14, 4
    %s24 = sphi 0, %s26
    %s27 = sphi 0, %s24
    %s28 = sphi 0, %s27
    %s44 = sphi 0, %s28
    %s48 = sphi 0, %s48
    %s50 = sphi 0, %s48
    %s51 = sphi 0, %s50
    %s65 = sphi 0, %s51
    %s69 = sphi 0, %s69
    %s71 = sphi 0, %s69
    %s72 = sphi 0, %s71
    %s86 = sphi 0, %s72
    %s90 = sphi 0, %s90
    %s92 = sphi 0, %s90
    %s93 = sphi 0, %s92
    %s107 = sphi 0, %s93
    %s111 = sphi 0, %s111
    %s113 = sphi 0, %s111
    %s114 = sphi 0, %s113
    %s128 = sphi 0, %s114
    %s132 = sphi 0, %s132
    %s134 = sphi 0, %s132
    %s135 = sphi 0, %s134
    %s149 = sphi 0, %s135
    %s155 = sphi 0, %s157
    %s158 = sphi 0, %s155
    %s159 = sphi 0, %s158
    %s175 = sphi 0, %s159
  $region4: #{_forward_impl.1} parent=0 // loop_header_branch
    %17 = sbr.rel (%p15) target = $region8
  $region5: #{_forward_impl.1} parent=0 // loop_body
    %s19 = ssub.s32 %s14, 1
    %s20 = ssub.s32 %s14, 2
    %s21 = sadd.s32 %s14, 1
    %s22 = ssub.s32 %s14, %s21
    %p23 = scmp.eq.s32.totalorder %s22, 0
    %s25 = sadd.s32 %s24, 1
    %s26 = scalar_select %p23, %s24, %s25
    %p29 = pneg %p23
    %p30 = scmp.eq.s32.totalorder %s14, 1
    %p31 = por %p29, %p30
    %p32 = scmp.ne.s32.totalorder %s24, %s27
    %p33 = scmp.eq.s32.totalorder %s14, 0
    %p34 = por %p32, %p33
    %p35 = scmp.ne.s32.totalorder %s24, %s27
    %p36 = scmp.eq.s32.totalorder %s19, 1
    %p37 = por %p35, %p36
    %p38 = scmp.ne.s32.totalorder %s27, %s28
    %p39 = scmp.eq.s32.totalorder %s19, 0
    %p40 = por %p38, %p39
    %p41 = scmp.ne.s32.totalorder %s27, %s28
    %p42 = scmp.eq.s32.totalorder %s20, 1
    %p43 = por %p41, %p42
    %p45 = scmp.ne.s32.totalorder %s28, %s44
    %p46 = scmp.eq.s32.totalorder %s20, 0
    %p47 = por %p45, %p46
    %s49 = sadd.s32 %s48, 1
    %p52 = scmp.eq.s32.totalorder %s14, 1
    %p53 = scmp.ne.s32.totalorder %s48, %s50
    %p54 = scmp.eq.s32.totalorder %s14, 0
    %p55 = por %p53, %p54
    %p56 = scmp.ne.s32.totalorder %s48, %s50
    %p57 = scmp.eq.s32.totalorder %s19, 1
    %p58 = por %p56, %p57
    %p59 = scmp.ne.s32.totalorder %s50, %s51
    %p60 = scmp.eq.s32.totalorder %s19, 0
    %p61 = por %p59, %p60
    %p62 = scmp.ne.s32.totalorder %s50, %s51
    %p63 = scmp.eq.s32.totalorder %s20, 1
    %p64 = por %p62, %p63
    %p66 = scmp.ne.s32.totalorder %s51, %s65
    %p67 = scmp.eq.s32.totalorder %s20, 0
    %p68 = por %p66, %p67
    %s70 = sadd.s32 %s69, 1
    %p73 = scmp.eq.s32.totalorder %s14, 1
    %p74 = scmp.ne.s32.totalorder %s69, %s71
    %p75 = scmp.eq.s32.totalorder %s14, 0
    %p76 = por %p74, %p75
    %p77 = scmp.ne.s32.totalorder %s69, %s71
    %p78 = scmp.eq.s32.totalorder %s19, 1
    %p79 = por %p77, %p78
    %p80 = scmp.ne.s32.totalorder %s71, %s72
    %p81 = scmp.eq.s32.totalorder %s19, 0
    %p82 = por %p80, %p81
    %p83 = scmp.ne.s32.totalorder %s71, %s72
    %p84 = scmp.eq.s32.totalorder %s20, 1
    %p85 = por %p83, %p84
    %p87 = scmp.ne.s32.totalorder %s72, %s86
    %p88 = scmp.eq.s32.totalorder %s20, 0
    %p89 = por %p87, %p88
    %s91 = sadd.s32 %s90, 1
    %p94 = scmp.eq.s32.totalorder %s14, 1
    %p95 = scmp.ne.s32.totalorder %s90, %s92
    %p96 = scmp.eq.s32.totalorder %s14, 0
    %p97 = por %p95, %p96
    %p98 = scmp.ne.s32.totalorder %s90, %s92
    %p99 = scmp.eq.s32.totalorder %s19, 1
    %p100 = por %p98, %p99
    %p101 = scmp.ne.s32.totalorder %s92, %s93
    %p102 = scmp.eq.s32.totalorder %s19, 0
    %p103 = por %p101, %p102
    %p104 = scmp.ne.s32.totalorder %s92, %s93
    %p105 = scmp.eq.s32.totalorder %s20, 1
    %p106 = por %p104, %p105
    %p108 = scmp.ne.s32.totalorder %s93, %s107
    %p109 = scmp.eq.s32.totalorder %s20, 0
    %p110 = por %p108, %p109
    %s112 = sadd.s32 %s111, 1
    %p115 = scmp.eq.s32.totalorder %s14, 1
    %p116 = scmp.ne.s32.totalorder %s111, %s113
    %p117 = scmp.eq.s32.totalorder %s14, 0
    %p118 = por %p116, %p117
    %p119 = scmp.ne.s32.totalorder %s111, %s113
    %p120 = scmp.eq.s32.totalorder %s19, 1
    %p121 = por %p119, %p120
    %p122 = scmp.ne.s32.totalorder %s113, %s114
    %p123 = scmp.eq.s32.totalorder %s19, 0
    %p124 = por %p122, %p123
    %p125 = scmp.ne.s32.totalorder %s113, %s114
    %p126 = scmp.eq.s32.totalorder %s20, 1
    %p127 = por %p125, %p126
    %p129 = scmp.ne.s32.totalorder %s114, %s128
    %p130 = scmp.eq.s32.totalorder %s20, 0
    %p131 = por %p129, %p130
    %s133 = sadd.s32 %s132, 1
    %p136 = scmp.eq.s32.totalorder %s14, 1
    %p137 = scmp.ne.s32.totalorder %s132, %s134
    %p138 = scmp.eq.s32.totalorder %s14, 0
    %p139 = por %p137, %p138
    %p140 = scmp.ne.s32.totalorder %s132, %s134
    %p141 = scmp.eq.s32.totalorder %s19, 1
    %p142 = por %p140, %p141
    %p143 = scmp.ne.s32.totalorder %s134, %s135
    %p144 = scmp.eq.s32.totalorder %s19, 0
    %p145 = por %p143, %p144
    %p146 = scmp.ne.s32.totalorder %s134, %s135
    %p147 = scmp.eq.s32.totalorder %s20, 1
    %p148 = por %p146, %p147
    %p150 = scmp.ne.s32.totalorder %s135, %s149
    %p151 = scmp.eq.s32.totalorder %s20, 0
    %p152 = por %p150, %p151
    %s153 = ssub.s32 %s14, %s21
    %p154 = scmp.eq.s32.totalorder %s153, 0
    %s156 = sadd.s32 %s155, 1
    %s157 = scalar_select %p154, %s155, %s156
    %p160 = pneg %p154
    %p161 = scmp.eq.s32.totalorder %s14, 1
    %p162 = por %p160, %p161
    %p163 = scmp.ne.s32.totalorder %s155, %s158
    %p164 = scmp.eq.s32.totalorder %s14, 0
    %p165 = por %p163, %p164
    %p166 = scmp.ne.s32.totalorder %s155, %s158
    %p167 = scmp.eq.s32.totalorder %s19, 1
    %p168 = por %p166, %p167
    %p169 = scmp.ne.s32.totalorder %s158, %s159
    %p170 = scmp.eq.s32.totalorder %s19, 0
    %p171 = por %p169, %p170
    %p172 = scmp.ne.s32.totalorder %s158, %s159
    %p173 = scmp.eq.s32.totalorder %s20, 1
    %p174 = por %p172, %p173
    %p176 = scmp.ne.s32.totalorder %s159, %s175
    %p177 = scmp.eq.s32.totalorder %s20, 0
    %p178 = por %p176, %p177
    %p179 = scmp.le.s32.totalorder 1, %s14
    %p180 = scmp.lt.s32.totalorder %s14, 3
    %p181 = pnand %p179, %p180
    %p182 = pneg %p181
    // Predicated region
    $region9: #{_forward_impl.1} parent=5 // pred_check
      _
    $region10: #{_forward_impl.1} parent=5 // pred_check_branch
      %184 = sbr.rel (%p181) target = $region12
    $region11: #{_forward_impl.1} parent=5 // pred_region
      %s185 = ssub.s32 %s14, 1
      // Predicated region
      $region13: #{_forward_impl.1} parent=11 // pred_check
        %p186 = pneg %p61
      $region14: #{_forward_impl.1} parent=11 // pred_check_branch
        %188 = sbr.rel (%p186) target = $region16
      $region15: #{_forward_impl.1} parent=11 // pred_region
        _
      $region16: #{_forward_impl.1} parent=11 // pred_fallthru
        _
      // Predicated region
      $region17: #{_forward_impl.1} parent=11 // pred_check
        %p189 = pneg %p82
      $region18: #{_forward_impl.1} parent=11 // pred_check_branch
        %191 = sbr.rel (%p189) target = $region20
      $region19: #{_forward_impl.1} parent=11 // pred_region
        _
      $region20: #{_forward_impl.1} parent=11 // pred_fallthru
        _
      // Predicated region
      $region21: #{_forward_impl.1} parent=11 // pred_check
        %p192 = pneg %p103
      $region22: #{_forward_impl.1} parent=11 // pred_check_branch
        %194 = sbr.rel (%p192) target = $region24
      $region23: #{_forward_impl.1} parent=11 // pred_region
        _
      $region24: #{_forward_impl.1} parent=11 // pred_fallthru
        _
      // Predicated region
      $region25: #{_forward_impl.1} parent=11 // pred_check
        %p195 = pneg %p124
      $region26: #{_forward_impl.1} parent=11 // pred_check_branch
        %197 = sbr.rel (%p195) target = $region28
      $region27: #{_forward_impl.1} parent=11 // pred_region
        _
      $region28: #{_forward_impl.1} parent=11 // pred_fallthru
        _
      // Predicated region
      $region29: #{_forward_impl.1} parent=11 // pred_check
        %p198 = pneg %p145
      $region30: #{_forward_impl.1} parent=11 // pred_check_branch
        %200 = sbr.rel (%p198) target = $region32
      $region31: #{_forward_impl.1} parent=11 // pred_region
        _
      $region32: #{_forward_impl.1} parent=11 // pred_fallthru
        _
    $region12: #{_forward_impl.1} parent=5 // pred_fallthru
      _
    %p201 = scmp.lt.s32.totalorder %s14, 2
    // Predicated region
    $region33: #{_forward_impl.1} parent=5 // pred_check
      %p202 = pneg %p201
    $region34: #{_forward_impl.1} parent=5 // pred_check_branch
      %204 = sbr.rel (%p202) target = $region36
    $region35: #{_forward_impl.1} parent=5 // pred_region
      // Predicated region
      $region37: #{_forward_impl.1} parent=35 // pred_check
        %p205 = pneg %p34
      $region38: #{_forward_impl.1} parent=35 // pred_check_branch
        %207 = sbr.rel (%p205) target = $region40
      $region39: #{_forward_impl.1} parent=35 // pred_region
        %s208 = smul.u32 32, %s14
        %p209 = scmp.lt.s32.totalorder %s208, 63
        %s210 = scalar_select %p209, %s208, 63
        %s211 = smul.addr %s210, 7
        %s212 = smul.addr %s211, 8
        %s213 = scalar_lea.vmem %s1, %s212
        %s214 = smul.u32 32, %s14
      $region40: #{_forward_impl.1} parent=35 // pred_fallthru
        _
    $region36: #{_forward_impl.1} parent=5 // pred_fallthru
      _
    %p215 = scmp.le.s32.totalorder 1, %s14
    %p216 = scmp.lt.s32.totalorder %s14, 3
    %p217 = pnand %p215, %p216
    %p218 = pneg %p217
    // Predicated region
    $region41: #{_forward_impl.1} parent=5 // pred_check
      _
    $region42: #{_forward_impl.1} parent=5 // pred_check_branch
      %220 = sbr.rel (%p217) target = $region44
    $region43: #{_forward_impl.1} parent=5 // pred_region
      %s221 = ssub.s32 %s14, 1
      %s222 = smul.u32 32, %s19
      %p223 = scmp.lt.s32.totalorder %s222, 63
      %s224 = scalar_select %p223, %s222, 63
      %s225 = smul.addr %s224, 7
      %s226 = smul.addr %s225, 8
      %s227 = scalar_lea.vmem %s1, %s226
      %p228 = pneg %p40
      %p229 = pneg %p37
      %p230 = pneg %p61
      %p231 = pneg %p58
      %p232 = pneg %p82
      %p233 = pneg %p79
      %p234 = pneg %p103
      %p235 = pneg %p100
      %p236 = pneg %p124
      %p237 = pneg %p121
      %p238 = pneg %p145
      %p239 = pneg %p142
      %p240 = pneg %p171
      %p241 = pneg %p168
      %s242 = smul.u32 2, %s19
      %p243 = scmp.lt.s32.totalorder %s242, 3
      %s244 = scalar_select %p243, %s242, 3
      %s245 = scalar_lea.vmem %s7, %s244
      %s246 = smul.u32 32, %s19
      %p247 = scmp.lt.s32.totalorder %s246, 63
      %s248 = scalar_select %p247, %s246, 63
      %s249 = smul.addr %s248, 7
      %s250 = smul.addr %s249, 8
      %s251 = scalar_lea.vmem %s1, %s250
      %s252 = smul.u32 32, %s19
      %s253 = smul.u32 2, %s19
      %p254 = scmp.lt.s32.totalorder %s253, 3
      %s255 = scalar_select %p254, %s253, 3
      %s256 = scalar_lea.vmem %s7, %s255
      %s257 = smul.u32 2, %s19
      %v259 = vld [vmem:[%s251] sm:$0xff]
      %v260 = vld [vmem:[%s251 + $0x8] sm:$0xff]
      %v261 = vld [vmem:[%s251 + $0x10] sm:$0xff]
      %v262 = vld [vmem:[%s251 + $0x18] sm:$0xff]
      %v263 = vld [vmem:[%s251 + $0x20] sm:$0xff]
      %v264 = vld [vmem:[%s251 + $0x28] sm:$0xff]
      %v265 = vld [vmem:[%s251 + $0x30] sm:$0xff]
      %v266 = vld [vmem:[%s251 + $0x38] sm:$0xff]
      %v267 = vld [vmem:[%s251 + $0x40] sm:$0xff]
      %v268 = vld [vmem:[%s251 + $0x48] sm:$0xff]
      %v269 = vld [vmem:[%s251 + $0x50] sm:$0xff]
      %v270 = vld [vmem:[%s251 + $0x58] sm:$0xff]
      %v271 = vld [vmem:[%s251 + $0x60] sm:$0xff]
      %v272 = vld [vmem:[%s251 + $0x68] sm:$0xff]
      %v273 = vld [vmem:[%s251 + $0x70] sm:$0xff]
      %v274 = vld [vmem:[%s251 + $0x78] sm:$0xff]
      %v275 = vld [vmem:[%s251 + $0x80] sm:$0xff]
      %v276 = vld [vmem:[%s251 + $0x88] sm:$0xff]
      %v277 = vld [vmem:[%s251 + $0x90] sm:$0xff]
      %v278 = vld [vmem:[%s251 + $0x98] sm:$0xff]
      %v279 = vld [vmem:[%s251 + $0xa0] sm:$0xff]
      %v280 = vld [vmem:[%s251 + $0xa8] sm:$0xff]
      %v281 = vld [vmem:[%s251 + $0xb0] sm:$0xff]
      %v282 = vld [vmem:[%s251 + $0xb8] sm:$0xff]
      %v283 = vld [vmem:[%s251 + $0xc0] sm:$0xff]
      %v284 = vld [vmem:[%s251 + $0xc8] sm:$0xff]
      %v285 = vld [vmem:[%s251 + $0xd0] sm:$0xff]
      %v286 = vld [vmem:[%s251 + $0xd8] sm:$0xff]
      %v287 = vld [vmem:[%s251 + $0xe0] sm:$0xff]
      %v288 = vld [vmem:[%s251 + $0xe8] sm:$0xff]
      %v289 = vld [vmem:[%s251 + $0xf0] sm:$0xff]
      %v290 = vld [vmem:[%s251 + $0xf8] sm:$0xff]
      %v291 = vld [vmem:[%s251 + $0x100] sm:$0xff]
      %v292 = vld [vmem:[%s251 + $0x108] sm:$0xff]
      %v293 = vld [vmem:[%s251 + $0x110] sm:$0xff]
      %v294 = vld [vmem:[%s251 + $0x118] sm:$0xff]
      %v295 = vld [vmem:[%s251 + $0x120] sm:$0xff]
      %v296 = vld [vmem:[%s251 + $0x128] sm:$0xff]
      %v297 = vld [vmem:[%s251 + $0x130] sm:$0xff]
      %v298 = vld [vmem:[%s251 + $0x138] sm:$0xff]
      %v299 = vld [vmem:[%s251 + $0x140] sm:$0xff]
      %v300 = vld [vmem:[%s251 + $0x148] sm:$0xff]
      %v301 = vld [vmem:[%s251 + $0x150] sm:$0xff]
      %v302 = vld [vmem:[%s251 + $0x158] sm:$0xff]
      %v303 = vld [vmem:[%s251 + $0x160] sm:$0xff]
      %v304 = vld [vmem:[%s251 + $0x168] sm:$0xff]
      %v305 = vld [vmem:[%s251 + $0x170] sm:$0xff]
      %v306 = vld [vmem:[%s251 + $0x178] sm:$0xff]
      %v307 = vld [vmem:[%s251 + $0x180] sm:$0xff]
      %v308 = vld [vmem:[%s251 + $0x188] sm:$0xff]
      %v309 = vld [vmem:[%s251 + $0x190] sm:$0xff]
      %v310 = vld [vmem:[%s251 + $0x198] sm:$0xff]
      %v311 = vld [vmem:[%s251 + $0x1a0] sm:$0xff]
      %v312 = vld [vmem:[%s251 + $0x1a8] sm:$0xff]
      %v313 = vld [vmem:[%s251 + $0x1b0] sm:$0xff]
      %v314 = vld [vmem:[%s251 + $0x1b8] sm:$0xff]
      %v315 = vld [vmem:[%s251 + $0x1c0] sm:$0xff]
      %v316 = vld [vmem:[%s251 + $0x1c8] sm:$0xff]
      %v317 = vld [vmem:[%s251 + $0x1d0] sm:$0xff]
      %v318 = vld [vmem:[%s251 + $0x1d8] sm:$0xff]
      %v319 = vld [vmem:[%s251 + $0x1e0] sm:$0xff]
      %v320 = vld [vmem:[%s251 + $0x1e8] sm:$0xff]
      %v321 = vld [vmem:[%s251 + $0x1f0] sm:$0xff]
      %v322 = vld [vmem:[%s251 + $0x1f8] sm:$0xff]
      %v323 = vld [vmem:[%s251 + $0x200] sm:$0xff]
      %v324 = vld [vmem:[%s251 + $0x208] sm:$0xff]
      %v325 = vld [vmem:[%s251 + $0x210] sm:$0xff]
      %v326 = vld [vmem:[%s251 + $0x218] sm:$0xff]
      %v327 = vld [vmem:[%s251 + $0x220] sm:$0xff]
      %v328 = vld [vmem:[%s251 + $0x228] sm:$0xff]
      %v329 = vld [vmem:[%s251 + $0x230] sm:$0xff]
      %v330 = vld [vmem:[%s251 + $0x238] sm:$0xff]
      %v331 = vld [vmem:[%s251 + $0x240] sm:$0xff]
      %v332 = vld [vmem:[%s251 + $0x248] sm:$0xff]
      %v333 = vld [vmem:[%s251 + $0x250] sm:$0xff]
      %v334 = vld [vmem:[%s251 + $0x258] sm:$0xff]
      %v335 = vld [vmem:[%s251 + $0x260] sm:$0xff]
      %v336 = vld [vmem:[%s251 + $0x268] sm:$0xff]
      %v337 = vld [vmem:[%s251 + $0x270] sm:$0xff]
      %v338 = vld [vmem:[%s251 + $0x278] sm:$0xff]
      %v339 = vld [vmem:[%s251 + $0x280] sm:$0xff]
      %v340 = vld [vmem:[%s251 + $0x288] sm:$0xff]
      %v341 = vld [vmem:[%s251 + $0x290] sm:$0xff]
      %v342 = vld [vmem:[%s251 + $0x298] sm:$0xff]
      %v343 = vld [vmem:[%s251 + $0x2a0] sm:$0xff]
      %v344 = vld [vmem:[%s251 + $0x2a8] sm:$0xff]
      %v345 = vld [vmem:[%s251 + $0x2b0] sm:$0xff]
      %v346 = vld [vmem:[%s251 + $0x2b8] sm:$0xff]
      %v347 = vld [vmem:[%s251 + $0x2c0] sm:$0xff]
      %v348 = vld [vmem:[%s251 + $0x2c8] sm:$0xff]
      %v349 = vld [vmem:[%s251 + $0x2d0] sm:$0xff]
      %v350 = vld [vmem:[%s251 + $0x2d8] sm:$0xff]
      %v351 = vld [vmem:[%s251 + $0x2e0] sm:$0xff]
      %v352 = vld [vmem:[%s251 + $0x2e8] sm:$0xff]
      %v353 = vld [vmem:[%s251 + $0x2f0] sm:$0xff]
      %v354 = vld [vmem:[%s251 + $0x2f8] sm:$0xff]
      %v355 = vld [vmem:[%s251 + $0x300] sm:$0xff]
      %v356 = vld [vmem:[%s251 + $0x308] sm:$0xff]
      %v357 = vld [vmem:[%s251 + $0x310] sm:$0xff]
      %v358 = vld [vmem:[%s251 + $0x318] sm:$0xff]
      %v359 = vld [vmem:[%s251 + $0x320] sm:$0xff]
      %v360 = vld [vmem:[%s251 + $0x328] sm:$0xff]
      %v361 = vld [vmem:[%s251 + $0x330] sm:$0xff]
      %v362 = vld [vmem:[%s251 + $0x338] sm:$0xff]
      %v363 = vld [vmem:[%s251 + $0x340] sm:$0xff]
      %v364 = vld [vmem:[%s251 + $0x348] sm:$0xff]
      %v365 = vld [vmem:[%s251 + $0x350] sm:$0xff]
      %v366 = vld [vmem:[%s251 + $0x358] sm:$0xff]
      %v367 = vld [vmem:[%s251 + $0x360] sm:$0xff]
      %v368 = vld [vmem:[%s251 + $0x368] sm:$0xff]
      %v369 = vld [vmem:[%s251 + $0x370] sm:$0xff]
      %v370 = vld [vmem:[%s251 + $0x378] sm:$0xff]
      %v371 = vld [vmem:[%s251 + $0x380] sm:$0xff]
      %v372 = vld [vmem:[%s251 + $0x388] sm:$0xff]
      %v373 = vld [vmem:[%s251 + $0x390] sm:$0xff]
      %v374 = vld [vmem:[%s251 + $0x398] sm:$0xff]
      %v375 = vld [vmem:[%s251 + $0x3a0] sm:$0xff]
      %v376 = vld [vmem:[%s251 + $0x3a8] sm:$0xff]
      %v377 = vld [vmem:[%s251 + $0x3b0] sm:$0xff]
      %v378 = vld [vmem:[%s251 + $0x3b8] sm:$0xff]
      %v379 = vld [vmem:[%s251 + $0x3c0] sm:$0xff]
      %v380 = vld [vmem:[%s251 + $0x3c8] sm:$0xff]
      %v381 = vld [vmem:[%s251 + $0x3d0] sm:$0xff]
      %v382 = vld [vmem:[%s251 + $0x3d8] sm:$0xff]
      %v383 = vld [vmem:[%s251 + $0x3e0] sm:$0xff]
      %v384 = vld [vmem:[%s251 + $0x3e8] sm:$0xff]
      %v385 = vld [vmem:[%s251 + $0x3f0] sm:$0xff]
      %v386 = vld [vmem:[%s251 + $0x3f8] sm:$0xff]
      %v387 = vld [vmem:[%s251 + $0x400] sm:$0xff]
      %v388 = vld [vmem:[%s251 + $0x408] sm:$0xff]
      %v389 = vld [vmem:[%s251 + $0x410] sm:$0xff]
      %v390 = vld [vmem:[%s251 + $0x418] sm:$0xff]
      %v391 = vld [vmem:[%s251 + $0x420] sm:$0xff]
      %v392 = vld [vmem:[%s251 + $0x428] sm:$0xff]
      %v393 = vld [vmem:[%s251 + $0x430] sm:$0xff]
      %v394 = vld [vmem:[%s251 + $0x438] sm:$0xff]
      %v395 = vld [vmem:[%s251 + $0x440] sm:$0xff]
      %v396 = vld [vmem:[%s251 + $0x448] sm:$0xff]
      %v397 = vld [vmem:[%s251 + $0x450] sm:$0xff]
      %v398 = vld [vmem:[%s251 + $0x458] sm:$0xff]
      %v399 = vld [vmem:[%s251 + $0x460] sm:$0xff]
      %v400 = vld [vmem:[%s251 + $0x468] sm:$0xff]
      %v401 = vld [vmem:[%s251 + $0x470] sm:$0xff]
      %v402 = vld [vmem:[%s251 + $0x478] sm:$0xff]
      %v403 = vld [vmem:[%s251 + $0x480] sm:$0xff]
      %v404 = vld [vmem:[%s251 + $0x488] sm:$0xff]
      %v405 = vld [vmem:[%s251 + $0x490] sm:$0xff]
      %v406 = vld [vmem:[%s251 + $0x498] sm:$0xff]
      %v407 = vld [vmem:[%s251 + $0x4a0] sm:$0xff]
      %v408 = vld [vmem:[%s251 + $0x4a8] sm:$0xff]
      %v409 = vld [vmem:[%s251 + $0x4b0] sm:$0xff]
      %v410 = vld [vmem:[%s251 + $0x4b8] sm:$0xff]
      %v411 = vld [vmem:[%s251 + $0x4c0] sm:$0xff]
      %v412 = vld [vmem:[%s251 + $0x4c8] sm:$0xff]
      %v413 = vld [vmem:[%s251 + $0x4d0] sm:$0xff]
      %v414 = vld [vmem:[%s251 + $0x4d8] sm:$0xff]
      %v415 = vld [vmem:[%s251 + $0x4e0] sm:$0xff]
      %v416 = vld [vmem:[%s251 + $0x4e8] sm:$0xff]
      %v417 = vld [vmem:[%s251 + $0x4f0] sm:$0xff]
      %v418 = vld [vmem:[%s251 + $0x4f8] sm:$0xff]
      %v419 = vld [vmem:[%s251 + $0x500] sm:$0xff]
      %v420 = vld [vmem:[%s251 + $0x508] sm:$0xff]
      %v421 = vld [vmem:[%s251 + $0x510] sm:$0xff]
      %v422 = vld [vmem:[%s251 + $0x518] sm:$0xff]
      %v423 = vld [vmem:[%s251 + $0x520] sm:$0xff]
      %v424 = vld [vmem:[%s251 + $0x528] sm:$0xff]
      %v425 = vld [vmem:[%s251 + $0x530] sm:$0xff]
      %v426 = vld [vmem:[%s251 + $0x538] sm:$0xff]
      %v427 = vld [vmem:[%s251 + $0x540] sm:$0xff]
      %v428 = vld [vmem:[%s251 + $0x548] sm:$0xff]
      %v429 = vld [vmem:[%s251 + $0x550] sm:$0xff]
      %v430 = vld [vmem:[%s251 + $0x558] sm:$0xff]
      %v431 = vld [vmem:[%s251 + $0x560] sm:$0xff]
      %v432 = vld [vmem:[%s251 + $0x568] sm:$0xff]
      %v433 = vld [vmem:[%s251 + $0x570] sm:$0xff]
      %v434 = vld [vmem:[%s251 + $0x578] sm:$0xff]
      %v435 = vld [vmem:[%s251 + $0x580] sm:$0xff]
      %v436 = vld [vmem:[%s251 + $0x588] sm:$0xff]
      %v437 = vld [vmem:[%s251 + $0x590] sm:$0xff]
      %v438 = vld [vmem:[%s251 + $0x598] sm:$0xff]
      %v439 = vld [vmem:[%s251 + $0x5a0] sm:$0xff]
      %v440 = vld [vmem:[%s251 + $0x5a8] sm:$0xff]
      %v441 = vld [vmem:[%s251 + $0x5b0] sm:$0xff]
      %v442 = vld [vmem:[%s251 + $0x5b8] sm:$0xff]
      %v443 = vld [vmem:[%s251 + $0x5c0] sm:$0xff]
      %v444 = vld [vmem:[%s251 + $0x5c8] sm:$0xff]
      %v445 = vld [vmem:[%s251 + $0x5d0] sm:$0xff]
      %v446 = vld [vmem:[%s251 + $0x5d8] sm:$0xff]
      %v447 = vld [vmem:[%s251 + $0x5e0] sm:$0xff]
      %v448 = vld [vmem:[%s251 + $0x5e8] sm:$0xff]
      %v449 = vld [vmem:[%s251 + $0x5f0] sm:$0xff]
      %v450 = vld [vmem:[%s251 + $0x5f8] sm:$0xff]
      %v451 = vld [vmem:[%s251 + $0x600] sm:$0xff]
      %v452 = vld [vmem:[%s251 + $0x608] sm:$0xff]
      %v453 = vld [vmem:[%s251 + $0x610] sm:$0xff]
      %v454 = vld [vmem:[%s251 + $0x618] sm:$0xff]
      %v455 = vld [vmem:[%s251 + $0x620] sm:$0xff]
      %v456 = vld [vmem:[%s251 + $0x628] sm:$0xff]
      %v457 = vld [vmem:[%s251 + $0x630] sm:$0xff]
      %v458 = vld [vmem:[%s251 + $0x638] sm:$0xff]
      %v459 = vld [vmem:[%s251 + $0x640] sm:$0xff]
      %v460 = vld [vmem:[%s251 + $0x648] sm:$0xff]
      %v461 = vld [vmem:[%s251 + $0x650] sm:$0xff]
      %v462 = vld [vmem:[%s251 + $0x658] sm:$0xff]
      %v463 = vld [vmem:[%s251 + $0x660] sm:$0xff]
      %v464 = vld [vmem:[%s251 + $0x668] sm:$0xff]
      %v465 = vld [vmem:[%s251 + $0x670] sm:$0xff]
      %v466 = vld [vmem:[%s251 + $0x678] sm:$0xff]
      %v467 = vld [vmem:[%s251 + $0x680] sm:$0xff]
      %v468 = vld [vmem:[%s251 + $0x688] sm:$0xff]
      %v469 = vld [vmem:[%s251 + $0x690] sm:$0xff]
      %v470 = vld [vmem:[%s251 + $0x698] sm:$0xff]
      %v471 = vld [vmem:[%s251 + $0x6a0] sm:$0xff]
      %v472 = vld [vmem:[%s251 + $0x6a8] sm:$0xff]
      %v473 = vld [vmem:[%s251 + $0x6b0] sm:$0xff]
      %v474 = vld [vmem:[%s251 + $0x6b8] sm:$0xff]
      %v475 = vld [vmem:[%s251 + $0x6c0] sm:$0xff]
      %v476 = vld [vmem:[%s251 + $0x6c8] sm:$0xff]
      %v477 = vld [vmem:[%s251 + $0x6d0] sm:$0xff]
      %v478 = vld [vmem:[%s251 + $0x6d8] sm:$0xff]
      %v479 = vld [vmem:[%s251 + $0x6e0] sm:$0xff]
      %v480 = vld [vmem:[%s251 + $0x6e8] sm:$0xff]
      %v481 = vld [vmem:[%s251 + $0x6f0] sm:$0xff]
      %v482 = vld [vmem:[%s251 + $0x6f8] sm:$0xff]
      %v483 = vpack.c.bf16 %v266, %v259
      %v484 = vpack.c.bf16 %v267, %v260
      %v485 = vpack.c.bf16 %v268, %v261
      %v486 = vpack.c.bf16 %v269, %v262
      %v487 = vpack.c.bf16 %v270, %v263
      %v488 = vpack.c.bf16 %v271, %v264
      %v489 = vpack.c.bf16 %v272, %v265
      %v490 = vpack.c.bf16 %v280, %v273
      %v491 = vpack.c.bf16 %v281, %v274
      %v492 = vpack.c.bf16 %v282, %v275
      %v493 = vpack.c.bf16 %v283, %v276
      %v494 = vpack.c.bf16 %v284, %v277
      %v495 = vpack.c.bf16 %v285, %v278
      %v496 = vpack.c.bf16 %v286, %v279
      %v497 = vpack.c.bf16 %v294, %v287
      %v498 = vpack.c.bf16 %v295, %v288
      %v499 = vpack.c.bf16 %v296, %v289
      %v500 = vpack.c.bf16 %v297, %v290
      %v501 = vpack.c.bf16 %v298, %v291
      %v502 = vpack.c.bf16 %v299, %v292
      %v503 = vpack.c.bf16 %v300, %v293
      %v504 = vpack.c.bf16 %v308, %v301
      %v505 = vpack.c.bf16 %v309, %v302
      %v506 = vpack.c.bf16 %v310, %v303
      %v507 = vpack.c.bf16 %v311, %v304
      %v508 = vpack.c.bf16 %v312, %v305
      %v509 = vpack.c.bf16 %v313, %v306
      %v510 = vpack.c.bf16 %v314, %v307
      %v511 = vpack.c.bf16 %v322, %v315
      %v512 = vpack.c.bf16 %v323, %v316
      %v513 = vpack.c.bf16 %v324, %v317
      %v514 = vpack.c.bf16 %v325, %v318
      %v515 = vpack.c.bf16 %v326, %v319
      %v516 = vpack.c.bf16 %v327, %v320
      %v517 = vpack.c.bf16 %v328, %v321
      %v518 = vpack.c.bf16 %v336, %v329
      %v519 = vpack.c.bf16 %v337, %v330
      %v520 = vpack.c.bf16 %v338, %v331
      %v521 = vpack.c.bf16 %v339, %v332
      %v522 = vpack.c.bf16 %v340, %v333
      %v523 = vpack.c.bf16 %v341, %v334
      %v524 = vpack.c.bf16 %v342, %v335
      %v525 = vpack.c.bf16 %v350, %v343
      %v526 = vpack.c.bf16 %v351, %v344
      %v527 = vpack.c.bf16 %v352, %v345
      %v528 = vpack.c.bf16 %v353, %v346
      %v529 = vpack.c.bf16 %v354, %v347
      %v530 = vpack.c.bf16 %v355, %v348
      %v531 = vpack.c.bf16 %v356, %v349
      %v532 = vpack.c.bf16 %v364, %v357
      %v533 = vpack.c.bf16 %v365, %v358
      %v534 = vpack.c.bf16 %v366, %v359
      %v535 = vpack.c.bf16 %v367, %v360
      %v536 = vpack.c.bf16 %v368, %v361
      %v537 = vpack.c.bf16 %v369, %v362
      %v538 = vpack.c.bf16 %v370, %v363
      %v539 = vpack.c.bf16 %v378, %v371
      %v540 = vpack.c.bf16 %v379, %v372
      %v541 = vpack.c.bf16 %v380, %v373
      %v542 = vpack.c.bf16 %v381, %v374
      %v543 = vpack.c.bf16 %v382, %v375
      %v544 = vpack.c.bf16 %v383, %v376
      %v545 = vpack.c.bf16 %v384, %v377
      %v546 = vpack.c.bf16 %v392, %v385
      %v547 = vpack.c.bf16 %v393, %v386
      %v548 = vpack.c.bf16 %v394, %v387
      %v549 = vpack.c.bf16 %v395, %v388
      %v550 = vpack.c.bf16 %v396, %v389
      %v551 = vpack.c.bf16 %v397, %v390
      %v552 = vpack.c.bf16 %v398, %v391
      %v553 = vpack.c.bf16 %v406, %v399
      %v554 = vpack.c.bf16 %v407, %v400
      %v555 = vpack.c.bf16 %v408, %v401
      %v556 = vpack.c.bf16 %v409, %v402
      %v557 = vpack.c.bf16 %v410, %v403
      %v558 = vpack.c.bf16 %v411, %v404
      %v559 = vpack.c.bf16 %v412, %v405
      %v560 = vpack.c.bf16 %v420, %v413
      %v561 = vpack.c.bf16 %v421, %v414
      %v562 = vpack.c.bf16 %v422, %v415
      %v563 = vpack.c.bf16 %v423, %v416
      %v564 = vpack.c.bf16 %v424, %v417
      %v565 = vpack.c.bf16 %v425, %v418
      %v566 = vpack.c.bf16 %v426, %v419
      %v567 = vpack.c.bf16 %v434, %v427
      %v568 = vpack.c.bf16 %v435, %v428
      %v569 = vpack.c.bf16 %v436, %v429
      %v570 = vpack.c.bf16 %v437, %v430
      %v571 = vpack.c.bf16 %v438, %v431
      %v572 = vpack.c.bf16 %v439, %v432
      %v573 = vpack.c.bf16 %v440, %v433
      %v574 = vpack.c.bf16 %v448, %v441
      %v575 = vpack.c.bf16 %v449, %v442
      %v576 = vpack.c.bf16 %v450, %v443
      %v577 = vpack.c.bf16 %v451, %v444
      %v578 = vpack.c.bf16 %v452, %v445
      %v579 = vpack.c.bf16 %v453, %v446
      %v580 = vpack.c.bf16 %v454, %v447
      %v581 = vpack.c.bf16 %v462, %v455
      %v582 = vpack.c.bf16 %v463, %v456
      %v583 = vpack.c.bf16 %v464, %v457
      %v584 = vpack.c.bf16 %v465, %v458
      %v585 = vpack.c.bf16 %v466, %v459
      %v586 = vpack.c.bf16 %v467, %v460
      %v587 = vpack.c.bf16 %v468, %v461
      %v588 = vpack.c.bf16 %v476, %v469
      %v589 = vpack.c.bf16 %v477, %v470
      %v590 = vpack.c.bf16 %v478, %v471
      %v591 = vpack.c.bf16 %v479, %v472
      %v592 = vpack.c.bf16 %v480, %v473
      %v593 = vpack.c.bf16 %v481, %v474
      %v594 = vpack.c.bf16 %v482, %v475
      %v595 = vld [vmem:[%s2] sm:$0xff]
      %v596 = vld [vmem:[%s2 + $0x8] sm:$0xff]
      %v597 = vld [vmem:[%s2 + $0x10] sm:$0xff]
      %v598 = vld [vmem:[%s2 + $0x18] sm:$0xff]
      %v599 = vld [vmem:[%s2 + $0x20] sm:$0xff]
      %v600 = vld [vmem:[%s2 + $0x28] sm:$0xff]
      %v601 = vld [vmem:[%s2 + $0x30] sm:$0xff]
      %v602 = vld [vmem:[%s2 + $0x38] sm:$0xff]
      %v603 = vld [vmem:[%s2 + $0x40] sm:$0xff]
      %v604 = vld [vmem:[%s2 + $0x48] sm:$0xff]
      %v605 = vld [vmem:[%s2 + $0x50] sm:$0xff]
      %v606 = vld [vmem:[%s2 + $0x58] sm:$0xff]
      %v607 = vld [vmem:[%s2 + $0x60] sm:$0xff]
      %v608 = vld [vmem:[%s2 + $0x68] sm:$0xff]
      %v609 = vld [vmem:[%s2 + $0x70] sm:$0xff]
      %v610 = vld [vmem:[%s2 + $0x78] sm:$0xff]
      %v611 = vld [vmem:[%s2 + $0x80] sm:$0xff]
      %v612 = vld [vmem:[%s2 + $0x88] sm:$0xff]
      %v613 = vld [vmem:[%s2 + $0x90] sm:$0xff]
      %v614 = vld [vmem:[%s2 + $0x98] sm:$0xff]
      %v615 = vld [vmem:[%s2 + $0xa0] sm:$0xff]
      %v616 = vld [vmem:[%s2 + $0xa8] sm:$0xff]
      %v617 = vld [vmem:[%s2 + $0xb0] sm:$0xff]
      %v618 = vld [vmem:[%s2 + $0xb8] sm:$0xff]
      %v619 = vld [vmem:[%s2 + $0xc0] sm:$0xff]
      %v620 = vld [vmem:[%s2 + $0xc8] sm:$0xff]
      %v621 = vld [vmem:[%s2 + $0xd0] sm:$0xff]
      %v622 = vld [vmem:[%s2 + $0xd8] sm:$0xff]
      %v623 = vld [vmem:[%s2 + $0xe0] sm:$0xff]
      %v624 = vld [vmem:[%s2 + $0xe8] sm:$0xff]
      %v625 = vld [vmem:[%s2 + $0xf0] sm:$0xff]
      %v626 = vld [vmem:[%s2 + $0xf8] sm:$0xff]
      %v627 = vld [vmem:[%s2 + $0x100] sm:$0xff]
      %v628 = vld [vmem:[%s2 + $0x108] sm:$0xff]
      %v629 = vld [vmem:[%s2 + $0x110] sm:$0xff]
      %v630 = vld [vmem:[%s2 + $0x118] sm:$0xff]
      %v631 = vld [vmem:[%s2 + $0x120] sm:$0xff]
      %v632 = vld [vmem:[%s2 + $0x128] sm:$0xff]
      %v633 = vld [vmem:[%s2 + $0x130] sm:$0xff]
      %v634 = vld [vmem:[%s2 + $0x138] sm:$0xff]
      %v635 = vld [vmem:[%s2 + $0x140] sm:$0xff]
      %v636 = vld [vmem:[%s2 + $0x148] sm:$0xff]
      %v637 = vld [vmem:[%s2 + $0x150] sm:$0xff]
      %v638 = vld [vmem:[%s2 + $0x158] sm:$0xff]
      %v639 = vld [vmem:[%s2 + $0x160] sm:$0xff]
      %v640 = vld [vmem:[%s2 + $0x168] sm:$0xff]
      %v641 = vld [vmem:[%s2 + $0x170] sm:$0xff]
      %v642 = vld [vmem:[%s2 + $0x178] sm:$0xff]
      %v643 = vld [vmem:[%s2 + $0x180] sm:$0xff]
      %v644 = vld [vmem:[%s2 + $0x188] sm:$0xff]
      %v645 = vld [vmem:[%s2 + $0x190] sm:$0xff]
      %v646 = vld [vmem:[%s2 + $0x198] sm:$0xff]
      %v647 = vld [vmem:[%s2 + $0x1a0] sm:$0xff]
      %v648 = vld [vmem:[%s2 + $0x1a8] sm:$0xff]
      %v649 = vld [vmem:[%s2 + $0x1b0] sm:$0xff]
      %v650 = vld [vmem:[%s2 + $0x1b8] sm:$0xff]
      %v651 = vld [vmem:[%s2 + $0x1c0] sm:$0xff]
      %v652 = vld [vmem:[%s2 + $0x1c8] sm:$0xff]
      %v653 = vld [vmem:[%s2 + $0x1d0] sm:$0xff]
      %v654 = vld [vmem:[%s2 + $0x1d8] sm:$0xff]
      %v655 = vld [vmem:[%s2 + $0x1e0] sm:$0xff]
      %v656 = vld [vmem:[%s2 + $0x1e8] sm:$0xff]
      %v657 = vld [vmem:[%s2 + $0x1f0] sm:$0xff]
      %v658 = vld [vmem:[%s2 + $0x1f8] sm:$0xff]
      %v659 = vld [vmem:[%s2 + $0x200] sm:$0xff]
      %v660 = vld [vmem:[%s2 + $0x208] sm:$0xff]
      %v661 = vld [vmem:[%s2 + $0x210] sm:$0xff]
      %v662 = vld [vmem:[%s2 + $0x218] sm:$0xff]
      %v663 = vld [vmem:[%s2 + $0x220] sm:$0xff]
      %v664 = vld [vmem:[%s2 + $0x228] sm:$0xff]
      %v665 = vld [vmem:[%s2 + $0x230] sm:$0xff]
      %v666 = vld [vmem:[%s2 + $0x238] sm:$0xff]
      %v667 = vld [vmem:[%s2 + $0x240] sm:$0xff]
      %v668 = vld [vmem:[%s2 + $0x248] sm:$0xff]
      %v669 = vld [vmem:[%s2 + $0x250] sm:$0xff]
      %v670 = vld [vmem:[%s2 + $0x258] sm:$0xff]
      %v671 = vld [vmem:[%s2 + $0x260] sm:$0xff]
      %v672 = vld [vmem:[%s2 + $0x268] sm:$0xff]
      %v673 = vld [vmem:[%s2 + $0x270] sm:$0xff]
      %v674 = vld [vmem:[%s2 + $0x278] sm:$0xff]
      %v675 = vld [vmem:[%s2 + $0x280] sm:$0xff]
      %v676 = vld [vmem:[%s2 + $0x288] sm:$0xff]
      %v677 = vld [vmem:[%s2 + $0x290] sm:$0xff]
      %v678 = vld [vmem:[%s2 + $0x298] sm:$0xff]
      %v679 = vld [vmem:[%s2 + $0x2a0] sm:$0xff]
      %v680 = vld [vmem:[%s2 + $0x2a8] sm:$0xff]
      %v681 = vld [vmem:[%s2 + $0x2b0] sm:$0xff]
      %v682 = vld [vmem:[%s2 + $0x2b8] sm:$0xff]
      %v683 = vld [vmem:[%s2 + $0x2c0] sm:$0xff]
      %v684 = vld [vmem:[%s2 + $0x2c8] sm:$0xff]
      %v685 = vld [vmem:[%s2 + $0x2d0] sm:$0xff]
      %v686 = vld [vmem:[%s2 + $0x2d8] sm:$0xff]
      %v687 = vld [vmem:[%s2 + $0x2e0] sm:$0xff]
      %v688 = vld [vmem:[%s2 + $0x2e8] sm:$0xff]
      %v689 = vld [vmem:[%s2 + $0x2f0] sm:$0xff]
      %v690 = vld [vmem:[%s2 + $0x2f8] sm:$0xff]
      %v691 = vld [vmem:[%s2 + $0x300] sm:$0xff]
      %v692 = vld [vmem:[%s2 + $0x308] sm:$0xff]
      %v693 = vld [vmem:[%s2 + $0x310] sm:$0xff]
      %v694 = vld [vmem:[%s2 + $0x318] sm:$0xff]
      %v695 = vld [vmem:[%s2 + $0x320] sm:$0xff]
      %v696 = vld [vmem:[%s2 + $0x328] sm:$0xff]
      %v697 = vld [vmem:[%s2 + $0x330] sm:$0xff]
      %v698 = vld [vmem:[%s2 + $0x338] sm:$0xff]
      %v699 = vld [vmem:[%s2 + $0x340] sm:$0xff]
      %v700 = vld [vmem:[%s2 + $0x348] sm:$0xff]
      %v701 = vld [vmem:[%s2 + $0x350] sm:$0xff]
      %v702 = vld [vmem:[%s2 + $0x358] sm:$0xff]
      %v703 = vld [vmem:[%s2 + $0x360] sm:$0xff]
      %v704 = vld [vmem:[%s2 + $0x368] sm:$0xff]
      %v705 = vld [vmem:[%s2 + $0x370] sm:$0xff]
      %v706 = vld [vmem:[%s2 + $0x378] sm:$0xff]
      %v707 = vld [vmem:[%s2 + $0x380] sm:$0xff]
      %v708 = vld [vmem:[%s2 + $0x388] sm:$0xff]
      %v709 = vld [vmem:[%s2 + $0x390] sm:$0xff]
      %v710 = vld [vmem:[%s2 + $0x398] sm:$0xff]
      %v711 = vld [vmem:[%s2 + $0x3a0] sm:$0xff]
      %v712 = vld [vmem:[%s2 + $0x3a8] sm:$0xff]
      %v713 = vld [vmem:[%s2 + $0x3b0] sm:$0xff]
      %v714 = vld [vmem:[%s2 + $0x3b8] sm:$0xff]
      %v715 = vld [vmem:[%s2 + $0x3c0] sm:$0xff]
      %v716 = vld [vmem:[%s2 + $0x3c8] sm:$0xff]
      %v717 = vld [vmem:[%s2 + $0x3d0] sm:$0xff]
      %v718 = vld [vmem:[%s2 + $0x3d8] sm:$0xff]
      %v719 = vld [vmem:[%s2 + $0x3e0] sm:$0xff]
      %v720 = vld [vmem:[%s2 + $0x3e8] sm:$0xff]
      %v721 = vld [vmem:[%s2 + $0x3f0] sm:$0xff]
      %v722 = vld [vmem:[%s2 + $0x3f8] sm:$0xff]
      %v723 = vld [vmem:[%s2 + $0x400] sm:$0xff]
      %v724 = vld [vmem:[%s2 + $0x408] sm:$0xff]
      %v725 = vld [vmem:[%s2 + $0x410] sm:$0xff]
      %v726 = vld [vmem:[%s2 + $0x418] sm:$0xff]
      %v727 = vld [vmem:[%s2 + $0x420] sm:$0xff]
      %v728 = vld [vmem:[%s2 + $0x428] sm:$0xff]
      %v729 = vld [vmem:[%s2 + $0x430] sm:$0xff]
      %v730 = vld [vmem:[%s2 + $0x438] sm:$0xff]
      %v731 = vld [vmem:[%s2 + $0x440] sm:$0xff]
      %v732 = vld [vmem:[%s2 + $0x448] sm:$0xff]
      %v733 = vld [vmem:[%s2 + $0x450] sm:$0xff]
      %v734 = vld [vmem:[%s2 + $0x458] sm:$0xff]
      %v735 = vld [vmem:[%s2 + $0x460] sm:$0xff]
      %v736 = vld [vmem:[%s2 + $0x468] sm:$0xff]
      %v737 = vld [vmem:[%s2 + $0x470] sm:$0xff]
      %v738 = vld [vmem:[%s2 + $0x478] sm:$0xff]
      %v739 = vld [vmem:[%s2 + $0x480] sm:$0xff]
      %v740 = vld [vmem:[%s2 + $0x488] sm:$0xff]
      %v741 = vld [vmem:[%s2 + $0x490] sm:$0xff]
      %v742 = vld [vmem:[%s2 + $0x498] sm:$0xff]
      %v743 = vld [vmem:[%s2 + $0x4a0] sm:$0xff]
      %v744 = vld [vmem:[%s2 + $0x4a8] sm:$0xff]
      %v745 = vld [vmem:[%s2 + $0x4b0] sm:$0xff]
      %v746 = vld [vmem:[%s2 + $0x4b8] sm:$0xff]
      %v747 = vld [vmem:[%s2 + $0x4c0] sm:$0xff]
      %v748 = vld [vmem:[%s2 + $0x4c8] sm:$0xff]
      %v749 = vld [vmem:[%s2 + $0x4d0] sm:$0xff]
      %v750 = vld [vmem:[%s2 + $0x4d8] sm:$0xff]
      %v751 = vld [vmem:[%s2 + $0x4e0] sm:$0xff]
      %v752 = vld [vmem:[%s2 + $0x4e8] sm:$0xff]
      %v753 = vld [vmem:[%s2 + $0x4f0] sm:$0xff]
      %v754 = vld [vmem:[%s2 + $0x4f8] sm:$0xff]
      %v755 = vld [vmem:[%s2 + $0x500] sm:$0xff]
      %v756 = vld [vmem:[%s2 + $0x508] sm:$0xff]
      %v757 = vld [vmem:[%s2 + $0x510] sm:$0xff]
      %v758 = vld [vmem:[%s2 + $0x518] sm:$0xff]
      %v759 = vld [vmem:[%s2 + $0x520] sm:$0xff]
      %v760 = vld [vmem:[%s2 + $0x528] sm:$0xff]
      %v761 = vld [vmem:[%s2 + $0x530] sm:$0xff]
      %v762 = vld [vmem:[%s2 + $0x538] sm:$0xff]
      %v763 = vld [vmem:[%s2 + $0x540] sm:$0xff]
      %v764 = vld [vmem:[%s2 + $0x548] sm:$0xff]
      %v765 = vld [vmem:[%s2 + $0x550] sm:$0xff]
      %v766 = vld [vmem:[%s2 + $0x558] sm:$0xff]
      %v767 = vld [vmem:[%s2 + $0x560] sm:$0xff]
      %v768 = vld [vmem:[%s2 + $0x568] sm:$0xff]
      %v769 = vld [vmem:[%s2 + $0x570] sm:$0xff]
      %v770 = vld [vmem:[%s2 + $0x578] sm:$0xff]
      %v771 = vld [vmem:[%s2 + $0x580] sm:$0xff]
      %v772 = vld [vmem:[%s2 + $0x588] sm:$0xff]
      %v773 = vld [vmem:[%s2 + $0x590] sm:$0xff]
      %v774 = vld [vmem:[%s2 + $0x598] sm:$0xff]
      %v775 = vld [vmem:[%s2 + $0x5a0] sm:$0xff]
      %v776 = vld [vmem:[%s2 + $0x5a8] sm:$0xff]
      %v777 = vld [vmem:[%s2 + $0x5b0] sm:$0xff]
      %v778 = vld [vmem:[%s2 + $0x5b8] sm:$0xff]
      %v779 = vld [vmem:[%s2 + $0x5c0] sm:$0xff]
      %v780 = vld [vmem:[%s2 + $0x5c8] sm:$0xff]
      %v781 = vld [vmem:[%s2 + $0x5d0] sm:$0xff]
      %v782 = vld [vmem:[%s2 + $0x5d8] sm:$0xff]
      %v783 = vld [vmem:[%s2 + $0x5e0] sm:$0xff]
      %v784 = vld [vmem:[%s2 + $0x5e8] sm:$0xff]
      %v785 = vld [vmem:[%s2 + $0x5f0] sm:$0xff]
      %v786 = vld [vmem:[%s2 + $0x5f8] sm:$0xff]
      %v787 = vld [vmem:[%s2 + $0x600] sm:$0xff]
      %v788 = vld [vmem:[%s2 + $0x608] sm:$0xff]
      %v789 = vld [vmem:[%s2 + $0x610] sm:$0xff]
      %v790 = vld [vmem:[%s2 + $0x618] sm:$0xff]
      %v791 = vld [vmem:[%s3] sm:$0xf]
      %v793 = vlaneseq
      %v794 = vshrl.u32 %v793, 7
      %v795 = vsub.s32 0, %v794
      %v796 = vrot.slane %v791, %v795
      %v797 = vlaneseq
      %v798 = vshrl.u32 %v797, 7
      %v799 = vsub.s32 1, %v798
      %v800 = vrot.slane %v791, %v799
      %v801 = vlaneseq
      %v802 = vshrl.u32 %v801, 7
      %v803 = vsub.s32 2, %v802
      %v804 = vrot.slane %v791, %v803
      %v805 = vlaneseq
      %v806 = vshrl.u32 %v805, 7
      %v807 = vsub.s32 3, %v806
      %v808 = vrot.slane %v791, %v807
      %v1009 = vunpack.c.l.b16 %v595
      %v1010 = vunpack.c.h.b16 %v595
      %v1011 = vunpack.c.l.b16 %v596
      %v1012 = vunpack.c.h.b16 %v596
      %v1013 = vunpack.c.l.b16 %v597
      %v1014 = vunpack.c.h.b16 %v597
      %v1015 = vunpack.c.l.b16 %v598
      %v1016 = vunpack.c.h.b16 %v598
      %v1017 = vunpack.c.l.b16 %v599
      %v1018 = vunpack.c.h.b16 %v599
      %v1019 = vunpack.c.l.b16 %v600
      %v1020 = vunpack.c.h.b16 %v600
      %v1021 = vunpack.c.l.b16 %v601
      %v1022 = vunpack.c.h.b16 %v601
      %v1023 = vunpack.c.l.b16 %v602
      %v1024 = vunpack.c.h.b16 %v602
      %v1025 = vunpack.c.l.b16 %v603
      %v1026 = vunpack.c.h.b16 %v603
      %v1027 = vunpack.c.l.b16 %v604
      %v1028 = vunpack.c.h.b16 %v604
      %v1029 = vunpack.c.l.b16 %v605
      %v1030 = vunpack.c.h.b16 %v605
      %v1031 = vunpack.c.l.b16 %v606
      %v1032 = vunpack.c.h.b16 %v606
      %v1033 = vunpack.c.l.b16 %v607
      %v1034 = vunpack.c.h.b16 %v607
      %v1035 = vunpack.c.l.b16 %v608
      %v1036 = vunpack.c.h.b16 %v608
      %v1037 = vunpack.c.l.b16 %v609
      %v1038 = vunpack.c.h.b16 %v609
      %v1039 = vunpack.c.l.b16 %v610
      %v1040 = vunpack.c.h.b16 %v610
      %v1041 = vunpack.c.l.b16 %v611
      %v1042 = vunpack.c.h.b16 %v611
      %v1043 = vunpack.c.l.b16 %v612
      %v1044 = vunpack.c.h.b16 %v612
      %v1045 = vunpack.c.l.b16 %v613
      %v1046 = vunpack.c.h.b16 %v613
      %v1047 = vunpack.c.l.b16 %v614
      %v1048 = vunpack.c.h.b16 %v614
      %v1049 = vunpack.c.l.b16 %v615
      %v1050 = vunpack.c.h.b16 %v615
      %v1051 = vunpack.c.l.b16 %v616
      %v1052 = vunpack.c.h.b16 %v616
      %v1053 = vunpack.c.l.b16 %v617
      %v1054 = vunpack.c.h.b16 %v617
      %v1055 = vunpack.c.l.b16 %v618
      %v1056 = vunpack.c.h.b16 %v618
      %v1057 = vunpack.c.l.b16 %v619
      %v1058 = vunpack.c.h.b16 %v619
      %v1059 = vunpack.c.l.b16 %v620
      %v1060 = vunpack.c.h.b16 %v620
      %v1061 = vunpack.c.l.b16 %v621
      %v1062 = vunpack.c.h.b16 %v621
      %v1063 = vunpack.c.l.b16 %v622
      %v1064 = vunpack.c.h.b16 %v622
      %v1065 = vunpack.c.l.b16 %v623
      %v1066 = vunpack.c.h.b16 %v623
      %v1067 = vunpack.c.l.b16 %v624
      %v1068 = vunpack.c.h.b16 %v624
      %v1069 = vunpack.c.l.b16 %v625
      %v1070 = vunpack.c.h.b16 %v625
      %v1071 = vunpack.c.l.b16 %v626
      %v1072 = vunpack.c.h.b16 %v626
      %v1073 = vunpack.c.l.b16 %v627
      %v1074 = vunpack.c.h.b16 %v627
      %v1075 = vunpack.c.l.b16 %v628
      %v1076 = vunpack.c.h.b16 %v628
      %v1077 = vunpack.c.l.b16 %v629
      %v1078 = vunpack.c.h.b16 %v629
      %v1079 = vunpack.c.l.b16 %v630
      %v1080 = vunpack.c.h.b16 %v630
      %v1081 = vunpack.c.l.b16 %v631
      %v1082 = vunpack.c.h.b16 %v631
      %v1083 = vunpack.c.l.b16 %v632
      %v1084 = vunpack.c.h.b16 %v632
      %v1085 = vunpack.c.l.b16 %v633
      %v1086 = vunpack.c.h.b16 %v633
      %v1087 = vunpack.c.l.b16 %v634
      %v1088 = vunpack.c.h.b16 %v634
      %v1089 = vunpack.c.l.b16 %v635
      %v1090 = vunpack.c.h.b16 %v635
      %v1091 = vunpack.c.l.b16 %v636
      %v1092 = vunpack.c.h.b16 %v636
      %v1093 = vunpack.c.l.b16 %v637
      %v1094 = vunpack.c.h.b16 %v637
      %v1095 = vunpack.c.l.b16 %v638
      %v1096 = vunpack.c.h.b16 %v638
      %v1097 = vunpack.c.l.b16 %v639
      %v1098 = vunpack.c.h.b16 %v639
      %v1099 = vunpack.c.l.b16 %v640
      %v1100 = vunpack.c.h.b16 %v640
      %v1101 = vunpack.c.l.b16 %v641
      %v1102 = vunpack.c.h.b16 %v641
      %v1103 = vunpack.c.l.b16 %v642
      %v1104 = vunpack.c.h.b16 %v642
      %v1105 = vunpack.c.l.b16 %v643
      %v1106 = vunpack.c.h.b16 %v643
      %v1107 = vunpack.c.l.b16 %v644
      %v1108 = vunpack.c.h.b16 %v644
      %v1109 = vunpack.c.l.b16 %v645
      %v1110 = vunpack.c.h.b16 %v645
      %v1111 = vunpack.c.l.b16 %v646
      %v1112 = vunpack.c.h.b16 %v646
      %v1113 = vunpack.c.l.b16 %v647
      %v1114 = vunpack.c.h.b16 %v647
      %v1115 = vunpack.c.l.b16 %v648
      %v1116 = vunpack.c.h.b16 %v648
      %v1117 = vunpack.c.l.b16 %v649
      %v1118 = vunpack.c.h.b16 %v649
      %v1119 = vunpack.c.l.b16 %v650
      %v1120 = vunpack.c.h.b16 %v650
      %v1121 = vunpack.c.l.b16 %v651
      %v1122 = vunpack.c.h.b16 %v651
      %v1123 = vunpack.c.l.b16 %v652
      %v1124 = vunpack.c.h.b16 %v652
      %v1125 = vunpack.c.l.b16 %v653
      %v1126 = vunpack.c.h.b16 %v653
      %v1127 = vunpack.c.l.b16 %v654
      %v1128 = vunpack.c.h.b16 %v654
      %v1129 = vunpack.c.l.b16 %v655
      %v1130 = vunpack.c.h.b16 %v655
      %v1131 = vunpack.c.l.b16 %v656
      %v1132 = vunpack.c.h.b16 %v656
      %v1133 = vunpack.c.l.b16 %v657
      %v1134 = vunpack.c.h.b16 %v657
      %v1135 = vunpack.c.l.b16 %v658
      %v1136 = vunpack.c.h.b16 %v658
      %v1137 = vunpack.c.l.b16 %v659
      %v1138 = vunpack.c.h.b16 %v659
      %v1139 = vunpack.c.l.b16 %v660
      %v1140 = vunpack.c.h.b16 %v660
      %v1141 = vunpack.c.l.b16 %v661
      %v1142 = vunpack.c.h.b16 %v661
      %v1143 = vunpack.c.l.b16 %v662
      %v1144 = vunpack.c.h.b16 %v662
      %v1145 = vunpack.c.l.b16 %v663
      %v1146 = vunpack.c.h.b16 %v663
      %v1147 = vunpack.c.l.b16 %v664
      %v1148 = vunpack.c.h.b16 %v664
      %v1149 = vunpack.c.l.b16 %v665
      %v1150 = vunpack.c.h.b16 %v665
      %v1151 = vunpack.c.l.b16 %v666
      %v1152 = vunpack.c.h.b16 %v666
      %v1153 = vunpack.c.l.b16 %v667
      %v1154 = vunpack.c.h.b16 %v667
      %v1155 = vunpack.c.l.b16 %v668
      %v1156 = vunpack.c.h.b16 %v668
      %v1157 = vunpack.c.l.b16 %v669
      %v1158 = vunpack.c.h.b16 %v669
      %v1159 = vunpack.c.l.b16 %v670
      %v1160 = vunpack.c.h.b16 %v670
      %v1161 = vunpack.c.l.b16 %v671
      %v1162 = vunpack.c.h.b16 %v671
      %v1163 = vunpack.c.l.b16 %v672
      %v1164 = vunpack.c.h.b16 %v672
      %v1165 = vunpack.c.l.b16 %v673
      %v1166 = vunpack.c.h.b16 %v673
      %v1167 = vunpack.c.l.b16 %v674
      %v1168 = vunpack.c.h.b16 %v674
      %v1169 = vunpack.c.l.b16 %v675
      %v1170 = vunpack.c.h.b16 %v675
      %v1171 = vunpack.c.l.b16 %v676
      %v1172 = vunpack.c.h.b16 %v676
      %v1173 = vunpack.c.l.b16 %v677
      %v1174 = vunpack.c.h.b16 %v677
      %v1175 = vunpack.c.l.b16 %v678
      %v1176 = vunpack.c.h.b16 %v678
      %v1177 = vunpack.c.l.b16 %v679
      %v1178 = vunpack.c.h.b16 %v679
      %v1179 = vunpack.c.l.b16 %v680
      %v1180 = vunpack.c.h.b16 %v680
      %v1181 = vunpack.c.l.b16 %v681
      %v1182 = vunpack.c.h.b16 %v681
      %v1183 = vunpack.c.l.b16 %v682
      %v1184 = vunpack.c.h.b16 %v682
      %v1185 = vunpack.c.l.b16 %v683
      %v1186 = vunpack.c.h.b16 %v683
      %v1187 = vunpack.c.l.b16 %v684
      %v1188 = vunpack.c.h.b16 %v684
      %v1189 = vunpack.c.l.b16 %v685
      %v1190 = vunpack.c.h.b16 %v685
      %v1191 = vunpack.c.l.b16 %v686
      %v1192 = vunpack.c.h.b16 %v686
      %v1193 = vunpack.c.l.b16 %v687
      %v1194 = vunpack.c.h.b16 %v687
      %v1195 = vunpack.c.l.b16 %v688
      %v1196 = vunpack.c.h.b16 %v688
      %v1197 = vunpack.c.l.b16 %v689
      %v1198 = vunpack.c.h.b16 %v689
      %v1199 = vunpack.c.l.b16 %v690
      %v1200 = vunpack.c.h.b16 %v690
      %v1201 = vunpack.c.l.b16 %v691
      %v1202 = vunpack.c.h.b16 %v691
      %v1203 = vunpack.c.l.b16 %v692
      %v1204 = vunpack.c.h.b16 %v692
      %v1205 = vunpack.c.l.b16 %v693
      %v1206 = vunpack.c.h.b16 %v693
      %v1207 = vunpack.c.l.b16 %v694
      %v1208 = vunpack.c.h.b16 %v694
      %v1209 = vunpack.c.l.b16 %v695
      %v1210 = vunpack.c.h.b16 %v695
      %v1211 = vunpack.c.l.b16 %v696
      %v1212 = vunpack.c.h.b16 %v696
      %v1213 = vunpack.c.l.b16 %v697
      %v1214 = vunpack.c.h.b16 %v697
      %v1215 = vunpack.c.l.b16 %v698
      %v1216 = vunpack.c.h.b16 %v698
      %v1217 = vunpack.c.l.b16 %v699
      %v1218 = vunpack.c.h.b16 %v699
      %v1219 = vunpack.c.l.b16 %v700
      %v1220 = vunpack.c.h.b16 %v700
      %v1221 = vunpack.c.l.b16 %v701
      %v1222 = vunpack.c.h.b16 %v701
      %v1223 = vunpack.c.l.b16 %v702
      %v1224 = vunpack.c.h.b16 %v702
      %v1225 = vunpack.c.l.b16 %v703
      %v1226 = vunpack.c.h.b16 %v703
      %v1227 = vunpack.c.l.b16 %v704
      %v1228 = vunpack.c.h.b16 %v704
      %v1229 = vunpack.c.l.b16 %v705
      %v1230 = vunpack.c.h.b16 %v705
      %v1231 = vunpack.c.l.b16 %v706
      %v1232 = vunpack.c.h.b16 %v706
      %v1233 = vunpack.c.l.b16 %v707
      %v1234 = vunpack.c.h.b16 %v707
      %v1235 = vunpack.c.l.b16 %v708
      %v1236 = vunpack.c.h.b16 %v708
      %v1237 = vunpack.c.l.b16 %v709
      %v1238 = vunpack.c.h.b16 %v709
      %v1239 = vunpack.c.l.b16 %v710
      %v1240 = vunpack.c.h.b16 %v710
      %v1241 = vunpack.c.l.b16 %v711
      %v1242 = vunpack.c.h.b16 %v711
      %v1243 = vunpack.c.l.b16 %v712
      %v1244 = vunpack.c.h.b16 %v712
      %v1245 = vunpack.c.l.b16 %v713
      %v1246 = vunpack.c.h.b16 %v713
      %v1247 = vunpack.c.l.b16 %v714
      %v1248 = vunpack.c.h.b16 %v714
      %v1249 = vunpack.c.l.b16 %v715
      %v1250 = vunpack.c.h.b16 %v715
      %v1251 = vunpack.c.l.b16 %v716
      %v1252 = vunpack.c.h.b16 %v716
      %v1253 = vunpack.c.l.b16 %v717
      %v1254 = vunpack.c.h.b16 %v717
      %v1255 = vunpack.c.l.b16 %v718
      %v1256 = vunpack.c.h.b16 %v718
      %v1257 = vunpack.c.l.b16 %v719
      %v1258 = vunpack.c.h.b16 %v719
      %v1259 = vunpack.c.l.b16 %v720
      %v1260 = vunpack.c.h.b16 %v720
      %v1261 = vunpack.c.l.b16 %v721
      %v1262 = vunpack.c.h.b16 %v721
      %v1263 = vunpack.c.l.b16 %v722
      %v1264 = vunpack.c.h.b16 %v722
      %v1265 = vunpack.c.l.b16 %v723
      %v1266 = vunpack.c.h.b16 %v723
      %v1267 = vunpack.c.l.b16 %v724
      %v1268 = vunpack.c.h.b16 %v724
      %v1269 = vunpack.c.l.b16 %v725
      %v1270 = vunpack.c.h.b16 %v725
      %v1271 = vunpack.c.l.b16 %v726
      %v1272 = vunpack.c.h.b16 %v726
      %v1273 = vunpack.c.l.b16 %v727
      %v1274 = vunpack.c.h.b16 %v727
      %v1275 = vunpack.c.l.b16 %v728
      %v1276 = vunpack.c.h.b16 %v728
      %v1277 = vunpack.c.l.b16 %v729
      %v1278 = vunpack.c.h.b16 %v729
      %v1279 = vunpack.c.l.b16 %v730
      %v1280 = vunpack.c.h.b16 %v730
      %v1281 = vunpack.c.l.b16 %v731
      %v1282 = vunpack.c.h.b16 %v731
      %v1283 = vunpack.c.l.b16 %v732
      %v1284 = vunpack.c.h.b16 %v732
      %v1285 = vunpack.c.l.b16 %v733
      %v1286 = vunpack.c.h.b16 %v733
      %v1287 = vunpack.c.l.b16 %v734
      %v1288 = vunpack.c.h.b16 %v734
      %v1289 = vunpack.c.l.b16 %v735
      %v1290 = vunpack.c.h.b16 %v735
      %v1291 = vunpack.c.l.b16 %v736
      %v1292 = vunpack.c.h.b16 %v736
      %v1293 = vunpack.c.l.b16 %v737
      %v1294 = vunpack.c.h.b16 %v737
      %v1295 = vunpack.c.l.b16 %v738
      %v1296 = vunpack.c.h.b16 %v738
      %v1297 = vunpack.c.l.b16 %v739
      %v1298 = vunpack.c.h.b16 %v739
      %v1299 = vunpack.c.l.b16 %v740
      %v1300 = vunpack.c.h.b16 %v740
      %v1301 = vunpack.c.l.b16 %v741
      %v1302 = vunpack.c.h.b16 %v741
      %v1303 = vunpack.c.l.b16 %v742
      %v1304 = vunpack.c.h.b16 %v742
      %v1305 = vunpack.c.l.b16 %v743
      %v1306 = vunpack.c.h.b16 %v743
      %v1307 = vunpack.c.l.b16 %v744
      %v1308 = vunpack.c.h.b16 %v744
      %v1309 = vunpack.c.l.b16 %v745
      %v1310 = vunpack.c.h.b16 %v745
      %v1311 = vunpack.c.l.b16 %v746
      %v1312 = vunpack.c.h.b16 %v746
      %v1313 = vunpack.c.l.b16 %v747
      %v1314 = vunpack.c.h.b16 %v747
      %v1315 = vunpack.c.l.b16 %v748
      %v1316 = vunpack.c.h.b16 %v748
      %v1317 = vunpack.c.l.b16 %v749
      %v1318 = vunpack.c.h.b16 %v749
      %v1319 = vunpack.c.l.b16 %v750
      %v1320 = vunpack.c.h.b16 %v750
      %v1321 = vunpack.c.l.b16 %v751
      %v1322 = vunpack.c.h.b16 %v751
      %v1323 = vunpack.c.l.b16 %v752
      %v1324 = vunpack.c.h.b16 %v752
      %v1325 = vunpack.c.l.b16 %v753
      %v1326 = vunpack.c.h.b16 %v753
      %v1327 = vunpack.c.l.b16 %v754
      %v1328 = vunpack.c.h.b16 %v754
      %v1329 = vunpack.c.l.b16 %v755
      %v1330 = vunpack.c.h.b16 %v755
      %v1331 = vunpack.c.l.b16 %v756
      %v1332 = vunpack.c.h.b16 %v756
      %v1333 = vunpack.c.l.b16 %v757
      %v1334 = vunpack.c.h.b16 %v757
      %v1335 = vunpack.c.l.b16 %v758
      %v1336 = vunpack.c.h.b16 %v758
      %v1337 = vunpack.c.l.b16 %v759
      %v1338 = vunpack.c.h.b16 %v759
      %v1339 = vunpack.c.l.b16 %v760
      %v1340 = vunpack.c.h.b16 %v760
      %v1341 = vunpack.c.l.b16 %v761
      %v1342 = vunpack.c.h.b16 %v761
      %v1343 = vunpack.c.l.b16 %v762
      %v1344 = vunpack.c.h.b16 %v762
      %v1345 = vunpack.c.l.b16 %v763
      %v1346 = vunpack.c.h.b16 %v763
      %v1347 = vunpack.c.l.b16 %v764
      %v1348 = vunpack.c.h.b16 %v764
      %v1349 = vunpack.c.l.b16 %v765
      %v1350 = vunpack.c.h.b16 %v765
      %v1351 = vunpack.c.l.b16 %v766
      %v1352 = vunpack.c.h.b16 %v766
      %v1353 = vunpack.c.l.b16 %v767
      %v1354 = vunpack.c.h.b16 %v767
      %v1355 = vunpack.c.l.b16 %v768
      %v1356 = vunpack.c.h.b16 %v768
      %v1357 = vunpack.c.l.b16 %v769
      %v1358 = vunpack.c.h.b16 %v769
      %v1359 = vunpack.c.l.b16 %v770
      %v1360 = vunpack.c.h.b16 %v770
      %v1361 = vunpack.c.l.b16 %v771
      %v1362 = vunpack.c.h.b16 %v771
      %v1363 = vunpack.c.l.b16 %v772
      %v1364 = vunpack.c.h.b16 %v772
      %v1365 = vunpack.c.l.b16 %v773
      %v1366 = vunpack.c.h.b16 %v773
      %v1367 = vunpack.c.l.b16 %v774
      %v1368 = vunpack.c.h.b16 %v774
      %v1369 = vunpack.c.l.b16 %v775
      %v1370 = vunpack.c.h.b16 %v775
      %v1371 = vunpack.c.l.b16 %v776
      %v1372 = vunpack.c.h.b16 %v776
      %v1373 = vunpack.c.l.b16 %v777
      %v1374 = vunpack.c.h.b16 %v777
      %v1375 = vunpack.c.l.b16 %v778
      %v1376 = vunpack.c.h.b16 %v778
      %v1377 = vunpack.c.l.b16 %v779
      %v1378 = vunpack.c.h.b16 %v779
      %v1379 = vunpack.c.l.b16 %v780
      %v1380 = vunpack.c.h.b16 %v780
      %v1381 = vunpack.c.l.b16 %v781
      %v1382 = vunpack.c.h.b16 %v781
      %v1383 = vunpack.c.l.b16 %v782
      %v1384 = vunpack.c.h.b16 %v782
      %v1385 = vunpack.c.l.b16 %v783
      %v1386 = vunpack.c.h.b16 %v783
      %v1387 = vunpack.c.l.b16 %v784
      %v1388 = vunpack.c.h.b16 %v784
      %v1389 = vunpack.c.l.b16 %v785
      %v1390 = vunpack.c.h.b16 %v785
      %v1391 = vunpack.c.l.b16 %v786
      %v1392 = vunpack.c.h.b16 %v786
      %v1393 = vunpack.c.l.b16 %v787
      %v1394 = vunpack.c.h.b16 %v787
      %v1395 = vunpack.c.l.b16 %v788
      %v1396 = vunpack.c.h.b16 %v788
      %v1397 = vunpack.c.l.b16 %v789
      %v1398 = vunpack.c.h.b16 %v789
      %v1399 = vunpack.c.l.b16 %v790
      %v1400 = vunpack.c.h.b16 %v790
      %v1401 = vpack.c.b16 %v1013, %v1009
      %v1402 = vpack.c.b16 %v1014, %v1010
      %v1403 = vpack.c.b16 %v1015, %v1011
      %v1404 = vpack.c.b16 %v1016, %v1012
      %v1405 = vpack.c.b16 %v1021, %v1017
      %v1406 = vpack.c.b16 %v1022, %v1018
      %v1407 = vpack.c.b16 %v1023, %v1019
      %v1408 = vpack.c.b16 %v1024, %v1020
      %v1409 = vpack.c.b16 %v1029, %v1025
      %v1410 = vpack.c.b16 %v1030, %v1026
      %v1411 = vpack.c.b16 %v1031, %v1027
      %v1412 = vpack.c.b16 %v1032, %v1028
      %v1413 = vpack.c.b16 %v1037, %v1033
      %v1414 = vpack.c.b16 %v1038, %v1034
      %v1415 = vpack.c.b16 %v1039, %v1035
      %v1416 = vpack.c.b16 %v1040, %v1036
      %v1417 = vpack.c.b16 %v1045, %v1041
      %v1418 = vpack.c.b16 %v1046, %v1042
      %v1419 = vpack.c.b16 %v1047, %v1043
      %v1420 = vpack.c.b16 %v1048, %v1044
      %v1421 = vpack.c.b16 %v1053, %v1049
      %v1422 = vpack.c.b16 %v1054, %v1050
      %v1423 = vpack.c.b16 %v1055, %v1051
      %v1424 = vpack.c.b16 %v1056, %v1052
      %v1425 = vpack.c.b16 %v1061, %v1057
      %v1426 = vpack.c.b16 %v1062, %v1058
      %v1427 = vpack.c.b16 %v1063, %v1059
      %v1428 = vpack.c.b16 %v1064, %v1060
      %v1429 = vpack.c.b16 %v1069, %v1065
      %v1430 = vpack.c.b16 %v1070, %v1066
      %v1431 = vpack.c.b16 %v1071, %v1067
      %v1432 = vpack.c.b16 %v1072, %v1068
      %v1433 = vpack.c.b16 %v1077, %v1073
      %v1434 = vpack.c.b16 %v1078, %v1074
      %v1435 = vpack.c.b16 %v1079, %v1075
      %v1436 = vpack.c.b16 %v1080, %v1076
      %v1437 = vpack.c.b16 %v1085, %v1081
      %v1438 = vpack.c.b16 %v1086, %v1082
      %v1439 = vpack.c.b16 %v1087, %v1083
      %v1440 = vpack.c.b16 %v1088, %v1084
      %v1441 = vpack.c.b16 %v1093, %v1089
      %v1442 = vpack.c.b16 %v1094, %v1090
      %v1443 = vpack.c.b16 %v1095, %v1091
      %v1444 = vpack.c.b16 %v1096, %v1092
      %v1445 = vpack.c.b16 %v1101, %v1097
      %v1446 = vpack.c.b16 %v1102, %v1098
      %v1447 = vpack.c.b16 %v1103, %v1099
      %v1448 = vpack.c.b16 %v1104, %v1100
      %v1449 = vpack.c.b16 %v1109, %v1105
      %v1450 = vpack.c.b16 %v1110, %v1106
      %v1451 = vpack.c.b16 %v1111, %v1107
      %v1452 = vpack.c.b16 %v1112, %v1108
      %v1453 = vpack.c.b16 %v1117, %v1113
      %v1454 = vpack.c.b16 %v1118, %v1114
      %v1455 = vpack.c.b16 %v1119, %v1115
      %v1456 = vpack.c.b16 %v1120, %v1116
      %v1457 = vpack.c.b16 %v1125, %v1121
      %v1458 = vpack.c.b16 %v1126, %v1122
      %v1459 = vpack.c.b16 %v1127, %v1123
      %v1460 = vpack.c.b16 %v1128, %v1124
      %v1461 = vpack.c.b16 %v1133, %v1129
      %v1462 = vpack.c.b16 %v1134, %v1130
      %v1463 = vpack.c.b16 %v1135, %v1131
      %v1464 = vpack.c.b16 %v1136, %v1132
      %v1465 = vpack.c.b16 %v1141, %v1137
      %v1466 = vpack.c.b16 %v1142, %v1138
      %v1467 = vpack.c.b16 %v1143, %v1139
      %v1468 = vpack.c.b16 %v1144, %v1140
      %v1469 = vpack.c.b16 %v1149, %v1145
      %v1470 = vpack.c.b16 %v1150, %v1146
      %v1471 = vpack.c.b16 %v1151, %v1147
      %v1472 = vpack.c.b16 %v1152, %v1148
      %v1473 = vpack.c.b16 %v1157, %v1153
      %v1474 = vpack.c.b16 %v1158, %v1154
      %v1475 = vpack.c.b16 %v1159, %v1155
      %v1476 = vpack.c.b16 %v1160, %v1156
      %v1477 = vpack.c.b16 %v1165, %v1161
      %v1478 = vpack.c.b16 %v1166, %v1162
      %v1479 = vpack.c.b16 %v1167, %v1163
      %v1480 = vpack.c.b16 %v1168, %v1164
      %v1481 = vpack.c.b16 %v1173, %v1169
      %v1482 = vpack.c.b16 %v1174, %v1170
      %v1483 = vpack.c.b16 %v1175, %v1171
      %v1484 = vpack.c.b16 %v1176, %v1172
      %v1485 = vpack.c.b16 %v1181, %v1177
      %v1486 = vpack.c.b16 %v1182, %v1178
      %v1487 = vpack.c.b16 %v1183, %v1179
      %v1488 = vpack.c.b16 %v1184, %v1180
      %v1489 = vpack.c.b16 %v1189, %v1185
      %v1490 = vpack.c.b16 %v1190, %v1186
      %v1491 = vpack.c.b16 %v1191, %v1187
      %v1492 = vpack.c.b16 %v1192, %v1188
      %v1493 = vpack.c.b16 %v1197, %v1193
      %v1494 = vpack.c.b16 %v1198, %v1194
      %v1495 = vpack.c.b16 %v1199, %v1195
      %v1496 = vpack.c.b16 %v1200, %v1196
      %v1497 = vpack.c.b16 %v1205, %v1201
      %v1498 = vpack.c.b16 %v1206, %v1202
      %v1499 = vpack.c.b16 %v1207, %v1203
      %v1500 = vpack.c.b16 %v1208, %v1204
      %v1501 = vpack.c.b16 %v1213, %v1209
      %v1502 = vpack.c.b16 %v1214, %v1210
      %v1503 = vpack.c.b16 %v1215, %v1211
      %v1504 = vpack.c.b16 %v1216, %v1212
      %v1505 = vpack.c.b16 %v1221, %v1217
      %v1506 = vpack.c.b16 %v1222, %v1218
      %v1507 = vpack.c.b16 %v1223, %v1219
      %v1508 = vpack.c.b16 %v1224, %v1220
      %v1509 = vpack.c.b16 %v1229, %v1225
      %v1510 = vpack.c.b16 %v1230, %v1226
      %v1511 = vpack.c.b16 %v1231, %v1227
      %v1512 = vpack.c.b16 %v1232, %v1228
      %v1513 = vpack.c.b16 %v1237, %v1233
      %v1514 = vpack.c.b16 %v1238, %v1234
      %v1515 = vpack.c.b16 %v1239, %v1235
      %v1516 = vpack.c.b16 %v1240, %v1236
      %v1517 = vpack.c.b16 %v1245, %v1241
      %v1518 = vpack.c.b16 %v1246, %v1242
      %v1519 = vpack.c.b16 %v1247, %v1243
      %v1520 = vpack.c.b16 %v1248, %v1244
      %v1521 = vpack.c.b16 %v1253, %v1249
      %v1522 = vpack.c.b16 %v1254, %v1250
      %v1523 = vpack.c.b16 %v1255, %v1251
      %v1524 = vpack.c.b16 %v1256, %v1252
      %v1525 = vpack.c.b16 %v1261, %v1257
      %v1526 = vpack.c.b16 %v1262, %v1258
      %v1527 = vpack.c.b16 %v1263, %v1259
      %v1528 = vpack.c.b16 %v1264, %v1260
      %v1529 = vpack.c.b16 %v1269, %v1265
      %v1530 = vpack.c.b16 %v1270, %v1266
      %v1531 = vpack.c.b16 %v1271, %v1267
      %v1532 = vpack.c.b16 %v1272, %v1268
      %v1533 = vpack.c.b16 %v1277, %v1273
      %v1534 = vpack.c.b16 %v1278, %v1274
      %v1535 = vpack.c.b16 %v1279, %v1275
      %v1536 = vpack.c.b16 %v1280, %v1276
      %v1537 = vpack.c.b16 %v1285, %v1281
      %v1538 = vpack.c.b16 %v1286, %v1282
      %v1539 = vpack.c.b16 %v1287, %v1283
      %v1540 = vpack.c.b16 %v1288, %v1284
      %v1541 = vpack.c.b16 %v1293, %v1289
      %v1542 = vpack.c.b16 %v1294, %v1290
      %v1543 = vpack.c.b16 %v1295, %v1291
      %v1544 = vpack.c.b16 %v1296, %v1292
      %v1545 = vpack.c.b16 %v1301, %v1297
      %v1546 = vpack.c.b16 %v1302, %v1298
      %v1547 = vpack.c.b16 %v1303, %v1299
      %v1548 = vpack.c.b16 %v1304, %v1300
      %v1549 = vpack.c.b16 %v1309, %v1305
      %v1550 = vpack.c.b16 %v1310, %v1306
      %v1551 = vpack.c.b16 %v1311, %v1307
      %v1552 = vpack.c.b16 %v1312, %v1308
      %v1553 = vpack.c.b16 %v1317, %v1313
      %v1554 = vpack.c.b16 %v1318, %v1314
      %v1555 = vpack.c.b16 %v1319, %v1315
      %v1556 = vpack.c.b16 %v1320, %v1316
      %v1557 = vpack.c.b16 %v1325, %v1321
      %v1558 = vpack.c.b16 %v1326, %v1322
      %v1559 = vpack.c.b16 %v1327, %v1323
      %v1560 = vpack.c.b16 %v1328, %v1324
      %v1561 = vpack.c.b16 %v1333, %v1329
      %v1562 = vpack.c.b16 %v1334, %v1330
      %v1563 = vpack.c.b16 %v1335, %v1331
      %v1564 = vpack.c.b16 %v1336, %v1332
      %v1565 = vpack.c.b16 %v1341, %v1337
      %v1566 = vpack.c.b16 %v1342, %v1338
      %v1567 = vpack.c.b16 %v1343, %v1339
      %v1568 = vpack.c.b16 %v1344, %v1340
      %v1569 = vpack.c.b16 %v1349, %v1345
      %v1570 = vpack.c.b16 %v1350, %v1346
      %v1571 = vpack.c.b16 %v1351, %v1347
      %v1572 = vpack.c.b16 %v1352, %v1348
      %v1573 = vpack.c.b16 %v1357, %v1353
      %v1574 = vpack.c.b16 %v1358, %v1354
      %v1575 = vpack.c.b16 %v1359, %v1355
      %v1576 = vpack.c.b16 %v1360, %v1356
      %v1577 = vpack.c.b16 %v1365, %v1361
      %v1578 = vpack.c.b16 %v1366, %v1362
      %v1579 = vpack.c.b16 %v1367, %v1363
      %v1580 = vpack.c.b16 %v1368, %v1364
      %v1581 = vpack.c.b16 %v1373, %v1369
      %v1582 = vpack.c.b16 %v1374, %v1370
      %v1583 = vpack.c.b16 %v1375, %v1371
      %v1584 = vpack.c.b16 %v1376, %v1372
      %v1585 = vpack.c.b16 %v1381, %v1377
      %v1586 = vpack.c.b16 %v1382, %v1378
      %v1587 = vpack.c.b16 %v1383, %v1379
      %v1588 = vpack.c.b16 %v1384, %v1380
      %v1589 = vpack.c.b16 %v1389, %v1385
      %v1590 = vpack.c.b16 %v1390, %v1386
      %v1591 = vpack.c.b16 %v1391, %v1387
      %v1592 = vpack.c.b16 %v1392, %v1388
      %v1593 = vpack.c.b16 %v1397, %v1393
      %v1594 = vpack.c.b16 %v1398, %v1394
      %v1595 = vpack.c.b16 %v1399, %v1395
      %v1596 = vpack.c.b16 %v1400, %v1396
      %vm1793 = vcmask 130048
      %v1795 = vsel %vm1793, %v489, 0
      %v1798 = vsel %vm1793, %v496, 0
      %v1801 = vsel %vm1793, %v503, 0
      %v1804 = vsel %vm1793, %v510, 0
      %v1807 = vsel %vm1793, %v517, 0
      %v1810 = vsel %vm1793, %v524, 0
      %v1813 = vsel %vm1793, %v531, 0
      %v1816 = vsel %vm1793, %v538, 0
      %v1819 = vsel %vm1793, %v545, 0
      %v1822 = vsel %vm1793, %v552, 0
      %v1825 = vsel %vm1793, %v559, 0
      %v1828 = vsel %vm1793, %v566, 0
      %v1831 = vsel %vm1793, %v573, 0
      %v1834 = vsel %vm1793, %v580, 0
      %v1837 = vsel %vm1793, %v587, 0
      %v1840 = vsel %vm1793, %v594, 0
      %1842 = vmatprep.subr.bf16.mxu0 %v1402
      %1843 = vmatpush1.bf16.msra.mxu0 %v1401
      %1844 = vmatprep.subr.bf16.mxu0 %v1406
      %1845 = vmatpush1.bf16.msra.mxu0 %v1405
      %1846 = vmatprep.subr.bf16.mxu0 %v1410
      %1847 = vmatpush1.bf16.msra.mxu0 %v1409
      %1848 = vmatprep.subr.bf16.mxu0 %v1414
      %1849 = vmatpush1.bf16.msra.mxu0 %v1413
      %1850 = vmatprep.subr.bf16.mxu0 %v1418
      %1851 = vmatpush1.bf16.msra.mxu0 %v1417
      %1852 = vmatprep.subr.bf16.mxu0 %v1422
      %1853 = vmatpush1.bf16.msra.mxu0 %v1421
      %1854 = vmatprep.subr.bf16.mxu0 %v1426
      %1855 = vmatpush1.bf16.msra.mxu0 %v1425
      %1856 = vmatprep.subr.bf16.mxu0 %v1430
      %1857 = vmatpush1.bf16.msra.mxu0 %v1429
      %1858 = vmatprep.subr.bf16.mxu0 %v1434
      %1859 = vmatpush1.bf16.msra.mxu0 %v1433
      %1860 = vmatprep.subr.bf16.mxu0 %v1438
      %1861 = vmatpush1.bf16.msra.mxu0 %v1437
      %1862 = vmatprep.subr.bf16.mxu0 %v1442
      %1863 = vmatpush1.bf16.msra.mxu0 %v1441
      %1864 = vmatprep.subr.bf16.mxu0 %v1446
      %1865 = vmatpush1.bf16.msra.mxu0 %v1445
      %1866 = vmatprep.subr.bf16.mxu0 %v1450
      %1867 = vmatpush1.bf16.msra.mxu0 %v1449
      %1868 = vmatprep.subr.bf16.mxu0 %v1454
      %1869 = vmatpush1.bf16.msra.mxu0 %v1453
      %1870 = vmatprep.subr.bf16.mxu0 %v1458
      %1871 = vmatpush1.bf16.msra.mxu0 %v1457
      %1872 = vmatprep.subr.bf16.mxu0 %v1462
      %1873 = vmatpush1.bf16.msra.mxu0 %v1461
      %1874 = vmatprep.mubr.bf16.mxu0 %v484
      %1875 = vmatmul.mubr.bf16.gmra.mrb[0].mxu0 %v483
      %v1876 = vpop.f32.mrb[0].mxu0
      %v1877 = vadd.f32 %v796, %v1876
      %v1878 = vpop.f32.mrb[0].mxu0
      %v1879 = vadd.f32 %v800, %v1878
      %v1880 = vpop.f32.mrb[0].mxu0
      %v1881 = vadd.f32 %v796, %v1880
      %v1882 = vpop.f32.mrb[0].mxu0
      %v1883 = vadd.f32 %v800, %v1882
      %1884 = vmatprep.mubr.bf16.mxu0 %v491
      %1885 = vmatmul.mubr.bf16.gmra.mrb[0].mxu0 %v490
      %v1886 = vpop.f32.mrb[0].mxu0
      %v1887 = vadd.f32 %v796, %v1886
      %v1888 = vpop.f32.mrb[0].mxu0
      %v1889 = vadd.f32 %v800, %v1888
      %v1890 = vpop.f32.mrb[0].mxu0
      %v1891 = vadd.f32 %v796, %v1890
      %v1892 = vpop.f32.mrb[0].mxu0
      %v1893 = vadd.f32 %v800, %v1892
      %1894 = vmatprep.mubr.bf16.mxu0 %v498
      %1895 = vmatmul.mubr.bf16.gmra.mrb[0].mxu0 %v497
      %v1896 = vpop.f32.mrb[0].mxu0
      %v1897 = vadd.f32 %v796, %v1896
      %v1898 = vpop.f32.mrb[0].mxu0
      %v1899 = vadd.f32 %v800, %v1898
      %v1900 = vpop.f32.mrb[0].mxu0
      %v1901 = vadd.f32 %v796, %v1900
      %v1902 = vpop.f32.mrb[0].mxu0
      %v1903 = vadd.f32 %v800, %v1902
      %1904 = vmatprep.mubr.bf16.mxu0 %v505
      %1905 = vmatmul.mubr.bf16.gmra.mrb[0].mxu0 %v504
      %v1906 = vpop.f32.mrb[0].mxu0
      %v1907 = vadd.f32 %v796, %v1906
      %v1908 = vpop.f32.mrb[0].mxu0
      %v1909 = vadd.f32 %v800, %v1908
      %v1910 = vpop.f32.mrb[0].mxu0
      %v1911 = vadd.f32 %v796, %v1910
      %v1912 = vpop.f32.mrb[0].mxu0
      %v1913 = vadd.f32 %v800, %v1912
      %1914 = vmatprep.mubr.bf16.mxu0 %v512
      %1915 = vmatmul.mubr.bf16.gmra.mrb[0].mxu0 %v511
      %v1916 = vpop.f32.mrb[0].mxu0
      %v1917 = vadd.f32 %v796, %v1916
      %v1918 = vpop.f32.mrb[0].mxu0
      %v1919 = vadd.f32 %v800, %v1918
      %v1920 = vpop.f32.mrb[0].mxu0
      %v1921 = vadd.f32 %v796, %v1920
      %v1922 = vpop.f32.mrb[0].mxu0
      %v1923 = vadd.f32 %v800, %v1922
      %1924 = vmatprep.mubr.bf16.mxu0 %v519
      %1925 = vmatmul.mubr.bf16.gmra.mrb[0].mxu0 %v518
      %v1926 = vpop.f32.mrb[0].mxu0
      %v1927 = vadd.f32 %v796, %v1926
      %v1928 = vpop.f32.mrb[0].mxu0
      %v1929 = vadd.f32 %v800, %v1928
      %v1930 = vpop.f32.mrb[0].mxu0
      %v1931 = vadd.f32 %v796, %v1930
      %v1932 = vpop.f32.mrb[0].mxu0
      %v1933 = vadd.f32 %v800, %v1932
      %1934 = vmatprep.mubr.bf16.mxu0 %v526
      %1935 = vmatmul.mubr.bf16.gmra.mrb[0].mxu0 %v525
      %v1936 = vpop.f32.mrb[0].mxu0
      %v1937 = vadd.f32 %v796, %v1936
      %v1938 = vpop.f32.mrb[0].mxu0
      %v1939 = vadd.f32 %v800, %v1938
      %v1940 = vpop.f32.mrb[0].mxu0
      %v1941 = vadd.f32 %v796, %v1940
      %v1942 = vpop.f32.mrb[0].mxu0
      %v1943 = vadd.f32 %v800, %v1942
      %1944 = vmatprep.mubr.bf16.mxu0 %v533
      %1945 = vmatmul.mubr.bf16.gmra.mrb[0].mxu0 %v532
      %v1946 = vpop.f32.mrb[0].mxu0
      %v1947 = vadd.f32 %v796, %v1946
      %v1948 = vpop.f32.mrb[0].mxu0
      %v1949 = vadd.f32 %v800, %v1948
      %v1950 = vpop.f32.mrb[0].mxu0
      %v1951 = vadd.f32 %v796, %v1950
      %v1952 = vpop.f32.mrb[0].mxu0
      %v1953 = vadd.f32 %v800, %v1952
      %1954 = vmatprep.mubr.bf16.mxu0 %v540
      %1955 = vmatmul.mubr.bf16.gmra.mrb[0].mxu0 %v539
      %v1956 = vpop.f32.mrb[0].mxu0
      %v1957 = vadd.f32 %v796, %v1956
      %v1958 = vpop.f32.mrb[0].mxu0
      %v1959 = vadd.f32 %v800, %v1958
      %v1960 = vpop.f32.mrb[0].mxu0
      %v1961 = vadd.f32 %v796, %v1960
      %v1962 = vpop.f32.mrb[0].mxu0
      %v1963 = vadd.f32 %v800, %v1962
      %1964 = vmatprep.mubr.bf16.mxu0 %v547
      %1965 = vmatmul.mubr.bf16.gmra.mrb[0].mxu0 %v546
      %v1966 = vpop.f32.mrb[0].mxu0
      %v1967 = vadd.f32 %v796, %v1966
      %v1968 = vpop.f32.mrb[0].mxu0
      %v1969 = vadd.f32 %v800, %v1968
      %v1970 = vpop.f32.mrb[0].mxu0
      %v1971 = vadd.f32 %v796, %v1970
      %v1972 = vpop.f32.mrb[0].mxu0
      %v1973 = vadd.f32 %v800, %v1972
      %1974 = vmatprep.mubr.bf16.mxu0 %v554
      %1975 = vmatmul.mubr.bf16.gmra.mrb[0].mxu0 %v553
      %v1976 = vpop.f32.mrb[0].mxu0
      %v1977 = vadd.f32 %v796, %v1976
      %v1978 = vpop.f32.mrb[0].mxu0
      %v1979 = vadd.f32 %v800, %v1978
      %v1980 = vpop.f32.mrb[0].mxu0
      %v1981 = vadd.f32 %v796, %v1980
      %v1982 = vpop.f32.mrb[0].mxu0
      %v1983 = vadd.f32 %v800, %v1982
      %1984 = vmatprep.mubr.bf16.mxu0 %v561
      %1985 = vmatmul.mubr.bf16.gmra.mrb[0].mxu0 %v560
      %v1986 = vpop.f32.mrb[0].mxu0
      %v1987 = vadd.f32 %v796, %v1986
      %v1988 = vpop.f32.mrb[0].mxu0
      %v1989 = vadd.f32 %v800, %v1988
      %v1990 = vpop.f32.mrb[0].mxu0
      %v1991 = vadd.f32 %v796, %v1990
      %v1992 = vpop.f32.mrb[0].mxu0
      %v1993 = vadd.f32 %v800, %v1992
      %1994 = vmatprep.mubr.bf16.mxu0 %v568
      %1995 = vmatmul.mubr.bf16.gmra.mrb[0].mxu0 %v567
      %v1996 = vpop.f32.mrb[0].mxu0
      %v1997 = vadd.f32 %v796, %v1996
      %v1998 = vpop.f32.mrb[0].mxu0
      %v1999 = vadd.f32 %v800, %v1998
      %v2000 = vpop.f32.mrb[0].mxu0
      %v2001 = vadd.f32 %v796, %v2000
      %v2002 = vpop.f32.mrb[0].mxu0
      %v2003 = vadd.f32 %v800, %v2002
      %2004 = vmatprep.mubr.bf16.mxu0 %v575
      %2005 = vmatmul.mubr.bf16.gmra.mrb[0].mxu0 %v574
      %v2006 = vpop.f32.mrb[0].mxu0
      %v2007 = vadd.f32 %v796, %v2006
      %v2008 = vpop.f32.mrb[0].mxu0
      %v2009 = vadd.f32 %v800, %v2008
      %v2010 = vpop.f32.mrb[0].mxu0
      %v2011 = vadd.f32 %v796, %v2010
      %v2012 = vpop.f32.mrb[0].mxu0
      %v2013 = vadd.f32 %v800, %v2012
      %2014 = vmatprep.mubr.bf16.mxu0 %v582
      %2015 = vmatmul.mubr.bf16.gmra.mrb[0].mxu0 %v581
      %v2016 = vpop.f32.mrb[0].mxu0
      %v2017 = vadd.f32 %v796, %v2016
      %v2018 = vpop.f32.mrb[0].mxu0
      %v2019 = vadd.f32 %v800, %v2018
      %v2020 = vpop.f32.mrb[0].mxu0
      %v2021 = vadd.f32 %v796, %v2020
      %v2022 = vpop.f32.mrb[0].mxu0
      %v2023 = vadd.f32 %v800, %v2022
      %2024 = vmatprep.mubr.bf16.mxu0 %v589
      %2025 = vmatmul.mubr.bf16.gmra.mrb[0].mxu0 %v588
      %v2026 = vpop.f32.mrb[0].mxu0
      %v2027 = vadd.f32 %v796, %v2026
      %v2028 = vpop.f32.mrb[0].mxu0
      %v2029 = vadd.f32 %v800, %v2028
      %v2030 = vpop.f32.mrb[0].mxu0
      %v2031 = vadd.f32 %v796, %v2030
      %v2032 = vpop.f32.mrb[0].mxu0
      %v2033 = vadd.f32 %v800, %v2032
      %2034 = vdwg.mxu0
      %2035 = vmatprep.subr.bf16.mxu0 %v1466
      %2036 = vmatpush1.bf16.msra.mxu0 %v1465
      %2037 = vmatprep.subr.bf16.mxu0 %v1470
      %2038 = vmatpush1.bf16.msra.mxu0 %v1469
      %2039 = vmatprep.subr.bf16.mxu0 %v1474
      %2040 = vmatpush1.bf16.msra.mxu0 %v1473
      %2041 = vmatprep.subr.bf16.mxu0 %v1478
      %2042 = vmatpush1.bf16.msra.mxu0 %v1477
      %2043 = vmatprep.subr.bf16.mxu0 %v1482
      %2044 = vmatpush1.bf16.msra.mxu0 %v1481
      %2045 = vmatprep.subr.bf16.mxu0 %v1486
      %2046 = vmatpush1.bf16.msra.mxu0 %v1485
      %2047 = vmatprep.subr.bf16.mxu0 %v1490
      %2048 = vmatpush1.bf16.msra.mxu0 %v1489
      %2049 = vmatprep.subr.bf16.mxu0 %v1494
      %2050 = vmatpush1.bf16.msra.mxu0 %v1493
      %2051 = vmatprep.subr.bf16.mxu0 %v1498
      %2052 = vmatpush1.bf16.msra.mxu0 %v1497
      %2053 = vmatprep.subr.bf16.mxu0 %v1502
      %2054 = vmatpush1.bf16.msra.mxu0 %v1501
      %2055 = vmatprep.subr.bf16.mxu0 %v1506
      %2056 = vmatpush1.bf16.msra.mxu0 %v1505
      %2057 = vmatprep.subr.bf16.mxu0 %v1510
      %2058 = vmatpush1.bf16.msra.mxu0 %v1509
      %2059 = vmatprep.subr.bf16.mxu0 %v1514
      %2060 = vmatpush1.bf16.msra.mxu0 %v1513
      %2061 = vmatprep.subr.bf16.mxu0 %v1518
      %2062 = vmatpush1.bf16.msra.mxu0 %v1517
      %2063 = vmatprep.subr.bf16.mxu0 %v1522
      %2064 = vmatpush1.bf16.msra.mxu0 %v1521
      %2065 = vmatprep.subr.bf16.mxu0 %v1526
      %2066 = vmatpush1.bf16.msra.mxu0 %v1525
      %2067 = vmatprep.mubr.bf16.mxu0 %v486
      %2068 = vmatmul.mubr.bf16.gmra.mrb[0].mxu0 %v485
      %v2069 = vpop.f32.mrb[0].mxu0
      %v2070 = vadd.f32 %v1877, %v2069
      %v2071 = vpop.f32.mrb[0].mxu0
      %v2072 = vadd.f32 %v1879, %v2071
      %v2073 = vpop.f32.mrb[0].mxu0
      %v2074 = vadd.f32 %v1881, %v2073
      %v2075 = vpop.f32.mrb[0].mxu0
      %v2076 = vadd.f32 %v1883, %v2075
      %2077 = vmatprep.mubr.bf16.mxu0 %v493
      %2078 = vmatmul.mubr.bf16.gmra.mrb[0].mxu0 %v492
      %v2079 = vpop.f32.mrb[0].mxu0
      %v2080 = vadd.f32 %v1887, %v2079
      %v2081 = vpop.f32.mrb[0].mxu0
      %v2082 = vadd.f32 %v1889, %v2081
      %v2083 = vpop.f32.mrb[0].mxu0
      %v2084 = vadd.f32 %v1891, %v2083
      %v2085 = vpop.f32.mrb[0].mxu0
      %v2086 = vadd.f32 %v1893, %v2085
      %2087 = vmatprep.mubr.bf16.mxu0 %v500
      %2088 = vmatmul.mubr.bf16.gmra.mrb[0].mxu0 %v499
      %v2089 = vpop.f32.mrb[0].mxu0
      %v2090 = vadd.f32 %v1897, %v2089
      %v2091 = vpop.f32.mrb[0].mxu0
      %v2092 = vadd.f32 %v1899, %v2091
      %v2093 = vpop.f32.mrb[0].mxu0
      %v2094 = vadd.f32 %v1901, %v2093
      %v2095 = vpop.f32.mrb[0].mxu0
      %v2096 = vadd.f32 %v1903, %v2095
      %2097 = vmatprep.mubr.bf16.mxu0 %v507
      %2098 = vmatmul.mubr.bf16.gmra.mrb[0].mxu0 %v506
      %v2099 = vpop.f32.mrb[0].mxu0
      %v2100 = vadd.f32 %v1907, %v2099
      %v2101 = vpop.f32.mrb[0].mxu0
      %v2102 = vadd.f32 %v1909, %v2101
      %v2103 = vpop.f32.mrb[0].mxu0
      %v2104 = vadd.f32 %v1911, %v2103
      %v2105 = vpop.f32.mrb[0].mxu0
      %v2106 = vadd.f32 %v1913, %v2105
      %2107 = vmatprep.mubr.bf16.mxu0 %v514
      %2108 = vmatmul.mubr.bf16.gmra.mrb[0].mxu0 %v513
      %v2109 = vpop.f32.mrb[0].mxu0
      %v2110 = vadd.f32 %v1917, %v2109
      %v2111 = vpop.f32.mrb[0].mxu0
      %v2112 = vadd.f32 %v1919, %v2111
      %v2113 = vpop.f32.mrb[0].mxu0
      %v2114 = vadd.f32 %v1921, %v2113
      %v2115 = vpop.f32.mrb[0].mxu0
      %v2116 = vadd.f32 %v1923, %v2115
      %2117 = vmatprep.mubr.bf16.mxu0 %v521
      %2118 = vmatmul.mubr.bf16.gmra.mrb[0].mxu0 %v520
      %v2119 = vpop.f32.mrb[0].mxu0
      %v2120 = vadd.f32 %v1927, %v2119
      %v2121 = vpop.f32.mrb[0].mxu0
      %v2122 = vadd.f32 %v1929, %v2121
      %v2123 = vpop.f32.mrb[0].mxu0
      %v2124 = vadd.f32 %v1931, %v2123
      %v2125 = vpop.f32.mrb[0].mxu0
      %v2126 = vadd.f32 %v1933, %v2125
      %2127 = vmatprep.mubr.bf16.mxu0 %v528
      %2128 = vmatmul.mubr.bf16.gmra.mrb[0].mxu0 %v527
      %v2129 = vpop.f32.mrb[0].mxu0
      %v2130 = vadd.f32 %v1937, %v2129
      %v2131 = vpop.f32.mrb[0].mxu0
      %v2132 = vadd.f32 %v1939, %v2131
      %v2133 = vpop.f32.mrb[0].mxu0
      %v2134 = vadd.f32 %v1941, %v2133
      %v2135 = vpop.f32.mrb[0].mxu0
      %v2136 = vadd.f32 %v1943, %v2135
      %2137 = vmatprep.mubr.bf16.mxu0 %v535
      %2138 = vmatmul.mubr.bf16.gmra.mrb[0].mxu0 %v534
      %v2139 = vpop.f32.mrb[0].mxu0
      %v2140 = vadd.f32 %v1947, %v2139
      %v2141 = vpop.f32.mrb[0].mxu0
      %v2142 = vadd.f32 %v1949, %v2141
      %v2143 = vpop.f32.mrb[0].mxu0
      %v2144 = vadd.f32 %v1951, %v2143
      %v2145 = vpop.f32.mrb[0].mxu0
      %v2146 = vadd.f32 %v1953, %v2145
      %2147 = vmatprep.mubr.bf16.mxu0 %v542
      %2148 = vmatmul.mubr.bf16.gmra.mrb[0].mxu0 %v541
      %v2149 = vpop.f32.mrb[0].mxu0
      %v2150 = vadd.f32 %v1957, %v2149
      %v2151 = vpop.f32.mrb[0].mxu0
      %v2152 = vadd.f32 %v1959, %v2151
      %v2153 = vpop.f32.mrb[0].mxu0
      %v2154 = vadd.f32 %v1961, %v2153
      %v2155 = vpop.f32.mrb[0].mxu0
      %v2156 = vadd.f32 %v1963, %v2155
      %2157 = vmatprep.mubr.bf16.mxu0 %v549
      %2158 = vmatmul.mubr.bf16.gmra.mrb[0].mxu0 %v548
      %v2159 = vpop.f32.mrb[0].mxu0
      %v2160 = vadd.f32 %v1967, %v2159
      %v2161 = vpop.f32.mrb[0].mxu0
      %v2162 = vadd.f32 %v1969, %v2161
      %v2163 = vpop.f32.mrb[0].mxu0
      %v2164 = vadd.f32 %v1971, %v2163
      %v2165 = vpop.f32.mrb[0].mxu0
      %v2166 = vadd.f32 %v1973, %v2165
      %2167 = vmatprep.mubr.bf16.mxu0 %v556
      %2168 = vmatmul.mubr.bf16.gmra.mrb[0].mxu0 %v555
      %v2169 = vpop.f32.mrb[0].mxu0
      %v2170 = vadd.f32 %v1977, %v2169
      %v2171 = vpop.f32.mrb[0].mxu0
      %v2172 = vadd.f32 %v1979, %v2171
      %v2173 = vpop.f32.mrb[0].mxu0
      %v2174 = vadd.f32 %v1981, %v2173
      %v2175 = vpop.f32.mrb[0].mxu0
      %v2176 = vadd.f32 %v1983, %v2175
      %2177 = vmatprep.mubr.bf16.mxu0 %v563
      %2178 = vmatmul.mubr.bf16.gmra.mrb[0].mxu0 %v562
      %v2179 = vpop.f32.mrb[0].mxu0
      %v2180 = vadd.f32 %v1987, %v2179
      %v2181 = vpop.f32.mrb[0].mxu0
      %v2182 = vadd.f32 %v1989, %v2181
      %v2183 = vpop.f32.mrb[0].mxu0
      %v2184 = vadd.f32 %v1991, %v2183
      %v2185 = vpop.f32.mrb[0].mxu0
      %v2186 = vadd.f32 %v1993, %v2185
      %2187 = vmatprep.mubr.bf16.mxu0 %v570
      %2188 = vmatmul.mubr.bf16.gmra.mrb[0].mxu0 %v569
      %v2189 = vpop.f32.mrb[0].mxu0
      %v2190 = vadd.f32 %v1997, %v2189
      %v2191 = vpop.f32.mrb[0].mxu0
      %v2192 = vadd.f32 %v1999, %v2191
      %v2193 = vpop.f32.mrb[0].mxu0
      %v2194 = vadd.f32 %v2001, %v2193
      %v2195 = vpop.f32.mrb[0].mxu0
      %v2196 = vadd.f32 %v2003, %v2195
      %2197 = vmatprep.mubr.bf16.mxu0 %v577
      %2198 = vmatmul.mubr.bf16.gmra.mrb[0].mxu0 %v576
      %v2199 = vpop.f32.mrb[0].mxu0
      %v2200 = vadd.f32 %v2007, %v2199
      %v2201 = vpop.f32.mrb[0].mxu0
      %v2202 = vadd.f32 %v2009, %v2201
      %v2203 = vpop.f32.mrb[0].mxu0
      %v2204 = vadd.f32 %v2011, %v2203
      %v2205 = vpop.f32.mrb[0].mxu0
      %v2206 = vadd.f32 %v2013, %v2205
      %2207 = vmatprep.mubr.bf16.mxu0 %v584
      %2208 = vmatmul.mubr.bf16.gmra.mrb[0].mxu0 %v583
      %v2209 = vpop.f32.mrb[0].mxu0
      %v2210 = vadd.f32 %v2017, %v2209
      %v2211 = vpop.f32.mrb[0].mxu0
      %v2212 = vadd.f32 %v2019, %v2211
      %v2213 = vpop.f32.mrb[0].mxu0
      %v2214 = vadd.f32 %v2021, %v2213
      %v2215 = vpop.f32.mrb[0].mxu0
      %v2216 = vadd.f32 %v2023, %v2215
      %2217 = vmatprep.mubr.bf16.mxu0 %v591
      %2218 = vmatmul.mubr.bf16.gmra.mrb[0].mxu0 %v590
      %v2219 = vpop.f32.mrb[0].mxu0
      %v2220 = vadd.f32 %v2027, %v2219
      %v2221 = vpop.f32.mrb[0].mxu0
      %v2222 = vadd.f32 %v2029, %v2221
      %v2223 = vpop.f32.mrb[0].mxu0
      %v2224 = vadd.f32 %v2031, %v2223
      %v2225 = vpop.f32.mrb[0].mxu0
      %v2226 = vadd.f32 %v2033, %v2225
      %2227 = vdwg.mxu0
      %2228 = vmatprep.subr.bf16.mxu0 %v1530
      %2229 = vmatpush1.bf16.msra.mxu0 %v1529
      %2230 = vmatprep.subr.bf16.mxu0 %v1534
      %2231 = vmatpush1.bf16.msra.mxu0 %v1533
      %2232 = vmatprep.subr.bf16.mxu0 %v1538
      %2233 = vmatpush1.bf16.msra.mxu0 %v1537
      %2234 = vmatprep.subr.bf16.mxu0 %v1542
      %2235 = vmatpush1.bf16.msra.mxu0 %v1541
      %2236 = vmatprep.subr.bf16.mxu0 %v1546
      %2237 = vmatpush1.bf16.msra.mxu0 %v1545
      %2238 = vmatprep.subr.bf16.mxu0 %v1550
      %2239 = vmatpush1.bf16.msra.mxu0 %v1549
      %2240 = vmatprep.subr.bf16.mxu0 %v1554
      %2241 = vmatpush1.bf16.msra.mxu0 %v1553
      %2242 = vmatprep.subr.bf16.mxu0 %v1558
      %2243 = vmatpush1.bf16.msra.mxu0 %v1557
      %2244 = vmatprep.subr.bf16.mxu0 %v1562
      %2245 = vmatpush1.bf16.msra.mxu0 %v1561
      %2246 = vmatprep.subr.bf16.mxu0 %v1566
      %2247 = vmatpush1.bf16.msra.mxu0 %v1565
      %2248 = vmatprep.subr.bf16.mxu0 %v1570
      %2249 = vmatpush1.bf16.msra.mxu0 %v1569
      %2250 = vmatprep.subr.bf16.mxu0 %v1574
      %2251 = vmatpush1.bf16.msra.mxu0 %v1573
      %2252 = vmatprep.subr.bf16.mxu0 %v1578
      %2253 = vmatpush1.bf16.msra.mxu0 %v1577
      %2254 = vmatprep.subr.bf16.mxu0 %v1582
      %2255 = vmatpush1.bf16.msra.mxu0 %v1581
      %2256 = vmatprep.subr.bf16.mxu0 %v1586
      %2257 = vmatpush1.bf16.msra.mxu0 %v1585
      %2258 = vmatprep.subr.bf16.mxu0 %v1590
      %2259 = vmatpush1.bf16.msra.mxu0 %v1589
      %2260 = vmatprep.mubr.bf16.mxu0 %v488
      %2261 = vmatmul.mubr.bf16.gmra.mrb[0].mxu0 %v487
      %v2262 = vpop.f32.mrb[0].mxu0
      %v2263 = vadd.f32 %v2070, %v2262
      %v2264 = vpop.f32.mrb[0].mxu0
      %v2265 = vadd.f32 %v2072, %v2264
      %v2266 = vpop.f32.mrb[0].mxu0
      %v2267 = vadd.f32 %v2074, %v2266
      %v2268 = vpop.f32.mrb[0].mxu0
      %v2269 = vadd.f32 %v2076, %v2268
      %2270 = vmatprep.mubr.bf16.mxu0 %v495
      %2271 = vmatmul.mubr.bf16.gmra.mrb[0].mxu0 %v494
      %v2272 = vpop.f32.mrb[0].mxu0
      %v2273 = vadd.f32 %v2080, %v2272
      %v2274 = vpop.f32.mrb[0].mxu0
      %v2275 = vadd.f32 %v2082, %v2274
      %v2276 = vpop.f32.mrb[0].mxu0
      %v2277 = vadd.f32 %v2084, %v2276
      %v2278 = vpop.f32.mrb[0].mxu0
      %v2279 = vadd.f32 %v2086, %v2278
      %2280 = vmatprep.mubr.bf16.mxu0 %v502
      %2281 = vmatmul.mubr.bf16.gmra.mrb[0].mxu0 %v501
      %v2282 = vpop.f32.mrb[0].mxu0
      %v2283 = vadd.f32 %v2090, %v2282
      %v2284 = vpop.f32.mrb[0].mxu0
      %v2285 = vadd.f32 %v2092, %v2284
      %v2286 = vpop.f32.mrb[0].mxu0
      %v2287 = vadd.f32 %v2094, %v2286
      %v2288 = vpop.f32.mrb[0].mxu0
      %v2289 = vadd.f32 %v2096, %v2288
      %2290 = vmatprep.mubr.bf16.mxu0 %v509
      %2291 = vmatmul.mubr.bf16.gmra.mrb[0].mxu0 %v508
      %v2292 = vpop.f32.mrb[0].mxu0
      %v2293 = vadd.f32 %v2100, %v2292
      %v2294 = vpop.f32.mrb[0].mxu0
      %v2295 = vadd.f32 %v2102, %v2294
      %v2296 = vpop.f32.mrb[0].mxu0
      %v2297 = vadd.f32 %v2104, %v2296
      %v2298 = vpop.f32.mrb[0].mxu0
      %v2299 = vadd.f32 %v2106, %v2298
      %2300 = vmatprep.mubr.bf16.mxu0 %v516
      %2301 = vmatmul.mubr.bf16.gmra.mrb[0].mxu0 %v515
      %v2302 = vpop.f32.mrb[0].mxu0
      %v2303 = vadd.f32 %v2110, %v2302
      %v2304 = vpop.f32.mrb[0].mxu0
      %v2305 = vadd.f32 %v2112, %v2304
      %v2306 = vpop.f32.mrb[0].mxu0
      %v2307 = vadd.f32 %v2114, %v2306
      %v2308 = vpop.f32.mrb[0].mxu0
      %v2309 = vadd.f32 %v2116, %v2308
      %2310 = vmatprep.mubr.bf16.mxu0 %v523
      %2311 = vmatmul.mubr.bf16.gmra.mrb[0].mxu0 %v522
      %v2312 = vpop.f32.mrb[0].mxu0
      %v2313 = vadd.f32 %v2120, %v2312
      %v2314 = vpop.f32.mrb[0].mxu0
      %v2315 = vadd.f32 %v2122, %v2314
      %v2316 = vpop.f32.mrb[0].mxu0
      %v2317 = vadd.f32 %v2124, %v2316
      %v2318 = vpop.f32.mrb[0].mxu0
      %v2319 = vadd.f32 %v2126, %v2318
      %2320 = vmatprep.mubr.bf16.mxu0 %v530
      %2321 = vmatmul.mubr.bf16.gmra.mrb[0].mxu0 %v529
      %v2322 = vpop.f32.mrb[0].mxu0
      %v2323 = vadd.f32 %v2130, %v2322
      %v2324 = vpop.f32.mrb[0].mxu0
      %v2325 = vadd.f32 %v2132, %v2324
      %v2326 = vpop.f32.mrb[0].mxu0
      %v2327 = vadd.f32 %v2134, %v2326
      %v2328 = vpop.f32.mrb[0].mxu0
      %v2329 = vadd.f32 %v2136, %v2328
      %2330 = vmatprep.mubr.bf16.mxu0 %v537
      %2331 = vmatmul.mubr.bf16.gmra.mrb[0].mxu0 %v536
      %v2332 = vpop.f32.mrb[0].mxu0
      %v2333 = vadd.f32 %v2140, %v2332
      %v2334 = vpop.f32.mrb[0].mxu0
      %v2335 = vadd.f32 %v2142, %v2334
      %v2336 = vpop.f32.mrb[0].mxu0
      %v2337 = vadd.f32 %v2144, %v2336
      %v2338 = vpop.f32.mrb[0].mxu0
      %v2339 = vadd.f32 %v2146, %v2338
      %2340 = vmatprep.mubr.bf16.mxu0 %v544
      %2341 = vmatmul.mubr.bf16.gmra.mrb[0].mxu0 %v543
      %v2342 = vpop.f32.mrb[0].mxu0
      %v2343 = vadd.f32 %v2150, %v2342
      %v2344 = vpop.f32.mrb[0].mxu0
      %v2345 = vadd.f32 %v2152, %v2344
      %v2346 = vpop.f32.mrb[0].mxu0
      %v2347 = vadd.f32 %v2154, %v2346
      %v2348 = vpop.f32.mrb[0].mxu0
      %v2349 = vadd.f32 %v2156, %v2348
      %2350 = vmatprep.mubr.bf16.mxu0 %v551
      %2351 = vmatmul.mubr.bf16.gmra.mrb[0].mxu0 %v550
      %v2352 = vpop.f32.mrb[0].mxu0
      %v2353 = vadd.f32 %v2160, %v2352
      %v2354 = vpop.f32.mrb[0].mxu0
      %v2355 = vadd.f32 %v2162, %v2354
      %v2356 = vpop.f32.mrb[0].mxu0
      %v2357 = vadd.f32 %v2164, %v2356
      %v2358 = vpop.f32.mrb[0].mxu0
      %v2359 = vadd.f32 %v2166, %v2358
      %2360 = vmatprep.mubr.bf16.mxu0 %v558
      %2361 = vmatmul.mubr.bf16.gmra.mrb[0].mxu0 %v557
      %v2362 = vpop.f32.mrb[0].mxu0
      %v2363 = vadd.f32 %v2170, %v2362
      %v2364 = vpop.f32.mrb[0].mxu0
      %v2365 = vadd.f32 %v2172, %v2364
      %v2366 = vpop.f32.mrb[0].mxu0
      %v2367 = vadd.f32 %v2174, %v2366
      %v2368 = vpop.f32.mrb[0].mxu0
      %v2369 = vadd.f32 %v2176, %v2368
      %2370 = vmatprep.mubr.bf16.mxu0 %v565
      %2371 = vmatmul.mubr.bf16.gmra.mrb[0].mxu0 %v564
      %v2372 = vpop.f32.mrb[0].mxu0
      %v2373 = vadd.f32 %v2180, %v2372
      %v2374 = vpop.f32.mrb[0].mxu0
      %v2375 = vadd.f32 %v2182, %v2374
      %v2376 = vpop.f32.mrb[0].mxu0
      %v2377 = vadd.f32 %v2184, %v2376
      %v2378 = vpop.f32.mrb[0].mxu0
      %v2379 = vadd.f32 %v2186, %v2378
      %2380 = vmatprep.mubr.bf16.mxu0 %v572
      %2381 = vmatmul.mubr.bf16.gmra.mrb[0].mxu0 %v571
      %v2382 = vpop.f32.mrb[0].mxu0
      %v2383 = vadd.f32 %v2190, %v2382
      %v2384 = vpop.f32.mrb[0].mxu0
      %v2385 = vadd.f32 %v2192, %v2384
      %v2386 = vpop.f32.mrb[0].mxu0
      %v2387 = vadd.f32 %v2194, %v2386
      %v2388 = vpop.f32.mrb[0].mxu0
      %v2389 = vadd.f32 %v2196, %v2388
      %2390 = vmatprep.mubr.bf16.mxu0 %v579
      %2391 = vmatmul.mubr.bf16.gmra.mrb[0].mxu0 %v578
      %v2392 = vpop.f32.mrb[0].mxu0
      %v2393 = vadd.f32 %v2200, %v2392
      %v2394 = vpop.f32.mrb[0].mxu0
      %v2395 = vadd.f32 %v2202, %v2394
      %v2396 = vpop.f32.mrb[0].mxu0
      %v2397 = vadd.f32 %v2204, %v2396
      %v2398 = vpop.f32.mrb[0].mxu0
      %v2399 = vadd.f32 %v2206, %v2398
      %2400 = vmatprep.mubr.bf16.mxu0 %v586
      %2401 = vmatmul.mubr.bf16.gmra.mrb[0].mxu0 %v585
      %v2402 = vpop.f32.mrb[0].mxu0
      %v2403 = vadd.f32 %v2210, %v2402
      %v2404 = vpop.f32.mrb[0].mxu0
      %v2405 = vadd.f32 %v2212, %v2404
      %v2406 = vpop.f32.mrb[0].mxu0
      %v2407 = vadd.f32 %v2214, %v2406
      %v2408 = vpop.f32.mrb[0].mxu0
      %v2409 = vadd.f32 %v2216, %v2408
      %2410 = vmatprep.mubr.bf16.mxu0 %v593
      %2411 = vmatmul.mubr.bf16.gmra.mrb[0].mxu0 %v592
      %v2412 = vpop.f32.mrb[0].mxu0
      %v2413 = vadd.f32 %v2220, %v2412
      %v2414 = vpop.f32.mrb[0].mxu0
      %v2415 = vadd.f32 %v2222, %v2414
      %v2416 = vpop.f32.mrb[0].mxu0
      %v2417 = vadd.f32 %v2224, %v2416
      %v2418 = vpop.f32.mrb[0].mxu0
      %v2419 = vadd.f32 %v2226, %v2418
      %2420 = vdwg.mxu0
      %2421 = vmatprep.subr.bf16.mxu0 %v1594
      %2422 = vmatpush1.bf16.msra.mxu0 %v1593
      %2423 = vmatprep.subr.bf16.mxu0 0
      %2424 = vmatpush1.bf16.msra.mxu0 0
      %2425 = vmatprep.subr.bf16.mxu0 0
      %2426 = vmatpush1.bf16.msra.mxu0 0
      %2427 = vmatprep.subr.bf16.mxu0 0
      %2428 = vmatpush1.bf16.msra.mxu0 0
      %2429 = vmatprep.subr.bf16.mxu0 0
      %2430 = vmatpush1.bf16.msra.mxu0 0
      %2431 = vmatprep.subr.bf16.mxu0 0
      %2432 = vmatpush1.bf16.msra.mxu0 0
      %2433 = vmatprep.subr.bf16.mxu0 0
      %2434 = vmatpush1.bf16.msra.mxu0 0
      %2435 = vmatprep.subr.bf16.mxu0 0
      %2436 = vmatpush1.bf16.msra.mxu0 0
      %2437 = vmatprep.subr.bf16.mxu0 0
      %2438 = vmatpush1.bf16.msra.mxu0 0
      %2439 = vmatprep.subr.bf16.mxu0 0
      %2440 = vmatpush1.bf16.msra.mxu0 0
      %2441 = vmatprep.subr.bf16.mxu0 0
      %2442 = vmatpush1.bf16.msra.mxu0 0
      %2443 = vmatprep.subr.bf16.mxu0 0
      %2444 = vmatpush1.bf16.msra.mxu0 0
      %2445 = vmatprep.subr.bf16.mxu0 0
      %2446 = vmatpush1.bf16.msra.mxu0 0
      %2447 = vmatprep.subr.bf16.mxu0 0
      %2448 = vmatpush1.bf16.msra.mxu0 0
      %2449 = vmatprep.subr.bf16.mxu0 0
      %2450 = vmatpush1.bf16.msra.mxu0 0
      %2451 = vmatprep.subr.bf16.mxu0 0
      %2452 = vmatpush1.bf16.msra.mxu0 0
      %2453 = vmatprep.mubr.bf16.mxu0 0
      %2454 = vmatmul.mubr.bf16.gmra.mrb[0].mxu0 %v1795
      %v2455 = vpop.f32.mrb[0].mxu0
      %v2456 = vadd.f32 %v2263, %v2455
      %v2457 = vpop.f32.mrb[0].mxu0
      %v2458 = vadd.f32 %v2265, %v2457
      %v2459 = vpop.f32.mrb[0].mxu0
      %v2460 = vadd.f32 %v2267, %v2459
      %v2461 = vpop.f32.mrb[0].mxu0
      %v2462 = vadd.f32 %v2269, %v2461
      %2463 = vmatprep.mubr.bf16.mxu0 0
      %2464 = vmatmul.mubr.bf16.gmra.mrb[0].mxu0 %v1798
      %v2465 = vpop.f32.mrb[0].mxu0
      %v2466 = vadd.f32 %v2273, %v2465
      %v2467 = vpop.f32.mrb[0].mxu0
      %v2468 = vadd.f32 %v2275, %v2467
      %v2469 = vpop.f32.mrb[0].mxu0
      %v2470 = vadd.f32 %v2277, %v2469
      %v2471 = vpop.f32.mrb[0].mxu0
      %v2472 = vadd.f32 %v2279, %v2471
      %2473 = vmatprep.mubr.bf16.mxu0 0
      %2474 = vmatmul.mubr.bf16.gmra.mrb[0].mxu0 %v1801
      %v2475 = vpop.f32.mrb[0].mxu0
      %v2476 = vadd.f32 %v2283, %v2475
      %v2477 = vpop.f32.mrb[0].mxu0
      %v2478 = vadd.f32 %v2285, %v2477
      %v2479 = vpop.f32.mrb[0].mxu0
      %v2480 = vadd.f32 %v2287, %v2479
      %v2481 = vpop.f32.mrb[0].mxu0
      %v2482 = vadd.f32 %v2289, %v2481
      %2483 = vmatprep.mubr.bf16.mxu0 0
      %2484 = vmatmul.mubr.bf16.gmra.mrb[0].mxu0 %v1804
      %v2485 = vpop.f32.mrb[0].mxu0
      %v2486 = vadd.f32 %v2293, %v2485
      %v2487 = vpop.f32.mrb[0].mxu0
      %v2488 = vadd.f32 %v2295, %v2487
      %v2489 = vpop.f32.mrb[0].mxu0
      %v2490 = vadd.f32 %v2297, %v2489
      %v2491 = vpop.f32.mrb[0].mxu0
      %v2492 = vadd.f32 %v2299, %v2491
      %2493 = vmatprep.mubr.bf16.mxu0 0
      %2494 = vmatmul.mubr.bf16.gmra.mrb[0].mxu0 %v1807
      %v2495 = vpop.f32.mrb[0].mxu0
      %v2496 = vadd.f32 %v2303, %v2495
      %v2497 = vpop.f32.mrb[0].mxu0
      %v2498 = vadd.f32 %v2305, %v2497
      %v2499 = vpop.f32.mrb[0].mxu0
      %v2500 = vadd.f32 %v2307, %v2499
      %v2501 = vpop.f32.mrb[0].mxu0
      %v2502 = vadd.f32 %v2309, %v2501
      %2503 = vmatprep.mubr.bf16.mxu0 0
      %2504 = vmatmul.mubr.bf16.gmra.mrb[0].mxu0 %v1810
      %v2505 = vpop.f32.mrb[0].mxu0
      %v2506 = vadd.f32 %v2313, %v2505
      %v2507 = vpop.f32.mrb[0].mxu0
      %v2508 = vadd.f32 %v2315, %v2507
      %v2509 = vpop.f32.mrb[0].mxu0
      %v2510 = vadd.f32 %v2317, %v2509
      %v2511 = vpop.f32.mrb[0].mxu0
      %v2512 = vadd.f32 %v2319, %v2511
      %2513 = vmatprep.mubr.bf16.mxu0 0
      %2514 = vmatmul.mubr.bf16.gmra.mrb[0].mxu0 %v1813
      %v2515 = vpop.f32.mrb[0].mxu0
      %v2516 = vadd.f32 %v2323, %v2515
      %v2517 = vpop.f32.mrb[0].mxu0
      %v2518 = vadd.f32 %v2325, %v2517
      %v2519 = vpop.f32.mrb[0].mxu0
      %v2520 = vadd.f32 %v2327, %v2519
      %v2521 = vpop.f32.mrb[0].mxu0
      %v2522 = vadd.f32 %v2329, %v2521
      %2523 = vmatprep.mubr.bf16.mxu0 0
      %2524 = vmatmul.mubr.bf16.gmra.mrb[0].mxu0 %v1816
      %v2525 = vpop.f32.mrb[0].mxu0
      %v2526 = vadd.f32 %v2333, %v2525
      %v2527 = vpop.f32.mrb[0].mxu0
      %v2528 = vadd.f32 %v2335, %v2527
      %v2529 = vpop.f32.mrb[0].mxu0
      %v2530 = vadd.f32 %v2337, %v2529
      %v2531 = vpop.f32.mrb[0].mxu0
      %v2532 = vadd.f32 %v2339, %v2531
      %2533 = vmatprep.mubr.bf16.mxu0 0
      %2534 = vmatmul.mubr.bf16.gmra.mrb[0].mxu0 %v1819
      %v2535 = vpop.f32.mrb[0].mxu0
      %v2536 = vadd.f32 %v2343, %v2535
      %v2537 = vpop.f32.mrb[0].mxu0
      %v2538 = vadd.f32 %v2345, %v2537
      %v2539 = vpop.f32.mrb[0].mxu0
      %v2540 = vadd.f32 %v2347, %v2539
      %v2541 = vpop.f32.mrb[0].mxu0
      %v2542 = vadd.f32 %v2349, %v2541
      %2543 = vmatprep.mubr.bf16.mxu0 0
      %2544 = vmatmul.mubr.bf16.gmra.mrb[0].mxu0 %v1822
      %v2545 = vpop.f32.mrb[0].mxu0
      %v2546 = vadd.f32 %v2353, %v2545
      %v2547 = vpop.f32.mrb[0].mxu0
      %v2548 = vadd.f32 %v2355, %v2547
      %v2549 = vpop.f32.mrb[0].mxu0
      %v2550 = vadd.f32 %v2357, %v2549
      %v2551 = vpop.f32.mrb[0].mxu0
      %v2552 = vadd.f32 %v2359, %v2551
      %2553 = vmatprep.mubr.bf16.mxu0 0
      %2554 = vmatmul.mubr.bf16.gmra.mrb[0].mxu0 %v1825
      %v2555 = vpop.f32.mrb[0].mxu0
      %v2556 = vadd.f32 %v2363, %v2555
      %v2557 = vpop.f32.mrb[0].mxu0
      %v2558 = vadd.f32 %v2365, %v2557
      %v2559 = vpop.f32.mrb[0].mxu0
      %v2560 = vadd.f32 %v2367, %v2559
      %v2561 = vpop.f32.mrb[0].mxu0
      %v2562 = vadd.f32 %v2369, %v2561
      %2563 = vmatprep.mubr.bf16.mxu0 0
      %2564 = vmatmul.mubr.bf16.gmra.mrb[0].mxu0 %v1828
      %v2565 = vpop.f32.mrb[0].mxu0
      %v2566 = vadd.f32 %v2373, %v2565
      %v2567 = vpop.f32.mrb[0].mxu0
      %v2568 = vadd.f32 %v2375, %v2567
      %v2569 = vpop.f32.mrb[0].mxu0
      %v2570 = vadd.f32 %v2377, %v2569
      %v2571 = vpop.f32.mrb[0].mxu0
      %v2572 = vadd.f32 %v2379, %v2571
      %2573 = vmatprep.mubr.bf16.mxu0 0
      %2574 = vmatmul.mubr.bf16.gmra.mrb[0].mxu0 %v1831
      %v2575 = vpop.f32.mrb[0].mxu0
      %v2576 = vadd.f32 %v2383, %v2575
      %v2577 = vpop.f32.mrb[0].mxu0
      %v2578 = vadd.f32 %v2385, %v2577
      %v2579 = vpop.f32.mrb[0].mxu0
      %v2580 = vadd.f32 %v2387, %v2579
      %v2581 = vpop.f32.mrb[0].mxu0
      %v2582 = vadd.f32 %v2389, %v2581
      %2583 = vmatprep.mubr.bf16.mxu0 0
      %2584 = vmatmul.mubr.bf16.gmra.mrb[0].mxu0 %v1834
      %v2585 = vpop.f32.mrb[0].mxu0
      %v2586 = vadd.f32 %v2393, %v2585
      %v2587 = vpop.f32.mrb[0].mxu0
      %v2588 = vadd.f32 %v2395, %v2587
      %v2589 = vpop.f32.mrb[0].mxu0
      %v2590 = vadd.f32 %v2397, %v2589
      %v2591 = vpop.f32.mrb[0].mxu0
      %v2592 = vadd.f32 %v2399, %v2591
      %2593 = vmatprep.mubr.bf16.mxu0 0
      %2594 = vmatmul.mubr.bf16.gmra.mrb[0].mxu0 %v1837
      %v2595 = vpop.f32.mrb[0].mxu0
      %v2596 = vadd.f32 %v2403, %v2595
      %v2597 = vpop.f32.mrb[0].mxu0
      %v2598 = vadd.f32 %v2405, %v2597
      %v2599 = vpop.f32.mrb[0].mxu0
      %v2600 = vadd.f32 %v2407, %v2599
      %v2601 = vpop.f32.mrb[0].mxu0
      %v2602 = vadd.f32 %v2409, %v2601
      %2603 = vmatprep.mubr.bf16.mxu0 0
      %2604 = vmatmul.mubr.bf16.gmra.mrb[0].mxu0 %v1840
      %v2605 = vpop.f32.mrb[0].mxu0
      %v2606 = vadd.f32 %v2413, %v2605
      %v2607 = vpop.f32.mrb[0].mxu0
      %v2608 = vadd.f32 %v2415, %v2607
      %v2609 = vpop.f32.mrb[0].mxu0
      %v2610 = vadd.f32 %v2417, %v2609
      %v2611 = vpop.f32.mrb[0].mxu0
      %v2612 = vadd.f32 %v2419, %v2611
      %2613 = vdwg.mxu0
      %2614 = vmatprep.subr.bf16.mxu0 %v1404
      %2615 = vmatpush1.bf16.msra.mxu0 %v1403
      %2616 = vmatprep.subr.bf16.mxu0 %v1408
      %2617 = vmatpush1.bf16.msra.mxu0 %v1407
      %2618 = vmatprep.subr.bf16.mxu0 %v1412
      %2619 = vmatpush1.bf16.msra.mxu0 %v1411
      %2620 = vmatprep.subr.bf16.mxu0 %v1416
      %2621 = vmatpush1.bf16.msra.mxu0 %v1415
      %2622 = vmatprep.subr.bf16.mxu0 %v1420
      %2623 = vmatpush1.bf16.msra.mxu0 %v1419
      %2624 = vmatprep.subr.bf16.mxu0 %v1424
      %2625 = vmatpush1.bf16.msra.mxu0 %v1423
      %2626 = vmatprep.subr.bf16.mxu0 %v1428
      %2627 = vmatpush1.bf16.msra.mxu0 %v1427
      %2628 = vmatprep.subr.bf16.mxu0 %v1432
      %2629 = vmatpush1.bf16.msra.mxu0 %v1431
      %2630 = vmatprep.subr.bf16.mxu0 %v1436
      %2631 = vmatpush1.bf16.msra.mxu0 %v1435
      %2632 = vmatprep.subr.bf16.mxu0 %v1440
      %2633 = vmatpush1.bf16.msra.mxu0 %v1439
      %2634 = vmatprep.subr.bf16.mxu0 %v1444
      %2635 = vmatpush1.bf16.msra.mxu0 %v1443
      %2636 = vmatprep.subr.bf16.mxu0 %v1448
      %2637 = vmatpush1.bf16.msra.mxu0 %v1447
      %2638 = vmatprep.subr.bf16.mxu0 %v1452
      %2639 = vmatpush1.bf16.msra.mxu0 %v1451
      %2640 = vmatprep.subr.bf16.mxu0 %v1456
      %2641 = vmatpush1.bf16.msra.mxu0 %v1455
      %2642 = vmatprep.subr.bf16.mxu0 %v1460
      %2643 = vmatpush1.bf16.msra.mxu0 %v1459
      %2644 = vmatprep.subr.bf16.mxu0 %v1464
      %2645 = vmatpush1.bf16.msra.mxu0 %v1463
      %2646 = vmatprep.mubr.bf16.mxu0 %v484
      %2647 = vmatmul.mubr.bf16.gmra.mrb[0].mxu0 %v483
      %v2648 = vpop.f32.mrb[0].mxu0
      %v2649 = vadd.f32 %v804, %v2648
      %v2650 = vpop.f32.mrb[0].mxu0
      %v2651 = vadd.f32 %v808, %v2650
      %v2652 = vpop.f32.mrb[0].mxu0
      %v2653 = vadd.f32 %v804, %v2652
      %v2654 = vpop.f32.mrb[0].mxu0
      %v2655 = vadd.f32 %v808, %v2654
      %2656 = vmatprep.mubr.bf16.mxu0 %v491
      %2657 = vmatmul.mubr.bf16.gmra.mrb[0].mxu0 %v490
      %v2658 = vpop.f32.mrb[0].mxu0
      %v2659 = vadd.f32 %v804, %v2658
      %v2660 = vpop.f32.mrb[0].mxu0
      %v2661 = vadd.f32 %v808, %v2660
      %v2662 = vpop.f32.mrb[0].mxu0
      %v2663 = vadd.f32 %v804, %v2662
      %v2664 = vpop.f32.mrb[0].mxu0
      %v2665 = vadd.f32 %v808, %v2664
      %2666 = vmatprep.mubr.bf16.mxu0 %v498
      %2667 = vmatmul.mubr.bf16.gmra.mrb[0].mxu0 %v497
      %v2668 = vpop.f32.mrb[0].mxu0
      %v2669 = vadd.f32 %v804, %v2668
      %v2670 = vpop.f32.mrb[0].mxu0
      %v2671 = vadd.f32 %v808, %v2670
      %v2672 = vpop.f32.mrb[0].mxu0
      %v2673 = vadd.f32 %v804, %v2672
      %v2674 = vpop.f32.mrb[0].mxu0
      %v2675 = vadd.f32 %v808, %v2674
      %2676 = vmatprep.mubr.bf16.mxu0 %v505
      %2677 = vmatmul.mubr.bf16.gmra.mrb[0].mxu0 %v504
      %v2678 = vpop.f32.mrb[0].mxu0
      %v2679 = vadd.f32 %v804, %v2678
      %v2680 = vpop.f32.mrb[0].mxu0
      %v2681 = vadd.f32 %v808, %v2680
      %v2682 = vpop.f32.mrb[0].mxu0
      %v2683 = vadd.f32 %v804, %v2682
      %v2684 = vpop.f32.mrb[0].mxu0
      %v2685 = vadd.f32 %v808, %v2684
      %2686 = vmatprep.mubr.bf16.mxu0 %v512
      %2687 = vmatmul.mubr.bf16.gmra.mrb[0].mxu0 %v511
      %v2688 = vpop.f32.mrb[0].mxu0
      %v2689 = vadd.f32 %v804, %v2688
      %v2690 = vpop.f32.mrb[0].mxu0
      %v2691 = vadd.f32 %v808, %v2690
      %v2692 = vpop.f32.mrb[0].mxu0
      %v2693 = vadd.f32 %v804, %v2692
      %v2694 = vpop.f32.mrb[0].mxu0
      %v2695 = vadd.f32 %v808, %v2694
      %2696 = vmatprep.mubr.bf16.mxu0 %v519
      %2697 = vmatmul.mubr.bf16.gmra.mrb[0].mxu0 %v518
      %v2698 = vpop.f32.mrb[0].mxu0
      %v2699 = vadd.f32 %v804, %v2698
      %v2700 = vpop.f32.mrb[0].mxu0
      %v2701 = vadd.f32 %v808, %v2700
      %v2702 = vpop.f32.mrb[0].mxu0
      %v2703 = vadd.f32 %v804, %v2702
      %v2704 = vpop.f32.mrb[0].mxu0
      %v2705 = vadd.f32 %v808, %v2704
      %2706 = vmatprep.mubr.bf16.mxu0 %v526
      %2707 = vmatmul.mubr.bf16.gmra.mrb[0].mxu0 %v525
      %v2708 = vpop.f32.mrb[0].mxu0
      %v2709 = vadd.f32 %v804, %v2708
      %v2710 = vpop.f32.mrb[0].mxu0
      %v2711 = vadd.f32 %v808, %v2710
      %v2712 = vpop.f32.mrb[0].mxu0
      %v2713 = vadd.f32 %v804, %v2712
      %v2714 = vpop.f32.mrb[0].mxu0
      %v2715 = vadd.f32 %v808, %v2714
      %2716 = vmatprep.mubr.bf16.mxu0 %v533
      %2717 = vmatmul.mubr.bf16.gmra.mrb[0].mxu0 %v532
      %v2718 = vpop.f32.mrb[0].mxu0
      %v2719 = vadd.f32 %v804, %v2718
      %v2720 = vpop.f32.mrb[0].mxu0
      %v2721 = vadd.f32 %v808, %v2720
      %v2722 = vpop.f32.mrb[0].mxu0
      %v2723 = vadd.f32 %v804, %v2722
      %v2724 = vpop.f32.mrb[0].mxu0
      %v2725 = vadd.f32 %v808, %v2724
      %2726 = vmatprep.mubr.bf16.mxu0 %v540
      %2727 = vmatmul.mubr.bf16.gmra.mrb[0].mxu0 %v539
      %v2728 = vpop.f32.mrb[0].mxu0
      %v2729 = vadd.f32 %v804, %v2728
      %v2730 = vpop.f32.mrb[0].mxu0
      %v2731 = vadd.f32 %v808, %v2730
      %v2732 = vpop.f32.mrb[0].mxu0
      %v2733 = vadd.f32 %v804, %v2732
      %v2734 = vpop.f32.mrb[0].mxu0
      %v2735 = vadd.f32 %v808, %v2734
      %2736 = vmatprep.mubr.bf16.mxu0 %v547
      %2737 = vmatmul.mubr.bf16.gmra.mrb[0].mxu0 %v546
      %v2738 = vpop.f32.mrb[0].mxu0
      %v2739 = vadd.f32 %v804, %v2738
      %v2740 = vpop.f32.mrb[0].mxu0
      %v2741 = vadd.f32 %v808, %v2740
      %v2742 = vpop.f32.mrb[0].mxu0
      %v2743 = vadd.f32 %v804, %v2742
      %v2744 = vpop.f32.mrb[0].mxu0
      %v2745 = vadd.f32 %v808, %v2744
      %2746 = vmatprep.mubr.bf16.mxu0 %v554
      %2747 = vmatmul.mubr.bf16.gmra.mrb[0].mxu0 %v553
      %v2748 = vpop.f32.mrb[0].mxu0
      %v2749 = vadd.f32 %v804, %v2748
      %v2750 = vpop.f32.mrb[0].mxu0
      %v2751 = vadd.f32 %v808, %v2750
      %v2752 = vpop.f32.mrb[0].mxu0
      %v2753 = vadd.f32 %v804, %v2752
      %v2754 = vpop.f32.mrb[0].mxu0
      %v2755 = vadd.f32 %v808, %v2754
      %2756 = vmatprep.mubr.bf16.mxu0 %v561
      %2757 = vmatmul.mubr.bf16.gmra.mrb[0].mxu0 %v560
      %v2758 = vpop.f32.mrb[0].mxu0
      %v2759 = vadd.f32 %v804, %v2758
      %v2760 = vpop.f32.mrb[0].mxu0
      %v2761 = vadd.f32 %v808, %v2760
      %v2762 = vpop.f32.mrb[0].mxu0
      %v2763 = vadd.f32 %v804, %v2762
      %v2764 = vpop.f32.mrb[0].mxu0
      %v2765 = vadd.f32 %v808, %v2764
      %2766 = vmatprep.mubr.bf16.mxu0 %v568
      %2767 = vmatmul.mubr.bf16.gmra.mrb[0].mxu0 %v567
      %v2768 = vpop.f32.mrb[0].mxu0
      %v2769 = vadd.f32 %v804, %v2768
      %v2770 = vpop.f32.mrb[0].mxu0
      %v2771 = vadd.f32 %v808, %v2770
      %v2772 = vpop.f32.mrb[0].mxu0
      %v2773 = vadd.f32 %v804, %v2772
      %v2774 = vpop.f32.mrb[0].mxu0
      %v2775 = vadd.f32 %v808, %v2774
      %2776 = vmatprep.mubr.bf16.mxu0 %v575
      %2777 = vmatmul.mubr.bf16.gmra.mrb[0].mxu0 %v574
      %v2778 = vpop.f32.mrb[0].mxu0
      %v2779 = vadd.f32 %v804, %v2778
      %v2780 = vpop.f32.mrb[0].mxu0
      %v2781 = vadd.f32 %v808, %v2780
      %v2782 = vpop.f32.mrb[0].mxu0
      %v2783 = vadd.f32 %v804, %v2782
      %v2784 = vpop.f32.mrb[0].mxu0
      %v2785 = vadd.f32 %v808, %v2784
      %2786 = vmatprep.mubr.bf16.mxu0 %v582
      %2787 = vmatmul.mubr.bf16.gmra.mrb[0].mxu0 %v581
      %v2788 = vpop.f32.mrb[0].mxu0
      %v2789 = vadd.f32 %v804, %v2788
      %v2790 = vpop.f32.mrb[0].mxu0
      %v2791 = vadd.f32 %v808, %v2790
      %v2792 = vpop.f32.mrb[0].mxu0
      %v2793 = vadd.f32 %v804, %v2792
      %v2794 = vpop.f32.mrb[0].mxu0
      %v2795 = vadd.f32 %v808, %v2794
      %2796 = vmatprep.mubr.bf16.mxu0 %v589
      %2797 = vmatmul.mubr.bf16.gmra.mrb[0].mxu0 %v588
      %v2798 = vpop.f32.mrb[0].mxu0
      %v2799 = vadd.f32 %v804, %v2798
      %v2800 = vpop.f32.mrb[0].mxu0
      %v2801 = vadd.f32 %v808, %v2800
      %v2802 = vpop.f32.mrb[0].mxu0
      %v2803 = vadd.f32 %v804, %v2802
      %v2804 = vpop.f32.mrb[0].mxu0
      %v2805 = vadd.f32 %v808, %v2804
      %2806 = vdwg.mxu0
      %2807 = vmatprep.subr.bf16.mxu0 %v1468
      %2808 = vmatpush1.bf16.msra.mxu0 %v1467
      %2809 = vmatprep.subr.bf16.mxu0 %v1472
      %2810 = vmatpush1.bf16.msra.mxu0 %v1471
      %2811 = vmatprep.subr.bf16.mxu0 %v1476
      %2812 = vmatpush1.bf16.msra.mxu0 %v1475
      %2813 = vmatprep.subr.bf16.mxu0 %v1480
      %2814 = vmatpush1.bf16.msra.mxu0 %v1479
      %2815 = vmatprep.subr.bf16.mxu0 %v1484
      %2816 = vmatpush1.bf16.msra.mxu0 %v1483
      %2817 = vmatprep.subr.bf16.mxu0 %v1488
      %2818 = vmatpush1.bf16.msra.mxu0 %v1487
      %2819 = vmatprep.subr.bf16.mxu0 %v1492
      %2820 = vmatpush1.bf16.msra.mxu0 %v1491
      %2821 = vmatprep.subr.bf16.mxu0 %v1496
      %2822 = vmatpush1.bf16.msra.mxu0 %v1495
      %2823 = vmatprep.subr.bf16.mxu0 %v1500
      %2824 = vmatpush1.bf16.msra.mxu0 %v1499
      %2825 = vmatprep.subr.bf16.mxu0 %v1504
      %2826 = vmatpush1.bf16.msra.mxu0 %v1503
      %2827 = vmatprep.subr.bf16.mxu0 %v1508
      %2828 = vmatpush1.bf16.msra.mxu0 %v1507
      %2829 = vmatprep.subr.bf16.mxu0 %v1512
      %2830 = vmatpush1.bf16.msra.mxu0 %v1511
      %2831 = vmatprep.subr.bf16.mxu0 %v1516
      %2832 = vmatpush1.bf16.msra.mxu0 %v1515
      %2833 = vmatprep.subr.bf16.mxu0 %v1520
      %2834 = vmatpush1.bf16.msra.mxu0 %v1519
      %2835 = vmatprep.subr.bf16.mxu0 %v1524
      %2836 = vmatpush1.bf16.msra.mxu0 %v1523
      %2837 = vmatprep.subr.bf16.mxu0 %v1528
      %2838 = vmatpush1.bf16.msra.mxu0 %v1527
      %2839 = vmatprep.mubr.bf16.mxu0 %v486
      %2840 = vmatmul.mubr.bf16.gmra.mrb[0].mxu0 %v485
      %v2841 = vpop.f32.mrb[0].mxu0
      %v2842 = vadd.f32 %v2649, %v2841
      %v2843 = vpop.f32.mrb[0].mxu0
      %v2844 = vadd.f32 %v2651, %v2843
      %v2845 = vpop.f32.mrb[0].mxu0
      %v2846 = vadd.f32 %v2653, %v2845
      %v2847 = vpop.f32.mrb[0].mxu0
      %v2848 = vadd.f32 %v2655, %v2847
      %2849 = vmatprep.mubr.bf16.mxu0 %v493
      %2850 = vmatmul.mubr.bf16.gmra.mrb[0].mxu0 %v492
      %v2851 = vpop.f32.mrb[0].mxu0
      %v2852 = vadd.f32 %v2659, %v2851
      %v2853 = vpop.f32.mrb[0].mxu0
      %v2854 = vadd.f32 %v2661, %v2853
      %v2855 = vpop.f32.mrb[0].mxu0
      %v2856 = vadd.f32 %v2663, %v2855
      %v2857 = vpop.f32.mrb[0].mxu0
      %v2858 = vadd.f32 %v2665, %v2857
      %2859 = vmatprep.mubr.bf16.mxu0 %v500
      %2860 = vmatmul.mubr.bf16.gmra.mrb[0].mxu0 %v499
      %v2861 = vpop.f32.mrb[0].mxu0
      %v2862 = vadd.f32 %v2669, %v2861
      %v2863 = vpop.f32.mrb[0].mxu0
      %v2864 = vadd.f32 %v2671, %v2863
      %v2865 = vpop.f32.mrb[0].mxu0
      %v2866 = vadd.f32 %v2673, %v2865
      %v2867 = vpop.f32.mrb[0].mxu0
      %v2868 = vadd.f32 %v2675, %v2867
      %2869 = vmatprep.mubr.bf16.mxu0 %v507
      %2870 = vmatmul.mubr.bf16.gmra.mrb[0].mxu0 %v506
      %v2871 = vpop.f32.mrb[0].mxu0
      %v2872 = vadd.f32 %v2679, %v2871
      %v2873 = vpop.f32.mrb[0].mxu0
      %v2874 = vadd.f32 %v2681, %v2873
      %v2875 = vpop.f32.mrb[0].mxu0
      %v2876 = vadd.f32 %v2683, %v2875
      %v2877 = vpop.f32.mrb[0].mxu0
      %v2878 = vadd.f32 %v2685, %v2877
      %2879 = vmatprep.mubr.bf16.mxu0 %v514
      %2880 = vmatmul.mubr.bf16.gmra.mrb[0].mxu0 %v513
      %v2881 = vpop.f32.mrb[0].mxu0
      %v2882 = vadd.f32 %v2689, %v2881
      %v2883 = vpop.f32.mrb[0].mxu0
      %v2884 = vadd.f32 %v2691, %v2883
      %v2885 = vpop.f32.mrb[0].mxu0
      %v2886 = vadd.f32 %v2693, %v2885
      %v2887 = vpop.f32.mrb[0].mxu0
      %v2888 = vadd.f32 %v2695, %v2887
      %2889 = vmatprep.mubr.bf16.mxu0 %v521
      %2890 = vmatmul.mubr.bf16.gmra.mrb[0].mxu0 %v520
      %v2891 = vpop.f32.mrb[0].mxu0
      %v2892 = vadd.f32 %v2699, %v2891
      %v2893 = vpop.f32.mrb[0].mxu0
      %v2894 = vadd.f32 %v2701, %v2893
      %v2895 = vpop.f32.mrb[0].mxu0
      %v2896 = vadd.f32 %v2703, %v2895
      %v2897 = vpop.f32.mrb[0].mxu0
      %v2898 = vadd.f32 %v2705, %v2897
      %2899 = vmatprep.mubr.bf16.mxu0 %v528
      %2900 = vmatmul.mubr.bf16.gmra.mrb[0].mxu0 %v527
      %v2901 = vpop.f32.mrb[0].mxu0
      %v2902 = vadd.f32 %v2709, %v2901
      %v2903 = vpop.f32.mrb[0].mxu0
      %v2904 = vadd.f32 %v2711, %v2903
      %v2905 = vpop.f32.mrb[0].mxu0
      %v2906 = vadd.f32 %v2713, %v2905
      %v2907 = vpop.f32.mrb[0].mxu0
      %v2908 = vadd.f32 %v2715, %v2907
      %2909 = vmatprep.mubr.bf16.mxu0 %v535
      %2910 = vmatmul.mubr.bf16.gmra.mrb[0].mxu0 %v534
      %v2911 = vpop.f32.mrb[0].mxu0
      %v2912 = vadd.f32 %v2719, %v2911
      %v2913 = vpop.f32.mrb[0].mxu0
      %v2914 = vadd.f32 %v2721, %v2913
      %v2915 = vpop.f32.mrb[0].mxu0
      %v2916 = vadd.f32 %v2723, %v2915
      %v2917 = vpop.f32.mrb[0].mxu0
      %v2918 = vadd.f32 %v2725, %v2917
      %2919 = vmatprep.mubr.bf16.mxu0 %v542
      %2920 = vmatmul.mubr.bf16.gmra.mrb[0].mxu0 %v541
      %v2921 = vpop.f32.mrb[0].mxu0
      %v2922 = vadd.f32 %v2729, %v2921
      %v2923 = vpop.f32.mrb[0].mxu0
      %v2924 = vadd.f32 %v2731, %v2923
      %v2925 = vpop.f32.mrb[0].mxu0
      %v2926 = vadd.f32 %v2733, %v2925
      %v2927 = vpop.f32.mrb[0].mxu0
      %v2928 = vadd.f32 %v2735, %v2927
      %2929 = vmatprep.mubr.bf16.mxu0 %v549
      %2930 = vmatmul.mubr.bf16.gmra.mrb[0].mxu0 %v548
      %v2931 = vpop.f32.mrb[0].mxu0
      %v2932 = vadd.f32 %v2739, %v2931
      %v2933 = vpop.f32.mrb[0].mxu0
      %v2934 = vadd.f32 %v2741, %v2933
      %v2935 = vpop.f32.mrb[0].mxu0
      %v2936 = vadd.f32 %v2743, %v2935
      %v2937 = vpop.f32.mrb[0].mxu0
      %v2938 = vadd.f32 %v2745, %v2937
      %2939 = vmatprep.mubr.bf16.mxu0 %v556
      %2940 = vmatmul.mubr.bf16.gmra.mrb[0].mxu0 %v555
      %v2941 = vpop.f32.mrb[0].mxu0
      %v2942 = vadd.f32 %v2749, %v2941
      %v2943 = vpop.f32.mrb[0].mxu0
      %v2944 = vadd.f32 %v2751, %v2943
      %v2945 = vpop.f32.mrb[0].mxu0
      %v2946 = vadd.f32 %v2753, %v2945
      %v2947 = vpop.f32.mrb[0].mxu0
      %v2948 = vadd.f32 %v2755, %v2947
      %2949 = vmatprep.mubr.bf16.mxu0 %v563
      %2950 = vmatmul.mubr.bf16.gmra.mrb[0].mxu0 %v562
      %v2951 = vpop.f32.mrb[0].mxu0
      %v2952 = vadd.f32 %v2759, %v2951
      %v2953 = vpop.f32.mrb[0].mxu0
      %v2954 = vadd.f32 %v2761, %v2953
      %v2955 = vpop.f32.mrb[0].mxu0
      %v2956 = vadd.f32 %v2763, %v2955
      %v2957 = vpop.f32.mrb[0].mxu0
      %v2958 = vadd.f32 %v2765, %v2957
      %2959 = vmatprep.mubr.bf16.mxu0 %v570
      %2960 = vmatmul.mubr.bf16.gmra.mrb[0].mxu0 %v569
      %v2961 = vpop.f32.mrb[0].mxu0
      %v2962 = vadd.f32 %v2769, %v2961
      %v2963 = vpop.f32.mrb[0].mxu0
      %v2964 = vadd.f32 %v2771, %v2963
      %v2965 = vpop.f32.mrb[0].mxu0
      %v2966 = vadd.f32 %v2773, %v2965
      %v2967 = vpop.f32.mrb[0].mxu0
      %v2968 = vadd.f32 %v2775, %v2967
      %2969 = vmatprep.mubr.bf16.mxu0 %v577
      %2970 = vmatmul.mubr.bf16.gmra.mrb[0].mxu0 %v576
      %v2971 = vpop.f32.mrb[0].mxu0
      %v2972 = vadd.f32 %v2779, %v2971
      %v2973 = vpop.f32.mrb[0].mxu0
      %v2974 = vadd.f32 %v2781, %v2973
      %v2975 = vpop.f32.mrb[0].mxu0
      %v2976 = vadd.f32 %v2783, %v2975
      %v2977 = vpop.f32.mrb[0].mxu0
      %v2978 = vadd.f32 %v2785, %v2977
      %2979 = vmatprep.mubr.bf16.mxu0 %v584
      %2980 = vmatmul.mubr.bf16.gmra.mrb[0].mxu0 %v583
      %v2981 = vpop.f32.mrb[0].mxu0
      %v2982 = vadd.f32 %v2789, %v2981
      %v2983 = vpop.f32.mrb[0].mxu0
      %v2984 = vadd.f32 %v2791, %v2983
      %v2985 = vpop.f32.mrb[0].mxu0
      %v2986 = vadd.f32 %v2793, %v2985
      %v2987 = vpop.f32.mrb[0].mxu0
      %v2988 = vadd.f32 %v2795, %v2987
      %2989 = vmatprep.mubr.bf16.mxu0 %v591
      %2990 = vmatmul.mubr.bf16.gmra.mrb[0].mxu0 %v590
      %v2991 = vpop.f32.mrb[0].mxu0
      %v2992 = vadd.f32 %v2799, %v2991
      %v2993 = vpop.f32.mrb[0].mxu0
      %v2994 = vadd.f32 %v2801, %v2993
      %v2995 = vpop.f32.mrb[0].mxu0
      %v2996 = vadd.f32 %v2803, %v2995
      %v2997 = vpop.f32.mrb[0].mxu0
      %v2998 = vadd.f32 %v2805, %v2997
      %2999 = vdwg.mxu0
      %3000 = vmatprep.subr.bf16.mxu0 %v1532
      %3001 = vmatpush1.bf16.msra.mxu0 %v1531
      %3002 = vmatprep.subr.bf16.mxu0 %v1536
      %3003 = vmatpush1.bf16.msra.mxu0 %v1535
      %3004 = vmatprep.subr.bf16.mxu0 %v1540
      %3005 = vmatpush1.bf16.msra.mxu0 %v1539
      %3006 = vmatprep.subr.bf16.mxu0 %v1544
      %3007 = vmatpush1.bf16.msra.mxu0 %v1543
      %3008 = vmatprep.subr.bf16.mxu0 %v1548
      %3009 = vmatpush1.bf16.msra.mxu0 %v1547
      %3010 = vmatprep.subr.bf16.mxu0 %v1552
      %3011 = vmatpush1.bf16.msra.mxu0 %v1551
      %3012 = vmatprep.subr.bf16.mxu0 %v1556
      %3013 = vmatpush1.bf16.msra.mxu0 %v1555
      %3014 = vmatprep.subr.bf16.mxu0 %v1560
      %3015 = vmatpush1.bf16.msra.mxu0 %v1559
      %3016 = vmatprep.subr.bf16.mxu0 %v1564
      %3017 = vmatpush1.bf16.msra.mxu0 %v1563
      %3018 = vmatprep.subr.bf16.mxu0 %v1568
      %3019 = vmatpush1.bf16.msra.mxu0 %v1567
      %3020 = vmatprep.subr.bf16.mxu0 %v1572
      %3021 = vmatpush1.bf16.msra.mxu0 %v1571
      %3022 = vmatprep.subr.bf16.mxu0 %v1576
      %3023 = vmatpush1.bf16.msra.mxu0 %v1575
      %3024 = vmatprep.subr.bf16.mxu0 %v1580
      %3025 = vmatpush1.bf16.msra.mxu0 %v1579
      %3026 = vmatprep.subr.bf16.mxu0 %v1584
      %3027 = vmatpush1.bf16.msra.mxu0 %v1583
      %3028 = vmatprep.subr.bf16.mxu0 %v1588
      %3029 = vmatpush1.bf16.msra.mxu0 %v1587
      %3030 = vmatprep.subr.bf16.mxu0 %v1592
      %3031 = vmatpush1.bf16.msra.mxu0 %v1591
      %3032 = vmatprep.mubr.bf16.mxu0 %v488
      %3033 = vmatmul.mubr.bf16.gmra.mrb[0].mxu0 %v487
      %v3034 = vpop.f32.mrb[0].mxu0
      %v3035 = vadd.f32 %v2842, %v3034
      %v3036 = vpop.f32.mrb[0].mxu0
      %v3037 = vadd.f32 %v2844, %v3036
      %v3038 = vpop.f32.mrb[0].mxu0
      %v3039 = vadd.f32 %v2846, %v3038
      %v3040 = vpop.f32.mrb[0].mxu0
      %v3041 = vadd.f32 %v2848, %v3040
      %3042 = vmatprep.mubr.bf16.mxu0 %v495
      %3043 = vmatmul.mubr.bf16.gmra.mrb[0].mxu0 %v494
      %v3044 = vpop.f32.mrb[0].mxu0
      %v3045 = vadd.f32 %v2852, %v3044
      %v3046 = vpop.f32.mrb[0].mxu0
      %v3047 = vadd.f32 %v2854, %v3046
      %v3048 = vpop.f32.mrb[0].mxu0
      %v3049 = vadd.f32 %v2856, %v3048
      %v3050 = vpop.f32.mrb[0].mxu0
      %v3051 = vadd.f32 %v2858, %v3050
      %3052 = vmatprep.mubr.bf16.mxu0 %v502
      %3053 = vmatmul.mubr.bf16.gmra.mrb[0].mxu0 %v501
      %v3054 = vpop.f32.mrb[0].mxu0
      %v3055 = vadd.f32 %v2862, %v3054
      %v3056 = vpop.f32.mrb[0].mxu0
      %v3057 = vadd.f32 %v2864, %v3056
      %v3058 = vpop.f32.mrb[0].mxu0
      %v3059 = vadd.f32 %v2866, %v3058
      %v3060 = vpop.f32.mrb[0].mxu0
      %v3061 = vadd.f32 %v2868, %v3060
      %3062 = vmatprep.mubr.bf16.mxu0 %v509
      %3063 = vmatmul.mubr.bf16.gmra.mrb[0].mxu0 %v508
      %v3064 = vpop.f32.mrb[0].mxu0
      %v3065 = vadd.f32 %v2872, %v3064
      %v3066 = vpop.f32.mrb[0].mxu0
      %v3067 = vadd.f32 %v2874, %v3066
      %v3068 = vpop.f32.mrb[0].mxu0
      %v3069 = vadd.f32 %v2876, %v3068
      %v3070 = vpop.f32.mrb[0].mxu0
      %v3071 = vadd.f32 %v2878, %v3070
      %3072 = vmatprep.mubr.bf16.mxu0 %v516
      %3073 = vmatmul.mubr.bf16.gmra.mrb[0].mxu0 %v515
      %v3074 = vpop.f32.mrb[0].mxu0
      %v3075 = vadd.f32 %v2882, %v3074
      %v3076 = vpop.f32.mrb[0].mxu0
      %v3077 = vadd.f32 %v2884, %v3076
      %v3078 = vpop.f32.mrb[0].mxu0
      %v3079 = vadd.f32 %v2886, %v3078
      %v3080 = vpop.f32.mrb[0].mxu0
      %v3081 = vadd.f32 %v2888, %v3080
      %3082 = vmatprep.mubr.bf16.mxu0 %v523
      %3083 = vmatmul.mubr.bf16.gmra.mrb[0].mxu0 %v522
      %v3084 = vpop.f32.mrb[0].mxu0
      %v3085 = vadd.f32 %v2892, %v3084
      %v3086 = vpop.f32.mrb[0].mxu0
      %v3087 = vadd.f32 %v2894, %v3086
      %v3088 = vpop.f32.mrb[0].mxu0
      %v3089 = vadd.f32 %v2896, %v3088
      %v3090 = vpop.f32.mrb[0].mxu0
      %v3091 = vadd.f32 %v2898, %v3090
      %3092 = vmatprep.mubr.bf16.mxu0 %v530
      %3093 = vmatmul.mubr.bf16.gmra.mrb[0].mxu0 %v529
      %v3094 = vpop.f32.mrb[0].mxu0
      %v3095 = vadd.f32 %v2902, %v3094
      %v3096 = vpop.f32.mrb[0].mxu0
      %v3097 = vadd.f32 %v2904, %v3096
      %v3098 = vpop.f32.mrb[0].mxu0
      %v3099 = vadd.f32 %v2906, %v3098
      %v3100 = vpop.f32.mrb[0].mxu0
      %v3101 = vadd.f32 %v2908, %v3100
      %3102 = vmatprep.mubr.bf16.mxu0 %v537
      %3103 = vmatmul.mubr.bf16.gmra.mrb[0].mxu0 %v536
      %v3104 = vpop.f32.mrb[0].mxu0
      %v3105 = vadd.f32 %v2912, %v3104
      %v3106 = vpop.f32.mrb[0].mxu0
      %v3107 = vadd.f32 %v2914, %v3106
      %v3108 = vpop.f32.mrb[0].mxu0
      %v3109 = vadd.f32 %v2916, %v3108
      %v3110 = vpop.f32.mrb[0].mxu0
      %v3111 = vadd.f32 %v2918, %v3110
      %3112 = vmatprep.mubr.bf16.mxu0 %v544
      %3113 = vmatmul.mubr.bf16.gmra.mrb[0].mxu0 %v543
      %v3114 = vpop.f32.mrb[0].mxu0
      %v3115 = vadd.f32 %v2922, %v3114
      %v3116 = vpop.f32.mrb[0].mxu0
      %v3117 = vadd.f32 %v2924, %v3116
      %v3118 = vpop.f32.mrb[0].mxu0
      %v3119 = vadd.f32 %v2926, %v3118
      %v3120 = vpop.f32.mrb[0].mxu0
      %v3121 = vadd.f32 %v2928, %v3120
      %3122 = vmatprep.mubr.bf16.mxu0 %v551
      %3123 = vmatmul.mubr.bf16.gmra.mrb[0].mxu0 %v550
      %v3124 = vpop.f32.mrb[0].mxu0
      %v3125 = vadd.f32 %v2932, %v3124
      %v3126 = vpop.f32.mrb[0].mxu0
      %v3127 = vadd.f32 %v2934, %v3126
      %v3128 = vpop.f32.mrb[0].mxu0
      %v3129 = vadd.f32 %v2936, %v3128
      %v3130 = vpop.f32.mrb[0].mxu0
      %v3131 = vadd.f32 %v2938, %v3130
      %3132 = vmatprep.mubr.bf16.mxu0 %v558
      %3133 = vmatmul.mubr.bf16.gmra.mrb[0].mxu0 %v557
      %v3134 = vpop.f32.mrb[0].mxu0
      %v3135 = vadd.f32 %v2942, %v3134
      %v3136 = vpop.f32.mrb[0].mxu0
      %v3137 = vadd.f32 %v2944, %v3136
      %v3138 = vpop.f32.mrb[0].mxu0
      %v3139 = vadd.f32 %v2946, %v3138
      %v3140 = vpop.f32.mrb[0].mxu0
      %v3141 = vadd.f32 %v2948, %v3140
      %3142 = vmatprep.mubr.bf16.mxu0 %v565
      %3143 = vmatmul.mubr.bf16.gmra.mrb[0].mxu0 %v564
      %v3144 = vpop.f32.mrb[0].mxu0
      %v3145 = vadd.f32 %v2952, %v3144
      %v3146 = vpop.f32.mrb[0].mxu0
      %v3147 = vadd.f32 %v2954, %v3146
      %v3148 = vpop.f32.mrb[0].mxu0
      %v3149 = vadd.f32 %v2956, %v3148
      %v3150 = vpop.f32.mrb[0].mxu0
      %v3151 = vadd.f32 %v2958, %v3150
      %3152 = vmatprep.mubr.bf16.mxu0 %v572
      %3153 = vmatmul.mubr.bf16.gmra.mrb[0].mxu0 %v571
      %v3154 = vpop.f32.mrb[0].mxu0
      %v3155 = vadd.f32 %v2962, %v3154
      %v3156 = vpop.f32.mrb[0].mxu0
      %v3157 = vadd.f32 %v2964, %v3156
      %v3158 = vpop.f32.mrb[0].mxu0
      %v3159 = vadd.f32 %v2966, %v3158
      %v3160 = vpop.f32.mrb[0].mxu0
      %v3161 = vadd.f32 %v2968, %v3160
      %3162 = vmatprep.mubr.bf16.mxu0 %v579
      %3163 = vmatmul.mubr.bf16.gmra.mrb[0].mxu0 %v578
      %v3164 = vpop.f32.mrb[0].mxu0
      %v3165 = vadd.f32 %v2972, %v3164
      %v3166 = vpop.f32.mrb[0].mxu0
      %v3167 = vadd.f32 %v2974, %v3166
      %v3168 = vpop.f32.mrb[0].mxu0
      %v3169 = vadd.f32 %v2976, %v3168
      %v3170 = vpop.f32.mrb[0].mxu0
      %v3171 = vadd.f32 %v2978, %v3170
      %3172 = vmatprep.mubr.bf16.mxu0 %v586
      %3173 = vmatmul.mubr.bf16.gmra.mrb[0].mxu0 %v585
      %v3174 = vpop.f32.mrb[0].mxu0
      %v3175 = vadd.f32 %v2982, %v3174
      %v3176 = vpop.f32.mrb[0].mxu0
      %v3177 = vadd.f32 %v2984, %v3176
      %v3178 = vpop.f32.mrb[0].mxu0
      %v3179 = vadd.f32 %v2986, %v3178
      %v3180 = vpop.f32.mrb[0].mxu0
      %v3181 = vadd.f32 %v2988, %v3180
      %3182 = vmatprep.mubr.bf16.mxu0 %v593
      %3183 = vmatmul.mubr.bf16.gmra.mrb[0].mxu0 %v592
      %v3184 = vpop.f32.mrb[0].mxu0
      %v3185 = vadd.f32 %v2992, %v3184
      %v3186 = vpop.f32.mrb[0].mxu0
      %v3187 = vadd.f32 %v2994, %v3186
      %v3188 = vpop.f32.mrb[0].mxu0
      %v3189 = vadd.f32 %v2996, %v3188
      %v3190 = vpop.f32.mrb[0].mxu0
      %v3191 = vadd.f32 %v2998, %v3190
      %3192 = vdwg.mxu0
      %3193 = vmatprep.subr.bf16.mxu0 %v1596
      %3194 = vmatpush1.bf16.msra.mxu0 %v1595
      %3195 = vmatprep.subr.bf16.mxu0 0
      %3196 = vmatpush1.bf16.msra.mxu0 0
      %3197 = vmatprep.subr.bf16.mxu0 0
      %3198 = vmatpush1.bf16.msra.mxu0 0
      %3199 = vmatprep.subr.bf16.mxu0 0
      %3200 = vmatpush1.bf16.msra.mxu0 0
      %3201 = vmatprep.subr.bf16.mxu0 0
      %3202 = vmatpush1.bf16.msra.mxu0 0
      %3203 = vmatprep.subr.bf16.mxu0 0
      %3204 = vmatpush1.bf16.msra.mxu0 0
      %3205 = vmatprep.subr.bf16.mxu0 0
      %3206 = vmatpush1.bf16.msra.mxu0 0
      %3207 = vmatprep.subr.bf16.mxu0 0
      %3208 = vmatpush1.bf16.msra.mxu0 0
      %3209 = vmatprep.subr.bf16.mxu0 0
      %3210 = vmatpush1.bf16.msra.mxu0 0
      %3211 = vmatprep.subr.bf16.mxu0 0
      %3212 = vmatpush1.bf16.msra.mxu0 0
      %3213 = vmatprep.subr.bf16.mxu0 0
      %3214 = vmatpush1.bf16.msra.mxu0 0
      %3215 = vmatprep.subr.bf16.mxu0 0
      %3216 = vmatpush1.bf16.msra.mxu0 0
      %3217 = vmatprep.subr.bf16.mxu0 0
      %3218 = vmatpush1.bf16.msra.mxu0 0
      %3219 = vmatprep.subr.bf16.mxu0 0
      %3220 = vmatpush1.bf16.msra.mxu0 0
      %3221 = vmatprep.subr.bf16.mxu0 0
      %3222 = vmatpush1.bf16.msra.mxu0 0
      %3223 = vmatprep.subr.bf16.mxu0 0
      %3224 = vmatpush1.bf16.msra.mxu0 0
      %3225 = vmatprep.mubr.bf16.mxu0 0
      %3226 = vmatmul.mubr.bf16.gmra.mrb[0].mxu0 %v1795
      %v3227 = vpop.f32.mrb[0].mxu0
      %v3228 = vadd.f32 %v3035, %v3227
      %v3229 = vpop.f32.mrb[0].mxu0
      %v3230 = vadd.f32 %v3037, %v3229
      %v3231 = vpop.f32.mrb[0].mxu0
      %v3232 = vadd.f32 %v3039, %v3231
      %v3233 = vpop.f32.mrb[0].mxu0
      %v3234 = vadd.f32 %v3041, %v3233
      %3235 = vmatprep.mubr.bf16.mxu0 0
      %3236 = vmatmul.mubr.bf16.gmra.mrb[0].mxu0 %v1798
      %v3237 = vpop.f32.mrb[0].mxu0
      %v3238 = vadd.f32 %v3045, %v3237
      %v3239 = vpop.f32.mrb[0].mxu0
      %v3240 = vadd.f32 %v3047, %v3239
      %v3241 = vpop.f32.mrb[0].mxu0
      %v3242 = vadd.f32 %v3049, %v3241
      %v3243 = vpop.f32.mrb[0].mxu0
      %v3244 = vadd.f32 %v3051, %v3243
      %3245 = vmatprep.mubr.bf16.mxu0 0
      %3246 = vmatmul.mubr.bf16.gmra.mrb[0].mxu0 %v1801
      %v3247 = vpop.f32.mrb[0].mxu0
      %v3248 = vadd.f32 %v3055, %v3247
      %v3249 = vpop.f32.mrb[0].mxu0
      %v3250 = vadd.f32 %v3057, %v3249
      %v3251 = vpop.f32.mrb[0].mxu0
      %v3252 = vadd.f32 %v3059, %v3251
      %v3253 = vpop.f32.mrb[0].mxu0
      %v3254 = vadd.f32 %v3061, %v3253
      %3255 = vmatprep.mubr.bf16.mxu0 0
      %3256 = vmatmul.mubr.bf16.gmra.mrb[0].mxu0 %v1804
      %v3257 = vpop.f32.mrb[0].mxu0
      %v3258 = vadd.f32 %v3065, %v3257
      %v3259 = vpop.f32.mrb[0].mxu0
      %v3260 = vadd.f32 %v3067, %v3259
      %v3261 = vpop.f32.mrb[0].mxu0
      %v3262 = vadd.f32 %v3069, %v3261
      %v3263 = vpop.f32.mrb[0].mxu0
      %v3264 = vadd.f32 %v3071, %v3263
      %3265 = vmatprep.mubr.bf16.mxu0 0
      %3266 = vmatmul.mubr.bf16.gmra.mrb[0].mxu0 %v1807
      %v3267 = vpop.f32.mrb[0].mxu0
      %v3268 = vadd.f32 %v3075, %v3267
      %v3269 = vpop.f32.mrb[0].mxu0
      %v3270 = vadd.f32 %v3077, %v3269
      %v3271 = vpop.f32.mrb[0].mxu0
      %v3272 = vadd.f32 %v3079, %v3271
      %v3273 = vpop.f32.mrb[0].mxu0
      %v3274 = vadd.f32 %v3081, %v3273
      %3275 = vmatprep.mubr.bf16.mxu0 0
      %3276 = vmatmul.mubr.bf16.gmra.mrb[0].mxu0 %v1810
      %v3277 = vpop.f32.mrb[0].mxu0
      %v3278 = vadd.f32 %v3085, %v3277
      %v3279 = vpop.f32.mrb[0].mxu0
      %v3280 = vadd.f32 %v3087, %v3279
      %v3281 = vpop.f32.mrb[0].mxu0
      %v3282 = vadd.f32 %v3089, %v3281
      %v3283 = vpop.f32.mrb[0].mxu0
      %v3284 = vadd.f32 %v3091, %v3283
      %3285 = vmatprep.mubr.bf16.mxu0 0
      %3286 = vmatmul.mubr.bf16.gmra.mrb[0].mxu0 %v1813
      %v3287 = vpop.f32.mrb[0].mxu0
      %v3288 = vadd.f32 %v3095, %v3287
      %v3289 = vpop.f32.mrb[0].mxu0
      %v3290 = vadd.f32 %v3097, %v3289
      %v3291 = vpop.f32.mrb[0].mxu0
      %v3292 = vadd.f32 %v3099, %v3291
      %v3293 = vpop.f32.mrb[0].mxu0
      %v3294 = vadd.f32 %v3101, %v3293
      %3295 = vmatprep.mubr.bf16.mxu0 0
      %3296 = vmatmul.mubr.bf16.gmra.mrb[0].mxu0 %v1816
      %v3297 = vpop.f32.mrb[0].mxu0
      %v3298 = vadd.f32 %v3105, %v3297
      %v3299 = vpop.f32.mrb[0].mxu0
      %v3300 = vadd.f32 %v3107, %v3299
      %v3301 = vpop.f32.mrb[0].mxu0
      %v3302 = vadd.f32 %v3109, %v3301
      %v3303 = vpop.f32.mrb[0].mxu0
      %v3304 = vadd.f32 %v3111, %v3303
      %3305 = vmatprep.mubr.bf16.mxu0 0
      %3306 = vmatmul.mubr.bf16.gmra.mrb[0].mxu0 %v1819
      %v3307 = vpop.f32.mrb[0].mxu0
      %v3308 = vadd.f32 %v3115, %v3307
      %v3309 = vpop.f32.mrb[0].mxu0
      %v3310 = vadd.f32 %v3117, %v3309
      %v3311 = vpop.f32.mrb[0].mxu0
      %v3312 = vadd.f32 %v3119, %v3311
      %v3313 = vpop.f32.mrb[0].mxu0
      %v3314 = vadd.f32 %v3121, %v3313
      %3315 = vmatprep.mubr.bf16.mxu0 0
      %3316 = vmatmul.mubr.bf16.gmra.mrb[0].mxu0 %v1822
      %v3317 = vpop.f32.mrb[0].mxu0
      %v3318 = vadd.f32 %v3125, %v3317
      %v3319 = vpop.f32.mrb[0].mxu0
      %v3320 = vadd.f32 %v3127, %v3319
      %v3321 = vpop.f32.mrb[0].mxu0
      %v3322 = vadd.f32 %v3129, %v3321
      %v3323 = vpop.f32.mrb[0].mxu0
      %v3324 = vadd.f32 %v3131, %v3323
      %3325 = vmatprep.mubr.bf16.mxu0 0
      %3326 = vmatmul.mubr.bf16.gmra.mrb[0].mxu0 %v1825
      %v3327 = vpop.f32.mrb[0].mxu0
      %v3328 = vadd.f32 %v3135, %v3327
      %v3329 = vpop.f32.mrb[0].mxu0
      %v3330 = vadd.f32 %v3137, %v3329
      %v3331 = vpop.f32.mrb[0].mxu0
      %v3332 = vadd.f32 %v3139, %v3331
      %v3333 = vpop.f32.mrb[0].mxu0
      %v3334 = vadd.f32 %v3141, %v3333
      %3335 = vmatprep.mubr.bf16.mxu0 0
      %3336 = vmatmul.mubr.bf16.gmra.mrb[0].mxu0 %v1828
      %v3337 = vpop.f32.mrb[0].mxu0
      %v3338 = vadd.f32 %v3145, %v3337
      %v3339 = vpop.f32.mrb[0].mxu0
      %v3340 = vadd.f32 %v3147, %v3339
      %v3341 = vpop.f32.mrb[0].mxu0
      %v3342 = vadd.f32 %v3149, %v3341
      %v3343 = vpop.f32.mrb[0].mxu0
      %v3344 = vadd.f32 %v3151, %v3343
      %3345 = vmatprep.mubr.bf16.mxu0 0
      %3346 = vmatmul.mubr.bf16.gmra.mrb[0].mxu0 %v1831
      %v3347 = vpop.f32.mrb[0].mxu0
      %v3348 = vadd.f32 %v3155, %v3347
      %v3349 = vpop.f32.mrb[0].mxu0
      %v3350 = vadd.f32 %v3157, %v3349
      %v3351 = vpop.f32.mrb[0].mxu0
      %v3352 = vadd.f32 %v3159, %v3351
      %v3353 = vpop.f32.mrb[0].mxu0
      %v3354 = vadd.f32 %v3161, %v3353
      %3355 = vmatprep.mubr.bf16.mxu0 0
      %3356 = vmatmul.mubr.bf16.gmra.mrb[0].mxu0 %v1834
      %v3357 = vpop.f32.mrb[0].mxu0
      %v3358 = vadd.f32 %v3165, %v3357
      %v3359 = vpop.f32.mrb[0].mxu0
      %v3360 = vadd.f32 %v3167, %v3359
      %v3361 = vpop.f32.mrb[0].mxu0
      %v3362 = vadd.f32 %v3169, %v3361
      %v3363 = vpop.f32.mrb[0].mxu0
      %v3364 = vadd.f32 %v3171, %v3363
      %3365 = vmatprep.mubr.bf16.mxu0 0
      %3366 = vmatmul.mubr.bf16.gmra.mrb[0].mxu0 %v1837
      %v3367 = vpop.f32.mrb[0].mxu0
      %v3368 = vadd.f32 %v3175, %v3367
      %v3369 = vpop.f32.mrb[0].mxu0
      %v3370 = vadd.f32 %v3177, %v3369
      %v3371 = vpop.f32.mrb[0].mxu0
      %v3372 = vadd.f32 %v3179, %v3371
      %v3373 = vpop.f32.mrb[0].mxu0
      %v3374 = vadd.f32 %v3181, %v3373
      %3375 = vmatprep.mubr.bf16.mxu0 0
      %3376 = vmatmul.mubr.bf16.gmra.mrb[0].mxu0 %v1840
      %v3377 = vpop.f32.mrb[0].mxu0
      %v3378 = vadd.f32 %v3185, %v3377
      %v3379 = vpop.f32.mrb[0].mxu0
      %v3380 = vadd.f32 %v3187, %v3379
      %v3381 = vpop.f32.mrb[0].mxu0
      %v3382 = vadd.f32 %v3189, %v3381
      %v3383 = vpop.f32.mrb[0].mxu0
      %v3384 = vadd.f32 %v3191, %v3383
      %3385 = vdwg.mxu0
      %vm3386 = vcmp.ge.f32.partialorder %v2456, 0.0
      %vm3387 = vcmp.ge.f32.partialorder %v2458, 0.0
      %vm3388 = vcmp.ge.f32.partialorder %v3228, 0.0
      %vm3389 = vcmp.ge.f32.partialorder %v3230, 0.0
      %vm3390 = vcmp.ge.f32.partialorder %v2460, 0.0
      %vm3391 = vcmp.ge.f32.partialorder %v2462, 0.0
      %vm3392 = vcmp.ge.f32.partialorder %v3232, 0.0
      %vm3393 = vcmp.ge.f32.partialorder %v3234, 0.0
      %vm3394 = vcmp.ge.f32.partialorder %v2466, 0.0
      %vm3395 = vcmp.ge.f32.partialorder %v2468, 0.0
      %vm3396 = vcmp.ge.f32.partialorder %v3238, 0.0
      %vm3397 = vcmp.ge.f32.partialorder %v3240, 0.0
      %vm3398 = vcmp.ge.f32.partialorder %v2470, 0.0
      %vm3399 = vcmp.ge.f32.partialorder %v2472, 0.0
      %vm3400 = vcmp.ge.f32.partialorder %v3242, 0.0
      %vm3401 = vcmp.ge.f32.partialorder %v3244, 0.0
      %vm3402 = vcmp.ge.f32.partialorder %v2476, 0.0
      %vm3403 = vcmp.ge.f32.partialorder %v2478, 0.0
      %vm3404 = vcmp.ge.f32.partialorder %v3248, 0.0
      %vm3405 = vcmp.ge.f32.partialorder %v3250, 0.0
      %vm3406 = vcmp.ge.f32.partialorder %v2480, 0.0
      %vm3407 = vcmp.ge.f32.partialorder %v2482, 0.0
      %vm3408 = vcmp.ge.f32.partialorder %v3252, 0.0
      %vm3409 = vcmp.ge.f32.partialorder %v3254, 0.0
      %vm3410 = vcmp.ge.f32.partialorder %v2486, 0.0
      %vm3411 = vcmp.ge.f32.partialorder %v2488, 0.0
      %vm3412 = vcmp.ge.f32.partialorder %v3258, 0.0
      %vm3413 = vcmp.ge.f32.partialorder %v3260, 0.0
      %vm3414 = vcmp.ge.f32.partialorder %v2490, 0.0
      %vm3415 = vcmp.ge.f32.partialorder %v2492, 0.0
      %vm3416 = vcmp.ge.f32.partialorder %v3262, 0.0
      %vm3417 = vcmp.ge.f32.partialorder %v3264, 0.0
      %vm3418 = vcmp.ge.f32.partialorder %v2496, 0.0
      %vm3419 = vcmp.ge.f32.partialorder %v2498, 0.0
      %vm3420 = vcmp.ge.f32.partialorder %v3268, 0.0
      %vm3421 = vcmp.ge.f32.partialorder %v3270, 0.0
      %vm3422 = vcmp.ge.f32.partialorder %v2500, 0.0
      %vm3423 = vcmp.ge.f32.partialorder %v2502, 0.0
      %vm3424 = vcmp.ge.f32.partialorder %v3272, 0.0
      %vm3425 = vcmp.ge.f32.partialorder %v3274, 0.0
      %vm3426 = vcmp.ge.f32.partialorder %v2506, 0.0
      %vm3427 = vcmp.ge.f32.partialorder %v2508, 0.0
      %vm3428 = vcmp.ge.f32.partialorder %v3278, 0.0
      %vm3429 = vcmp.ge.f32.partialorder %v3280, 0.0
      %vm3430 = vcmp.ge.f32.partialorder %v2510, 0.0
      %vm3431 = vcmp.ge.f32.partialorder %v2512, 0.0
      %vm3432 = vcmp.ge.f32.partialorder %v3282, 0.0
      %vm3433 = vcmp.ge.f32.partialorder %v3284, 0.0
      %vm3434 = vcmp.ge.f32.partialorder %v2516, 0.0
      %vm3435 = vcmp.ge.f32.partialorder %v2518, 0.0
      %vm3436 = vcmp.ge.f32.partialorder %v3288, 0.0
      %vm3437 = vcmp.ge.f32.partialorder %v3290, 0.0
      %vm3438 = vcmp.ge.f32.partialorder %v2520, 0.0
      %vm3439 = vcmp.ge.f32.partialorder %v2522, 0.0
      %vm3440 = vcmp.ge.f32.partialorder %v3292, 0.0
      %vm3441 = vcmp.ge.f32.partialorder %v3294, 0.0
      %vm3442 = vcmp.ge.f32.partialorder %v2526, 0.0
      %vm3443 = vcmp.ge.f32.partialorder %v2528, 0.0
      %vm3444 = vcmp.ge.f32.partialorder %v3298, 0.0
      %vm3445 = vcmp.ge.f32.partialorder %v3300, 0.0
      %vm3446 = vcmp.ge.f32.partialorder %v2530, 0.0
      %vm3447 = vcmp.ge.f32.partialorder %v2532, 0.0
      %vm3448 = vcmp.ge.f32.partialorder %v3302, 0.0
      %vm3449 = vcmp.ge.f32.partialorder %v3304, 0.0
      %vm3450 = vcmp.ge.f32.partialorder %v2536, 0.0
      %vm3451 = vcmp.ge.f32.partialorder %v2538, 0.0
      %vm3452 = vcmp.ge.f32.partialorder %v3308, 0.0
      %vm3453 = vcmp.ge.f32.partialorder %v3310, 0.0
      %vm3454 = vcmp.ge.f32.partialorder %v2540, 0.0
      %vm3455 = vcmp.ge.f32.partialorder %v2542, 0.0
      %vm3456 = vcmp.ge.f32.partialorder %v3312, 0.0
      %vm3457 = vcmp.ge.f32.partialorder %v3314, 0.0
      %vm3458 = vcmp.ge.f32.partialorder %v2546, 0.0
      %vm3459 = vcmp.ge.f32.partialorder %v2548, 0.0
      %vm3460 = vcmp.ge.f32.partialorder %v3318, 0.0
      %vm3461 = vcmp.ge.f32.partialorder %v3320, 0.0
      %vm3462 = vcmp.ge.f32.partialorder %v2550, 0.0
      %vm3463 = vcmp.ge.f32.partialorder %v2552, 0.0
      %vm3464 = vcmp.ge.f32.partialorder %v3322, 0.0
      %vm3465 = vcmp.ge.f32.partialorder %v3324, 0.0
      %vm3466 = vcmp.ge.f32.partialorder %v2556, 0.0
      %vm3467 = vcmp.ge.f32.partialorder %v2558, 0.0
      %vm3468 = vcmp.ge.f32.partialorder %v3328, 0.0
      %vm3469 = vcmp.ge.f32.partialorder %v3330, 0.0
      %vm3470 = vcmp.ge.f32.partialorder %v2560, 0.0
      %vm3471 = vcmp.ge.f32.partialorder %v2562, 0.0
      %vm3472 = vcmp.ge.f32.partialorder %v3332, 0.0
      %vm3473 = vcmp.ge.f32.partialorder %v3334, 0.0
      %vm3474 = vcmp.ge.f32.partialorder %v2566, 0.0
      %vm3475 = vcmp.ge.f32.partialorder %v2568, 0.0
      %vm3476 = vcmp.ge.f32.partialorder %v3338, 0.0
      %vm3477 = vcmp.ge.f32.partialorder %v3340, 0.0
      %vm3478 = vcmp.ge.f32.partialorder %v2570, 0.0
      %vm3479 = vcmp.ge.f32.partialorder %v2572, 0.0
      %vm3480 = vcmp.ge.f32.partialorder %v3342, 0.0
      %vm3481 = vcmp.ge.f32.partialorder %v3344, 0.0
      %vm3482 = vcmp.ge.f32.partialorder %v2576, 0.0
      %vm3483 = vcmp.ge.f32.partialorder %v2578, 0.0
      %vm3484 = vcmp.ge.f32.partialorder %v3348, 0.0
      %vm3485 = vcmp.ge.f32.partialorder %v3350, 0.0
      %vm3486 = vcmp.ge.f32.partialorder %v2580, 0.0
      %vm3487 = vcmp.ge.f32.partialorder %v2582, 0.0
      %vm3488 = vcmp.ge.f32.partialorder %v3352, 0.0
      %vm3489 = vcmp.ge.f32.partialorder %v3354, 0.0
      %vm3490 = vcmp.ge.f32.partialorder %v2586, 0.0
      %vm3491 = vcmp.ge.f32.partialorder %v2588, 0.0
      %vm3492 = vcmp.ge.f32.partialorder %v3358, 0.0
      %vm3493 = vcmp.ge.f32.partialorder %v3360, 0.0
      %vm3494 = vcmp.ge.f32.partialorder %v2590, 0.0
      %vm3495 = vcmp.ge.f32.partialorder %v2592, 0.0
      %vm3496 = vcmp.ge.f32.partialorder %v3362, 0.0
      %vm3497 = vcmp.ge.f32.partialorder %v3364, 0.0
      %vm3498 = vcmp.ge.f32.partialorder %v2596, 0.0
      %vm3499 = vcmp.ge.f32.partialorder %v2598, 0.0
      %vm3500 = vcmp.ge.f32.partialorder %v3368, 0.0
      %vm3501 = vcmp.ge.f32.partialorder %v3370, 0.0
      %vm3502 = vcmp.ge.f32.partialorder %v2600, 0.0
      %vm3503 = vcmp.ge.f32.partialorder %v2602, 0.0
      %vm3504 = vcmp.ge.f32.partialorder %v3372, 0.0
      %vm3505 = vcmp.ge.f32.partialorder %v3374, 0.0
      %vm3506 = vcmp.ge.f32.partialorder %v2606, 0.0
      %vm3507 = vcmp.ge.f32.partialorder %v2608, 0.0
      %vm3508 = vcmp.ge.f32.partialorder %v3378, 0.0
      %vm3509 = vcmp.ge.f32.partialorder %v3380, 0.0
      %vm3510 = vcmp.ge.f32.partialorder %v2610, 0.0
      %vm3511 = vcmp.ge.f32.partialorder %v2612, 0.0
      %vm3512 = vcmp.ge.f32.partialorder %v3382, 0.0
      %vm3513 = vcmp.ge.f32.partialorder %v3384, 0.0
      %v3514 = vmul.f32 %v2456, 0.2
      %v3515 = vmul.f32 %v2458, 0.2
      %v3516 = vmul.f32 %v3228, 0.2
      %v3517 = vmul.f32 %v3230, 0.2
      %v3518 = vmul.f32 %v2460, 0.2
      %v3519 = vmul.f32 %v2462, 0.2
      %v3520 = vmul.f32 %v3232, 0.2
      %v3521 = vmul.f32 %v3234, 0.2
      %v3522 = vmul.f32 %v2466, 0.2
      %v3523 = vmul.f32 %v2468, 0.2
      %v3524 = vmul.f32 %v3238, 0.2
      %v3525 = vmul.f32 %v3240, 0.2
      %v3526 = vmul.f32 %v2470, 0.2
      %v3527 = vmul.f32 %v2472, 0.2
      %v3528 = vmul.f32 %v3242, 0.2
      %v3529 = vmul.f32 %v3244, 0.2
      %v3530 = vmul.f32 %v2476, 0.2
      %v3531 = vmul.f32 %v2478, 0.2
      %v3532 = vmul.f32 %v3248, 0.2
      %v3533 = vmul.f32 %v3250, 0.2
      %v3534 = vmul.f32 %v2480, 0.2
      %v3535 = vmul.f32 %v2482, 0.2
      %v3536 = vmul.f32 %v3252, 0.2
      %v3537 = vmul.f32 %v3254, 0.2
      %v3538 = vmul.f32 %v2486, 0.2
      %v3539 = vmul.f32 %v2488, 0.2
      %v3540 = vmul.f32 %v3258, 0.2
      %v3541 = vmul.f32 %v3260, 0.2
      %v3542 = vmul.f32 %v2490, 0.2
      %v3543 = vmul.f32 %v2492, 0.2
      %v3544 = vmul.f32 %v3262, 0.2
      %v3545 = vmul.f32 %v3264, 0.2
      %v3546 = vmul.f32 %v2496, 0.2
      %v3547 = vmul.f32 %v2498, 0.2
      %v3548 = vmul.f32 %v3268, 0.2
      %v3549 = vmul.f32 %v3270, 0.2
      %v3550 = vmul.f32 %v2500, 0.2
      %v3551 = vmul.f32 %v2502, 0.2
      %v3552 = vmul.f32 %v3272, 0.2
      %v3553 = vmul.f32 %v3274, 0.2
      %v3554 = vmul.f32 %v2506, 0.2
      %v3555 = vmul.f32 %v2508, 0.2
      %v3556 = vmul.f32 %v3278, 0.2
      %v3557 = vmul.f32 %v3280, 0.2
      %v3558 = vmul.f32 %v2510, 0.2
      %v3559 = vmul.f32 %v2512, 0.2
      %v3560 = vmul.f32 %v3282, 0.2
      %v3561 = vmul.f32 %v3284, 0.2
      %v3562 = vmul.f32 %v2516, 0.2
      %v3563 = vmul.f32 %v2518, 0.2
      %v3564 = vmul.f32 %v3288, 0.2
      %v3565 = vmul.f32 %v3290, 0.2
      %v3566 = vmul.f32 %v2520, 0.2
      %v3567 = vmul.f32 %v2522, 0.2
      %v3568 = vmul.f32 %v3292, 0.2
      %v3569 = vmul.f32 %v3294, 0.2
      %v3570 = vmul.f32 %v2526, 0.2
      %v3571 = vmul.f32 %v2528, 0.2
      %v3572 = vmul.f32 %v3298, 0.2
      %v3573 = vmul.f32 %v3300, 0.2
      %v3574 = vmul.f32 %v2530, 0.2
      %v3575 = vmul.f32 %v2532, 0.2
      %v3576 = vmul.f32 %v3302, 0.2
      %v3577 = vmul.f32 %v3304, 0.2
      %v3578 = vmul.f32 %v2536, 0.2
      %v3579 = vmul.f32 %v2538, 0.2
      %v3580 = vmul.f32 %v3308, 0.2
      %v3581 = vmul.f32 %v3310, 0.2
      %v3582 = vmul.f32 %v2540, 0.2
      %v3583 = vmul.f32 %v2542, 0.2
      %v3584 = vmul.f32 %v3312, 0.2
      %v3585 = vmul.f32 %v3314, 0.2
      %v3586 = vmul.f32 %v2546, 0.2
      %v3587 = vmul.f32 %v2548, 0.2
      %v3588 = vmul.f32 %v3318, 0.2
      %v3589 = vmul.f32 %v3320, 0.2
      %v3590 = vmul.f32 %v2550, 0.2
      %v3591 = vmul.f32 %v2552, 0.2
      %v3592 = vmul.f32 %v3322, 0.2
      %v3593 = vmul.f32 %v3324, 0.2
      %v3594 = vmul.f32 %v2556, 0.2
      %v3595 = vmul.f32 %v2558, 0.2
      %v3596 = vmul.f32 %v3328, 0.2
      %v3597 = vmul.f32 %v3330, 0.2
      %v3598 = vmul.f32 %v2560, 0.2
      %v3599 = vmul.f32 %v2562, 0.2
      %v3600 = vmul.f32 %v3332, 0.2
      %v3601 = vmul.f32 %v3334, 0.2
      %v3602 = vmul.f32 %v2566, 0.2
      %v3603 = vmul.f32 %v2568, 0.2
      %v3604 = vmul.f32 %v3338, 0.2
      %v3605 = vmul.f32 %v3340, 0.2
      %v3606 = vmul.f32 %v2570, 0.2
      %v3607 = vmul.f32 %v2572, 0.2
      %v3608 = vmul.f32 %v3342, 0.2
      %v3609 = vmul.f32 %v3344, 0.2
      %v3610 = vmul.f32 %v2576, 0.2
      %v3611 = vmul.f32 %v2578, 0.2
      %v3612 = vmul.f32 %v3348, 0.2
      %v3613 = vmul.f32 %v3350, 0.2
      %v3614 = vmul.f32 %v2580, 0.2
      %v3615 = vmul.f32 %v2582, 0.2
      %v3616 = vmul.f32 %v3352, 0.2
      %v3617 = vmul.f32 %v3354, 0.2
      %v3618 = vmul.f32 %v2586, 0.2
      %v3619 = vmul.f32 %v2588, 0.2
      %v3620 = vmul.f32 %v3358, 0.2
      %v3621 = vmul.f32 %v3360, 0.2
      %v3622 = vmul.f32 %v2590, 0.2
      %v3623 = vmul.f32 %v2592, 0.2
      %v3624 = vmul.f32 %v3362, 0.2
      %v3625 = vmul.f32 %v3364, 0.2
      %v3626 = vmul.f32 %v2596, 0.2
      %v3627 = vmul.f32 %v2598, 0.2
      %v3628 = vmul.f32 %v3368, 0.2
      %v3629 = vmul.f32 %v3370, 0.2
      %v3630 = vmul.f32 %v2600, 0.2
      %v3631 = vmul.f32 %v2602, 0.2
      %v3632 = vmul.f32 %v3372, 0.2
      %v3633 = vmul.f32 %v3374, 0.2
      %v3634 = vmul.f32 %v2606, 0.2
      %v3635 = vmul.f32 %v2608, 0.2
      %v3636 = vmul.f32 %v3378, 0.2
      %v3637 = vmul.f32 %v3380, 0.2
      %v3638 = vmul.f32 %v2610, 0.2
      %v3639 = vmul.f32 %v2612, 0.2
      %v3640 = vmul.f32 %v3382, 0.2
      %v3641 = vmul.f32 %v3384, 0.2
      %v3642 = vsel %vm3386, %v2456, %v3514
      %v3643 = vsel %vm3387, %v2458, %v3515
      %v3644 = vsel %vm3388, %v3228, %v3516
      %v3645 = vsel %vm3389, %v3230, %v3517
      %v3646 = vsel %vm3390, %v2460, %v3518
      %v3647 = vsel %vm3391, %v2462, %v3519
      %v3648 = vsel %vm3392, %v3232, %v3520
      %v3649 = vsel %vm3393, %v3234, %v3521
      %v3650 = vsel %vm3394, %v2466, %v3522
      %v3651 = vsel %vm3395, %v2468, %v3523
      %v3652 = vsel %vm3396, %v3238, %v3524
      %v3653 = vsel %vm3397, %v3240, %v3525
      %v3654 = vsel %vm3398, %v2470, %v3526
      %v3655 = vsel %vm3399, %v2472, %v3527
      %v3656 = vsel %vm3400, %v3242, %v3528
      %v3657 = vsel %vm3401, %v3244, %v3529
      %v3658 = vsel %vm3402, %v2476, %v3530
      %v3659 = vsel %vm3403, %v2478, %v3531
      %v3660 = vsel %vm3404, %v3248, %v3532
      %v3661 = vsel %vm3405, %v3250, %v3533
      %v3662 = vsel %vm3406, %v2480, %v3534
      %v3663 = vsel %vm3407, %v2482, %v3535
      %v3664 = vsel %vm3408, %v3252, %v3536
      %v3665 = vsel %vm3409, %v3254, %v3537
      %v3666 = vsel %vm3410, %v2486, %v3538
      %v3667 = vsel %vm3411, %v2488, %v3539
      %v3668 = vsel %vm3412, %v3258, %v3540
      %v3669 = vsel %vm3413, %v3260, %v3541
      %v3670 = vsel %vm3414, %v2490, %v3542
      %v3671 = vsel %vm3415, %v2492, %v3543
      %v3672 = vsel %vm3416, %v3262, %v3544
      %v3673 = vsel %vm3417, %v3264, %v3545
      %v3674 = vsel %vm3418, %v2496, %v3546
      %v3675 = vsel %vm3419, %v2498, %v3547
      %v3676 = vsel %vm3420, %v3268, %v3548
      %v3677 = vsel %vm3421, %v3270, %v3549
      %v3678 = vsel %vm3422, %v2500, %v3550
      %v3679 = vsel %vm3423, %v2502, %v3551
      %v3680 = vsel %vm3424, %v3272, %v3552
      %v3681 = vsel %vm3425, %v3274, %v3553
      %v3682 = vsel %vm3426, %v2506, %v3554
      %v3683 = vsel %vm3427, %v2508, %v3555
      %v3684 = vsel %vm3428, %v3278, %v3556
      %v3685 = vsel %vm3429, %v3280, %v3557
      %v3686 = vsel %vm3430, %v2510, %v3558
      %v3687 = vsel %vm3431, %v2512, %v3559
      %v3688 = vsel %vm3432, %v3282, %v3560
      %v3689 = vsel %vm3433, %v3284, %v3561
      %v3690 = vsel %vm3434, %v2516, %v3562
      %v3691 = vsel %vm3435, %v2518, %v3563
      %v3692 = vsel %vm3436, %v3288, %v3564
      %v3693 = vsel %vm3437, %v3290, %v3565
      %v3694 = vsel %vm3438, %v2520, %v3566
      %v3695 = vsel %vm3439, %v2522, %v3567
      %v3696 = vsel %vm3440, %v3292, %v3568
      %v3697 = vsel %vm3441, %v3294, %v3569
      %v3698 = vsel %vm3442, %v2526, %v3570
      %v3699 = vsel %vm3443, %v2528, %v3571
      %v3700 = vsel %vm3444, %v3298, %v3572
      %v3701 = vsel %vm3445, %v3300, %v3573
      %v3702 = vsel %vm3446, %v2530, %v3574
      %v3703 = vsel %vm3447, %v2532, %v3575
      %v3704 = vsel %vm3448, %v3302, %v3576
      %v3705 = vsel %vm3449, %v3304, %v3577
      %v3706 = vsel %vm3450, %v2536, %v3578
      %v3707 = vsel %vm3451, %v2538, %v3579
      %v3708 = vsel %vm3452, %v3308, %v3580
      %v3709 = vsel %vm3453, %v3310, %v3581
      %v3710 = vsel %vm3454, %v2540, %v3582
      %v3711 = vsel %vm3455, %v2542, %v3583
      %v3712 = vsel %vm3456, %v3312, %v3584
      %v3713 = vsel %vm3457, %v3314, %v3585
      %v3714 = vsel %vm3458, %v2546, %v3586
      %v3715 = vsel %vm3459, %v2548, %v3587
      %v3716 = vsel %vm3460, %v3318, %v3588
      %v3717 = vsel %vm3461, %v3320, %v3589
      %v3718 = vsel %vm3462, %v2550, %v3590
      %v3719 = vsel %vm3463, %v2552, %v3591
      %v3720 = vsel %vm3464, %v3322, %v3592
      %v3721 = vsel %vm3465, %v3324, %v3593
      %v3722 = vsel %vm3466, %v2556, %v3594
      %v3723 = vsel %vm3467, %v2558, %v3595
      %v3724 = vsel %vm3468, %v3328, %v3596
      %v3725 = vsel %vm3469, %v3330, %v3597
      %v3726 = vsel %vm3470, %v2560, %v3598
      %v3727 = vsel %vm3471, %v2562, %v3599
      %v3728 = vsel %vm3472, %v3332, %v3600
      %v3729 = vsel %vm3473, %v3334, %v3601
      %v3730 = vsel %vm3474, %v2566, %v3602
      %v3731 = vsel %vm3475, %v2568, %v3603
      %v3732 = vsel %vm3476, %v3338, %v3604
      %v3733 = vsel %vm3477, %v3340, %v3605
      %v3734 = vsel %vm3478, %v2570, %v3606
      %v3735 = vsel %vm3479, %v2572, %v3607
      %v3736 = vsel %vm3480, %v3342, %v3608
      %v3737 = vsel %vm3481, %v3344, %v3609
      %v3738 = vsel %vm3482, %v2576, %v3610
      %v3739 = vsel %vm3483, %v2578, %v3611
      %v3740 = vsel %vm3484, %v3348, %v3612
      %v3741 = vsel %vm3485, %v3350, %v3613
      %v3742 = vsel %vm3486, %v2580, %v3614
      %v3743 = vsel %vm3487, %v2582, %v3615
      %v3744 = vsel %vm3488, %v3352, %v3616
      %v3745 = vsel %vm3489, %v3354, %v3617
      %v3746 = vsel %vm3490, %v2586, %v3618
      %v3747 = vsel %vm3491, %v2588, %v3619
      %v3748 = vsel %vm3492, %v3358, %v3620
      %v3749 = vsel %vm3493, %v3360, %v3621
      %v3750 = vsel %vm3494, %v2590, %v3622
      %v3751 = vsel %vm3495, %v2592, %v3623
      %v3752 = vsel %vm3496, %v3362, %v3624
      %v3753 = vsel %vm3497, %v3364, %v3625
      %v3754 = vsel %vm3498, %v2596, %v3626
      %v3755 = vsel %vm3499, %v2598, %v3627
      %v3756 = vsel %vm3500, %v3368, %v3628
      %v3757 = vsel %vm3501, %v3370, %v3629
      %v3758 = vsel %vm3502, %v2600, %v3630
      %v3759 = vsel %vm3503, %v2602, %v3631
      %v3760 = vsel %vm3504, %v3372, %v3632
      %v3761 = vsel %vm3505, %v3374, %v3633
      %v3762 = vsel %vm3506, %v2606, %v3634
      %v3763 = vsel %vm3507, %v2608, %v3635
      %v3764 = vsel %vm3508, %v3378, %v3636
      %v3765 = vsel %vm3509, %v3380, %v3637
      %v3766 = vsel %vm3510, %v2610, %v3638
      %v3767 = vsel %vm3511, %v2612, %v3639
      %v3768 = vsel %vm3512, %v3382, %v3640
      %v3769 = vsel %vm3513, %v3384, %v3641
      %v3770 = vpack.c.bf16 %v3646, %v3642
      %v3771 = vpack.c.bf16 %v3647, %v3643
      %v3772 = vpack.c.bf16 %v3648, %v3644
      %v3773 = vpack.c.bf16 %v3649, %v3645
      %v3774 = vpack.c.bf16 %v3654, %v3650
      %v3775 = vpack.c.bf16 %v3655, %v3651
      %v3776 = vpack.c.bf16 %v3656, %v3652
      %v3777 = vpack.c.bf16 %v3657, %v3653
      %v3778 = vpack.c.bf16 %v3662, %v3658
      %v3779 = vpack.c.bf16 %v3663, %v3659
      %v3780 = vpack.c.bf16 %v3664, %v3660
      %v3781 = vpack.c.bf16 %v3665, %v3661
      %v3782 = vpack.c.bf16 %v3670, %v3666
      %v3783 = vpack.c.bf16 %v3671, %v3667
      %v3784 = vpack.c.bf16 %v3672, %v3668
      %v3785 = vpack.c.bf16 %v3673, %v3669
      %v3786 = vpack.c.bf16 %v3678, %v3674
      %v3787 = vpack.c.bf16 %v3679, %v3675
      %v3788 = vpack.c.bf16 %v3680, %v3676
      %v3789 = vpack.c.bf16 %v3681, %v3677
      %v3790 = vpack.c.bf16 %v3686, %v3682
      %v3791 = vpack.c.bf16 %v3687, %v3683
      %v3792 = vpack.c.bf16 %v3688, %v3684
      %v3793 = vpack.c.bf16 %v3689, %v3685
      %v3794 = vpack.c.bf16 %v3694, %v3690
      %v3795 = vpack.c.bf16 %v3695, %v3691
      %v3796 = vpack.c.bf16 %v3696, %v3692
      %v3797 = vpack.c.bf16 %v3697, %v3693
      %v3798 = vpack.c.bf16 %v3702, %v3698
      %v3799 = vpack.c.bf16 %v3703, %v3699
      %v3800 = vpack.c.bf16 %v3704, %v3700
      %v3801 = vpack.c.bf16 %v3705, %v3701
      %v3802 = vpack.c.bf16 %v3710, %v3706
      %v3803 = vpack.c.bf16 %v3711, %v3707
      %v3804 = vpack.c.bf16 %v3712, %v3708
      %v3805 = vpack.c.bf16 %v3713, %v3709
      %v3806 = vpack.c.bf16 %v3718, %v3714
      %v3807 = vpack.c.bf16 %v3719, %v3715
      %v3808 = vpack.c.bf16 %v3720, %v3716
      %v3809 = vpack.c.bf16 %v3721, %v3717
      %v3810 = vpack.c.bf16 %v3726, %v3722
      %v3811 = vpack.c.bf16 %v3727, %v3723
      %v3812 = vpack.c.bf16 %v3728, %v3724
      %v3813 = vpack.c.bf16 %v3729, %v3725
      %v3814 = vpack.c.bf16 %v3734, %v3730
      %v3815 = vpack.c.bf16 %v3735, %v3731
      %v3816 = vpack.c.bf16 %v3736, %v3732
      %v3817 = vpack.c.bf16 %v3737, %v3733
      %v3818 = vpack.c.bf16 %v3742, %v3738
      %v3819 = vpack.c.bf16 %v3743, %v3739
      %v3820 = vpack.c.bf16 %v3744, %v3740
      %v3821 = vpack.c.bf16 %v3745, %v3741
      %v3822 = vpack.c.bf16 %v3750, %v3746
      %v3823 = vpack.c.bf16 %v3751, %v3747
      %v3824 = vpack.c.bf16 %v3752, %v3748
      %v3825 = vpack.c.bf16 %v3753, %v3749
      %v3826 = vpack.c.bf16 %v3758, %v3754
      %v3827 = vpack.c.bf16 %v3759, %v3755
      %v3828 = vpack.c.bf16 %v3760, %v3756
      %v3829 = vpack.c.bf16 %v3761, %v3757
      %v3830 = vpack.c.bf16 %v3766, %v3762
      %v3831 = vpack.c.bf16 %v3767, %v3763
      %v3832 = vpack.c.bf16 %v3768, %v3764
      %v3833 = vpack.c.bf16 %v3769, %v3765
      %v3834 = vld [vmem:[%s4] sm:$0xff]
      %v3835 = vld [vmem:[%s4 + $0x8] sm:$0xff]
      %v3836 = vld [vmem:[%s4 + $0x10] sm:$0xff]
      %v3837 = vld [vmem:[%s4 + $0x18] sm:$0xff]
      %v3838 = vld [vmem:[%s4 + $0x20] sm:$0xff]
      %v3839 = vld [vmem:[%s4 + $0x28] sm:$0xff]
      %v3840 = vld [vmem:[%s4 + $0x30] sm:$0xff]
      %v3841 = vld [vmem:[%s4 + $0x38] sm:$0xff]
      %v3842 = vld [vmem:[%s4 + $0x40] sm:$0xff]
      %v3843 = vld [vmem:[%s4 + $0x48] sm:$0xff]
      %v3844 = vld [vmem:[%s4 + $0x50] sm:$0xff]
      %v3845 = vld [vmem:[%s4 + $0x58] sm:$0xff]
      %v3846 = vld [vmem:[%s4 + $0x60] sm:$0xff]
      %v3847 = vld [vmem:[%s4 + $0x68] sm:$0xff]
      %v3848 = vld [vmem:[%s4 + $0x70] sm:$0xff]
      %v3849 = vld [vmem:[%s4 + $0x78] sm:$0xff]
      %v3850 = vld [vmem:[%s4 + $0x80] sm:$0xff]
      %v3851 = vld [vmem:[%s4 + $0x88] sm:$0xff]
      %v3852 = vld [vmem:[%s4 + $0x90] sm:$0xff]
      %v3853 = vld [vmem:[%s4 + $0x98] sm:$0xff]
      %v3854 = vld [vmem:[%s4 + $0xa0] sm:$0xff]
      %v3855 = vld [vmem:[%s4 + $0xa8] sm:$0xff]
      %v3856 = vld [vmem:[%s4 + $0xb0] sm:$0xff]
      %v3857 = vld [vmem:[%s4 + $0xb8] sm:$0xff]
      %v3858 = vld [vmem:[%s4 + $0xc0] sm:$0xff]
      %v3859 = vld [vmem:[%s4 + $0xc8] sm:$0xff]
      %v3860 = vld [vmem:[%s4 + $0xd0] sm:$0xff]
      %v3861 = vld [vmem:[%s4 + $0xd8] sm:$0xff]
      %v3862 = vld [vmem:[%s4 + $0xe0] sm:$0xff]
      %v3863 = vld [vmem:[%s4 + $0xe8] sm:$0xff]
      %v3864 = vld [vmem:[%s4 + $0xf0] sm:$0xff]
      %v3865 = vld [vmem:[%s4 + $0xf8] sm:$0xff]
      %v3866 = vld [vmem:[%s4 + $0x100] sm:$0xff]
      %v3867 = vld [vmem:[%s4 + $0x108] sm:$0xff]
      %v3868 = vld [vmem:[%s4 + $0x110] sm:$0xff]
      %v3869 = vld [vmem:[%s4 + $0x118] sm:$0xff]
      %v3870 = vld [vmem:[%s4 + $0x120] sm:$0xff]
      %v3871 = vld [vmem:[%s4 + $0x128] sm:$0xff]
      %v3872 = vld [vmem:[%s4 + $0x130] sm:$0xff]
      %v3873 = vld [vmem:[%s4 + $0x138] sm:$0xff]
      %v3874 = vld [vmem:[%s4 + $0x140] sm:$0xff]
      %v3875 = vld [vmem:[%s4 + $0x148] sm:$0xff]
      %v3876 = vld [vmem:[%s4 + $0x150] sm:$0xff]
      %v3877 = vld [vmem:[%s4 + $0x158] sm:$0xff]
      %v3878 = vld [vmem:[%s4 + $0x160] sm:$0xff]
      %v3879 = vld [vmem:[%s4 + $0x168] sm:$0xff]
      %v3880 = vld [vmem:[%s4 + $0x170] sm:$0xff]
      %v3881 = vld [vmem:[%s4 + $0x178] sm:$0xff]
      %v3882 = vld [vmem:[%s4 + $0x180] sm:$0xff]
      %v3883 = vld [vmem:[%s4 + $0x188] sm:$0xff]
      %v3884 = vld [vmem:[%s4 + $0x190] sm:$0xff]
      %v3885 = vld [vmem:[%s4 + $0x198] sm:$0xff]
      %v3886 = vld [vmem:[%s4 + $0x1a0] sm:$0xff]
      %v3887 = vld [vmem:[%s4 + $0x1a8] sm:$0xff]
      %v3888 = vld [vmem:[%s4 + $0x1b0] sm:$0xff]
      %v3889 = vld [vmem:[%s4 + $0x1b8] sm:$0xff]
      %v3890 = vld [vmem:[%s4 + $0x1c0] sm:$0xff]
      %v3891 = vld [vmem:[%s4 + $0x1c8] sm:$0xff]
      %v3892 = vld [vmem:[%s4 + $0x1d0] sm:$0xff]
      %v3893 = vld [vmem:[%s4 + $0x1d8] sm:$0xff]
      %v3894 = vld [vmem:[%s4 + $0x1e0] sm:$0xff]
      %v3895 = vld [vmem:[%s4 + $0x1e8] sm:$0xff]
      %v3896 = vld [vmem:[%s4 + $0x1f0] sm:$0xff]
      %v3897 = vld [vmem:[%s4 + $0x1f8] sm:$0xff]
      %v3898 = vld [vmem:[%s5] sm:$0x3]
      %v3900 = vlaneseq
      %v3901 = vshrl.u32 %v3900, 7
      %v3902 = vsub.s32 0, %v3901
      %v3903 = vrot.slane %v3898, %v3902
      %v3904 = vlaneseq
      %v3905 = vshrl.u32 %v3904, 7
      %v3906 = vsub.s32 1, %v3905
      %v3907 = vrot.slane %v3898, %v3906
      %v3974 = vunpack.c.l.b16 %v3834
      %v3975 = vunpack.c.h.b16 %v3834
      %v3976 = vunpack.c.l.b16 %v3835
      %v3977 = vunpack.c.h.b16 %v3835
      %v3978 = vunpack.c.l.b16 %v3836
      %v3979 = vunpack.c.h.b16 %v3836
      %v3980 = vunpack.c.l.b16 %v3837
      %v3981 = vunpack.c.h.b16 %v3837
      %v3982 = vunpack.c.l.b16 %v3838
      %v3983 = vunpack.c.h.b16 %v3838
      %v3984 = vunpack.c.l.b16 %v3839
      %v3985 = vunpack.c.h.b16 %v3839
      %v3986 = vunpack.c.l.b16 %v3840
      %v3987 = vunpack.c.h.b16 %v3840
      %v3988 = vunpack.c.l.b16 %v3841
      %v3989 = vunpack.c.h.b16 %v3841
      %v3990 = vunpack.c.l.b16 %v3842
      %v3991 = vunpack.c.h.b16 %v3842
      %v3992 = vunpack.c.l.b16 %v3843
      %v3993 = vunpack.c.h.b16 %v3843
      %v3994 = vunpack.c.l.b16 %v3844
      %v3995 = vunpack.c.h.b16 %v3844
      %v3996 = vunpack.c.l.b16 %v3845
      %v3997 = vunpack.c.h.b16 %v3845
      %v3998 = vunpack.c.l.b16 %v3846
      %v3999 = vunpack.c.h.b16 %v3846
      %v4000 = vunpack.c.l.b16 %v3847
      %v4001 = vunpack.c.h.b16 %v3847
      %v4002 = vunpack.c.l.b16 %v3848
      %v4003 = vunpack.c.h.b16 %v3848
      %v4004 = vunpack.c.l.b16 %v3849
      %v4005 = vunpack.c.h.b16 %v3849
      %v4006 = vunpack.c.l.b16 %v3850
      %v4007 = vunpack.c.h.b16 %v3850
      %v4008 = vunpack.c.l.b16 %v3851
      %v4009 = vunpack.c.h.b16 %v3851
      %v4010 = vunpack.c.l.b16 %v3852
      %v4011 = vunpack.c.h.b16 %v3852
      %v4012 = vunpack.c.l.b16 %v3853
      %v4013 = vunpack.c.h.b16 %v3853
      %v4014 = vunpack.c.l.b16 %v3854
      %v4015 = vunpack.c.h.b16 %v3854
      %v4016 = vunpack.c.l.b16 %v3855
      %v4017 = vunpack.c.h.b16 %v3855
      %v4018 = vunpack.c.l.b16 %v3856
      %v4019 = vunpack.c.h.b16 %v3856
      %v4020 = vunpack.c.l.b16 %v3857
      %v4021 = vunpack.c.h.b16 %v3857
      %v4022 = vunpack.c.l.b16 %v3858
      %v4023 = vunpack.c.h.b16 %v3858
      %v4024 = vunpack.c.l.b16 %v3859
      %v4025 = vunpack.c.h.b16 %v3859
      %v4026 = vunpack.c.l.b16 %v3860
      %v4027 = vunpack.c.h.b16 %v3860
      %v4028 = vunpack.c.l.b16 %v3861
      %v4029 = vunpack.c.h.b16 %v3861
      %v4030 = vunpack.c.l.b16 %v3862
      %v4031 = vunpack.c.h.b16 %v3862
      %v4032 = vunpack.c.l.b16 %v3863
      %v4033 = vunpack.c.h.b16 %v3863
      %v4034 = vunpack.c.l.b16 %v3864
      %v4035 = vunpack.c.h.b16 %v3864
      %v4036 = vunpack.c.l.b16 %v3865
      %v4037 = vunpack.c.h.b16 %v3865
      %v4038 = vunpack.c.l.b16 %v3866
      %v4039 = vunpack.c.h.b16 %v3866
      %v4040 = vunpack.c.l.b16 %v3867
      %v4041 = vunpack.c.h.b16 %v3867
      %v4042 = vunpack.c.l.b16 %v3868
      %v4043 = vunpack.c.h.b16 %v3868
      %v4044 = vunpack.c.l.b16 %v3869
      %v4045 = vunpack.c.h.b16 %v3869
      %v4046 = vunpack.c.l.b16 %v3870
      %v4047 = vunpack.c.h.b16 %v3870
      %v4048 = vunpack.c.l.b16 %v3871
      %v4049 = vunpack.c.h.b16 %v3871
      %v4050 = vunpack.c.l.b16 %v3872
      %v4051 = vunpack.c.h.b16 %v3872
      %v4052 = vunpack.c.l.b16 %v3873
      %v4053 = vunpack.c.h.b16 %v3873
      %v4054 = vunpack.c.l.b16 %v3874
      %v4055 = vunpack.c.h.b16 %v3874
      %v4056 = vunpack.c.l.b16 %v3875
      %v4057 = vunpack.c.h.b16 %v3875
      %v4058 = vunpack.c.l.b16 %v3876
      %v4059 = vunpack.c.h.b16 %v3876
      %v4060 = vunpack.c.l.b16 %v3877
      %v4061 = vunpack.c.h.b16 %v3877
      %v4062 = vunpack.c.l.b16 %v3878
      %v4063 = vunpack.c.h.b16 %v3878
      %v4064 = vunpack.c.l.b16 %v3879
      %v4065 = vunpack.c.h.b16 %v3879
      %v4066 = vunpack.c.l.b16 %v3880
      %v4067 = vunpack.c.h.b16 %v3880
      %v4068 = vunpack.c.l.b16 %v3881
      %v4069 = vunpack.c.h.b16 %v3881
      %v4070 = vunpack.c.l.b16 %v3882
      %v4071 = vunpack.c.h.b16 %v3882
      %v4072 = vunpack.c.l.b16 %v3883
      %v4073 = vunpack.c.h.b16 %v3883
      %v4074 = vunpack.c.l.b16 %v3884
      %v4075 = vunpack.c.h.b16 %v3884
      %v4076 = vunpack.c.l.b16 %v3885
      %v4077 = vunpack.c.h.b16 %v3885
      %v4078 = vunpack.c.l.b16 %v3886
      %v4079 = vunpack.c.h.b16 %v3886
      %v4080 = vunpack.c.l.b16 %v3887
      %v4081 = vunpack.c.h.b16 %v3887
      %v4082 = vunpack.c.l.b16 %v3888
      %v4083 = vunpack.c.h.b16 %v3888
      %v4084 = vunpack.c.l.b16 %v3889
      %v4085 = vunpack.c.h.b16 %v3889
      %v4086 = vunpack.c.l.b16 %v3890
      %v4087 = vunpack.c.h.b16 %v3890
      %v4088 = vunpack.c.l.b16 %v3891
      %v4089 = vunpack.c.h.b16 %v3891
      %v4090 = vunpack.c.l.b16 %v3892
      %v4091 = vunpack.c.h.b16 %v3892
      %v4092 = vunpack.c.l.b16 %v3893
      %v4093 = vunpack.c.h.b16 %v3893
      %v4094 = vunpack.c.l.b16 %v3894
      %v4095 = vunpack.c.h.b16 %v3894
      %v4096 = vunpack.c.l.b16 %v3895
      %v4097 = vunpack.c.h.b16 %v3895
      %v4098 = vunpack.c.l.b16 %v3896
      %v4099 = vunpack.c.h.b16 %v3896
      %v4100 = vunpack.c.l.b16 %v3897
      %v4101 = vunpack.c.h.b16 %v3897
      %v4102 = vpack.c.b16 %v3976, %v3974
      %v4103 = vpack.c.b16 %v3977, %v3975
      %v4104 = vpack.c.b16 %v3980, %v3978
      %v4105 = vpack.c.b16 %v3981, %v3979
      %v4106 = vpack.c.b16 %v3984, %v3982
      %v4107 = vpack.c.b16 %v3985, %v3983
      %v4108 = vpack.c.b16 %v3988, %v3986
      %v4109 = vpack.c.b16 %v3989, %v3987
      %v4110 = vpack.c.b16 %v3992, %v3990
      %v4111 = vpack.c.b16 %v3993, %v3991
      %v4112 = vpack.c.b16 %v3996, %v3994
      %v4113 = vpack.c.b16 %v3997, %v3995
      %v4114 = vpack.c.b16 %v4000, %v3998
      %v4115 = vpack.c.b16 %v4001, %v3999
      %v4116 = vpack.c.b16 %v4004, %v4002
      %v4117 = vpack.c.b16 %v4005, %v4003
      %v4118 = vpack.c.b16 %v4008, %v4006
      %v4119 = vpack.c.b16 %v4009, %v4007
      %v4120 = vpack.c.b16 %v4012, %v4010
      %v4121 = vpack.c.b16 %v4013, %v4011
      %v4122 = vpack.c.b16 %v4016, %v4014
      %v4123 = vpack.c.b16 %v4017, %v4015
      %v4124 = vpack.c.b16 %v4020, %v4018
      %v4125 = vpack.c.b16 %v4021, %v4019
      %v4126 = vpack.c.b16 %v4024, %v4022
      %v4127 = vpack.c.b16 %v4025, %v4023
      %v4128 = vpack.c.b16 %v4028, %v4026
      %v4129 = vpack.c.b16 %v4029, %v4027
      %v4130 = vpack.c.b16 %v4032, %v4030
      %v4131 = vpack.c.b16 %v4033, %v4031
      %v4132 = vpack.c.b16 %v4036, %v4034
      %v4133 = vpack.c.b16 %v4037, %v4035
      %v4134 = vpack.c.b16 %v4040, %v4038
      %v4135 = vpack.c.b16 %v4041, %v4039
      %v4136 = vpack.c.b16 %v4044, %v4042
      %v4137 = vpack.c.b16 %v4045, %v4043
      %v4138 = vpack.c.b16 %v4048, %v4046
      %v4139 = vpack.c.b16 %v4049, %v4047
      %v4140 = vpack.c.b16 %v4052, %v4050
      %v4141 = vpack.c.b16 %v4053, %v4051
      %v4142 = vpack.c.b16 %v4056, %v4054
      %v4143 = vpack.c.b16 %v4057, %v4055
      %v4144 = vpack.c.b16 %v4060, %v4058
      %v4145 = vpack.c.b16 %v4061, %v4059
      %v4146 = vpack.c.b16 %v4064, %v4062
      %v4147 = vpack.c.b16 %v4065, %v4063
      %v4148 = vpack.c.b16 %v4068, %v4066
      %v4149 = vpack.c.b16 %v4069, %v4067
      %v4150 = vpack.c.b16 %v4072, %v4070
      %v4151 = vpack.c.b16 %v4073, %v4071
      %v4152 = vpack.c.b16 %v4076, %v4074
      %v4153 = vpack.c.b16 %v4077, %v4075
      %v4154 = vpack.c.b16 %v4080, %v4078
      %v4155 = vpack.c.b16 %v4081, %v4079
      %v4156 = vpack.c.b16 %v4084, %v4082
      %v4157 = vpack.c.b16 %v4085, %v4083
      %v4158 = vpack.c.b16 %v4088, %v4086
      %v4159 = vpack.c.b16 %v4089, %v4087
      %v4160 = vpack.c.b16 %v4092, %v4090
      %v4161 = vpack.c.b16 %v4093, %v4091
      %v4162 = vpack.c.b16 %v4096, %v4094
      %v4163 = vpack.c.b16 %v4097, %v4095
      %v4164 = vpack.c.b16 %v4100, %v4098
      %v4165 = vpack.c.b16 %v4101, %v4099
      %4230 = vmatprep.subr.bf16.mxu0 %v4103
      %4231 = vmatpush1.bf16.msra.mxu0 %v4102
      %4232 = vmatprep.subr.bf16.mxu0 %v4105
      %4233 = vmatpush1.bf16.msra.mxu0 %v4104
      %4234 = vmatprep.subr.bf16.mxu0 %v4107
      %4235 = vmatpush1.bf16.msra.mxu0 %v4106
      %4236 = vmatprep.subr.bf16.mxu0 %v4109
      %4237 = vmatpush1.bf16.msra.mxu0 %v4108
      %4238 = vmatprep.subr.bf16.mxu0 %v4111
      %4239 = vmatpush1.bf16.msra.mxu0 %v4110
      %4240 = vmatprep.subr.bf16.mxu0 %v4113
      %4241 = vmatpush1.bf16.msra.mxu0 %v4112
      %4242 = vmatprep.subr.bf16.mxu0 %v4115
      %4243 = vmatpush1.bf16.msra.mxu0 %v4114
      %4244 = vmatprep.subr.bf16.mxu0 %v4117
      %4245 = vmatpush1.bf16.msra.mxu0 %v4116
      %4246 = vmatprep.subr.bf16.mxu0 %v4119
      %4247 = vmatpush1.bf16.msra.mxu0 %v4118
      %4248 = vmatprep.subr.bf16.mxu0 %v4121
      %4249 = vmatpush1.bf16.msra.mxu0 %v4120
      %4250 = vmatprep.subr.bf16.mxu0 %v4123
      %4251 = vmatpush1.bf16.msra.mxu0 %v4122
      %4252 = vmatprep.subr.bf16.mxu0 %v4125
      %4253 = vmatpush1.bf16.msra.mxu0 %v4124
      %4254 = vmatprep.subr.bf16.mxu0 %v4127
      %4255 = vmatpush1.bf16.msra.mxu0 %v4126
      %4256 = vmatprep.subr.bf16.mxu0 %v4129
      %4257 = vmatpush1.bf16.msra.mxu0 %v4128
      %4258 = vmatprep.subr.bf16.mxu0 %v4131
      %4259 = vmatpush1.bf16.msra.mxu0 %v4130
      %4260 = vmatprep.subr.bf16.mxu0 %v4133
      %4261 = vmatpush1.bf16.msra.mxu0 %v4132
      %4262 = vmatprep.mubr.bf16.mxu0 %v3771
      %4263 = vmatmul.mubr.bf16.gmra.mrb[0].mxu0 %v3770
      %v4264 = vpop.f32.mrb[0].mxu0
      %v4265 = vadd.f32 %v3903, %v4264
      %v4266 = vpop.f32.mrb[0].mxu0
      %v4267 = vadd.f32 %v3907, %v4266
      %v4268 = vpop.f32.mrb[0].mxu0
      %v4269 = vadd.f32 %v3903, %v4268
      %v4270 = vpop.f32.mrb[0].mxu0
      %v4271 = vadd.f32 %v3907, %v4270
      %4272 = vmatprep.mubr.bf16.mxu0 %v3775
      %4273 = vmatmul.mubr.bf16.gmra.mrb[0].mxu0 %v3774
      %v4274 = vpop.f32.mrb[0].mxu0
      %v4275 = vadd.f32 %v3903, %v4274
      %v4276 = vpop.f32.mrb[0].mxu0
      %v4277 = vadd.f32 %v3907, %v4276
      %v4278 = vpop.f32.mrb[0].mxu0
      %v4279 = vadd.f32 %v3903, %v4278
      %v4280 = vpop.f32.mrb[0].mxu0
      %v4281 = vadd.f32 %v3907, %v4280
      %4282 = vmatprep.mubr.bf16.mxu0 %v3779
      %4283 = vmatmul.mubr.bf16.gmra.mrb[0].mxu0 %v3778
      %v4284 = vpop.f32.mrb[0].mxu0
      %v4285 = vadd.f32 %v3903, %v4284
      %v4286 = vpop.f32.mrb[0].mxu0
      %v4287 = vadd.f32 %v3907, %v4286
      %v4288 = vpop.f32.mrb[0].mxu0
      %v4289 = vadd.f32 %v3903, %v4288
      %v4290 = vpop.f32.mrb[0].mxu0
      %v4291 = vadd.f32 %v3907, %v4290
      %4292 = vmatprep.mubr.bf16.mxu0 %v3783
      %4293 = vmatmul.mubr.bf16.gmra.mrb[0].mxu0 %v3782
      %v4294 = vpop.f32.mrb[0].mxu0
      %v4295 = vadd.f32 %v3903, %v4294
      %v4296 = vpop.f32.mrb[0].mxu0
      %v4297 = vadd.f32 %v3907, %v4296
      %v4298 = vpop.f32.mrb[0].mxu0
      %v4299 = vadd.f32 %v3903, %v4298
      %v4300 = vpop.f32.mrb[0].mxu0
      %v4301 = vadd.f32 %v3907, %v4300
      %4302 = vmatprep.mubr.bf16.mxu0 %v3787
      %4303 = vmatmul.mubr.bf16.gmra.mrb[0].mxu0 %v3786
      %v4304 = vpop.f32.mrb[0].mxu0
      %v4305 = vadd.f32 %v3903, %v4304
      %v4306 = vpop.f32.mrb[0].mxu0
      %v4307 = vadd.f32 %v3907, %v4306
      %v4308 = vpop.f32.mrb[0].mxu0
      %v4309 = vadd.f32 %v3903, %v4308
      %v4310 = vpop.f32.mrb[0].mxu0
      %v4311 = vadd.f32 %v3907, %v4310
      %4312 = vmatprep.mubr.bf16.mxu0 %v3791
      %4313 = vmatmul.mubr.bf16.gmra.mrb[0].mxu0 %v3790
      %v4314 = vpop.f32.mrb[0].mxu0
      %v4315 = vadd.f32 %v3903, %v4314
      %v4316 = vpop.f32.mrb[0].mxu0
      %v4317 = vadd.f32 %v3907, %v4316
      %v4318 = vpop.f32.mrb[0].mxu0
      %v4319 = vadd.f32 %v3903, %v4318
      %v4320 = vpop.f32.mrb[0].mxu0
      %v4321 = vadd.f32 %v3907, %v4320
      %4322 = vmatprep.mubr.bf16.mxu0 %v3795
      %4323 = vmatmul.mubr.bf16.gmra.mrb[0].mxu0 %v3794
      %v4324 = vpop.f32.mrb[0].mxu0
      %v4325 = vadd.f32 %v3903, %v4324
      %v4326 = vpop.f32.mrb[0].mxu0
      %v4327 = vadd.f32 %v3907, %v4326
      %v4328 = vpop.f32.mrb[0].mxu0
      %v4329 = vadd.f32 %v3903, %v4328
      %v4330 = vpop.f32.mrb[0].mxu0
      %v4331 = vadd.f32 %v3907, %v4330
      %4332 = vmatprep.mubr.bf16.mxu0 %v3799
      %4333 = vmatmul.mubr.bf16.gmra.mrb[0].mxu0 %v3798
      %v4334 = vpop.f32.mrb[0].mxu0
      %v4335 = vadd.f32 %v3903, %v4334
      %v4336 = vpop.f32.mrb[0].mxu0
      %v4337 = vadd.f32 %v3907, %v4336
      %v4338 = vpop.f32.mrb[0].mxu0
      %v4339 = vadd.f32 %v3903, %v4338
      %v4340 = vpop.f32.mrb[0].mxu0
      %v4341 = vadd.f32 %v3907, %v4340
      %4342 = vmatprep.mubr.bf16.mxu0 %v3803
      %4343 = vmatmul.mubr.bf16.gmra.mrb[0].mxu0 %v3802
      %v4344 = vpop.f32.mrb[0].mxu0
      %v4345 = vadd.f32 %v3903, %v4344
      %v4346 = vpop.f32.mrb[0].mxu0
      %v4347 = vadd.f32 %v3907, %v4346
      %v4348 = vpop.f32.mrb[0].mxu0
      %v4349 = vadd.f32 %v3903, %v4348
      %v4350 = vpop.f32.mrb[0].mxu0
      %v4351 = vadd.f32 %v3907, %v4350
      %4352 = vmatprep.mubr.bf16.mxu0 %v3807
      %4353 = vmatmul.mubr.bf16.gmra.mrb[0].mxu0 %v3806
      %v4354 = vpop.f32.mrb[0].mxu0
      %v4355 = vadd.f32 %v3903, %v4354
      %v4356 = vpop.f32.mrb[0].mxu0
      %v4357 = vadd.f32 %v3907, %v4356
      %v4358 = vpop.f32.mrb[0].mxu0
      %v4359 = vadd.f32 %v3903, %v4358
      %v4360 = vpop.f32.mrb[0].mxu0
      %v4361 = vadd.f32 %v3907, %v4360
      %4362 = vmatprep.mubr.bf16.mxu0 %v3811
      %4363 = vmatmul.mubr.bf16.gmra.mrb[0].mxu0 %v3810
      %v4364 = vpop.f32.mrb[0].mxu0
      %v4365 = vadd.f32 %v3903, %v4364
      %v4366 = vpop.f32.mrb[0].mxu0
      %v4367 = vadd.f32 %v3907, %v4366
      %v4368 = vpop.f32.mrb[0].mxu0
      %v4369 = vadd.f32 %v3903, %v4368
      %v4370 = vpop.f32.mrb[0].mxu0
      %v4371 = vadd.f32 %v3907, %v4370
      %4372 = vmatprep.mubr.bf16.mxu0 %v3815
      %4373 = vmatmul.mubr.bf16.gmra.mrb[0].mxu0 %v3814
      %v4374 = vpop.f32.mrb[0].mxu0
      %v4375 = vadd.f32 %v3903, %v4374
      %v4376 = vpop.f32.mrb[0].mxu0
      %v4377 = vadd.f32 %v3907, %v4376
      %v4378 = vpop.f32.mrb[0].mxu0
      %v4379 = vadd.f32 %v3903, %v4378
      %v4380 = vpop.f32.mrb[0].mxu0
      %v4381 = vadd.f32 %v3907, %v4380
      %4382 = vmatprep.mubr.bf16.mxu0 %v3819
      %4383 = vmatmul.mubr.bf16.gmra.mrb[0].mxu0 %v3818
      %v4384 = vpop.f32.mrb[0].mxu0
      %v4385 = vadd.f32 %v3903, %v4384
      %v4386 = vpop.f32.mrb[0].mxu0
      %v4387 = vadd.f32 %v3907, %v4386
      %v4388 = vpop.f32.mrb[0].mxu0
      %v4389 = vadd.f32 %v3903, %v4388
      %v4390 = vpop.f32.mrb[0].mxu0
      %v4391 = vadd.f32 %v3907, %v4390
      %4392 = vmatprep.mubr.bf16.mxu0 %v3823
      %4393 = vmatmul.mubr.bf16.gmra.mrb[0].mxu0 %v3822
      %v4394 = vpop.f32.mrb[0].mxu0
      %v4395 = vadd.f32 %v3903, %v4394
      %v4396 = vpop.f32.mrb[0].mxu0
      %v4397 = vadd.f32 %v3907, %v4396
      %v4398 = vpop.f32.mrb[0].mxu0
      %v4399 = vadd.f32 %v3903, %v4398
      %v4400 = vpop.f32.mrb[0].mxu0
      %v4401 = vadd.f32 %v3907, %v4400
      %4402 = vmatprep.mubr.bf16.mxu0 %v3827
      %4403 = vmatmul.mubr.bf16.gmra.mrb[0].mxu0 %v3826
      %v4404 = vpop.f32.mrb[0].mxu0
      %v4405 = vadd.f32 %v3903, %v4404
      %v4406 = vpop.f32.mrb[0].mxu0
      %v4407 = vadd.f32 %v3907, %v4406
      %v4408 = vpop.f32.mrb[0].mxu0
      %v4409 = vadd.f32 %v3903, %v4408
      %v4410 = vpop.f32.mrb[0].mxu0
      %v4411 = vadd.f32 %v3907, %v4410
      %4412 = vmatprep.mubr.bf16.mxu0 %v3831
      %4413 = vmatmul.mubr.bf16.gmra.mrb[0].mxu0 %v3830
      %v4414 = vpop.f32.mrb[0].mxu0
      %v4415 = vadd.f32 %v3903, %v4414
      %v4416 = vpop.f32.mrb[0].mxu0
      %v4417 = vadd.f32 %v3907, %v4416
      %v4418 = vpop.f32.mrb[0].mxu0
      %v4419 = vadd.f32 %v3903, %v4418
      %v4420 = vpop.f32.mrb[0].mxu0
      %v4421 = vadd.f32 %v3907, %v4420
      %4422 = vdwg.mxu0
      %4423 = vmatprep.subr.bf16.mxu0 %v4135
      %4424 = vmatpush1.bf16.msra.mxu0 %v4134
      %4425 = vmatprep.subr.bf16.mxu0 %v4137
      %4426 = vmatpush1.bf16.msra.mxu0 %v4136
      %4427 = vmatprep.subr.bf16.mxu0 %v4139
      %4428 = vmatpush1.bf16.msra.mxu0 %v4138
      %4429 = vmatprep.subr.bf16.mxu0 %v4141
      %4430 = vmatpush1.bf16.msra.mxu0 %v4140
      %4431 = vmatprep.subr.bf16.mxu0 %v4143
      %4432 = vmatpush1.bf16.msra.mxu0 %v4142
      %4433 = vmatprep.subr.bf16.mxu0 %v4145
      %4434 = vmatpush1.bf16.msra.mxu0 %v4144
      %4435 = vmatprep.subr.bf16.mxu0 %v4147
      %4436 = vmatpush1.bf16.msra.mxu0 %v4146
      %4437 = vmatprep.subr.bf16.mxu0 %v4149
      %4438 = vmatpush1.bf16.msra.mxu0 %v4148
      %4439 = vmatprep.subr.bf16.mxu0 %v4151
      %4440 = vmatpush1.bf16.msra.mxu0 %v4150
      %4441 = vmatprep.subr.bf16.mxu0 %v4153
      %4442 = vmatpush1.bf16.msra.mxu0 %v4152
      %4443 = vmatprep.subr.bf16.mxu0 %v4155
      %4444 = vmatpush1.bf16.msra.mxu0 %v4154
      %4445 = vmatprep.subr.bf16.mxu0 %v4157
      %4446 = vmatpush1.bf16.msra.mxu0 %v4156
      %4447 = vmatprep.subr.bf16.mxu0 %v4159
      %4448 = vmatpush1.bf16.msra.mxu0 %v4158
      %4449 = vmatprep.subr.bf16.mxu0 %v4161
      %4450 = vmatpush1.bf16.msra.mxu0 %v4160
      %4451 = vmatprep.subr.bf16.mxu0 %v4163
      %4452 = vmatpush1.bf16.msra.mxu0 %v4162
      %4453 = vmatprep.subr.bf16.mxu0 %v4165
      %4454 = vmatpush1.bf16.msra.mxu0 %v4164
      %4455 = vmatprep.mubr.bf16.mxu0 %v3773
      %4456 = vmatmul.mubr.bf16.gmra.mrb[0].mxu0 %v3772
      %v4457 = vpop.f32.mrb[0].mxu0
      %v4458 = vadd.f32 %v4265, %v4457
      %v4459 = vpop.f32.mrb[0].mxu0
      %v4460 = vadd.f32 %v4267, %v4459
      %v4461 = vpop.f32.mrb[0].mxu0
      %v4462 = vadd.f32 %v4269, %v4461
      %v4463 = vpop.f32.mrb[0].mxu0
      %v4464 = vadd.f32 %v4271, %v4463
      %4465 = vmatprep.mubr.bf16.mxu0 %v3777
      %4466 = vmatmul.mubr.bf16.gmra.mrb[0].mxu0 %v3776
      %v4467 = vpop.f32.mrb[0].mxu0
      %v4468 = vadd.f32 %v4275, %v4467
      %v4469 = vpop.f32.mrb[0].mxu0
      %v4470 = vadd.f32 %v4277, %v4469
      %v4471 = vpop.f32.mrb[0].mxu0
      %v4472 = vadd.f32 %v4279, %v4471
      %v4473 = vpop.f32.mrb[0].mxu0
      %v4474 = vadd.f32 %v4281, %v4473
      %4475 = vmatprep.mubr.bf16.mxu0 %v3781
      %4476 = vmatmul.mubr.bf16.gmra.mrb[0].mxu0 %v3780
      %v4477 = vpop.f32.mrb[0].mxu0
      %v4478 = vadd.f32 %v4285, %v4477
      %v4479 = vpop.f32.mrb[0].mxu0
      %v4480 = vadd.f32 %v4287, %v4479
      %v4481 = vpop.f32.mrb[0].mxu0
      %v4482 = vadd.f32 %v4289, %v4481
      %v4483 = vpop.f32.mrb[0].mxu0
      %v4484 = vadd.f32 %v4291, %v4483
      %4485 = vmatprep.mubr.bf16.mxu0 %v3785
      %4486 = vmatmul.mubr.bf16.gmra.mrb[0].mxu0 %v3784
      %v4487 = vpop.f32.mrb[0].mxu0
      %v4488 = vadd.f32 %v4295, %v4487
      %v4489 = vpop.f32.mrb[0].mxu0
      %v4490 = vadd.f32 %v4297, %v4489
      %v4491 = vpop.f32.mrb[0].mxu0
      %v4492 = vadd.f32 %v4299, %v4491
      %v4493 = vpop.f32.mrb[0].mxu0
      %v4494 = vadd.f32 %v4301, %v4493
      %4495 = vmatprep.mubr.bf16.mxu0 %v3789
      %4496 = vmatmul.mubr.bf16.gmra.mrb[0].mxu0 %v3788
      %v4497 = vpop.f32.mrb[0].mxu0
      %v4498 = vadd.f32 %v4305, %v4497
      %v4499 = vpop.f32.mrb[0].mxu0
      %v4500 = vadd.f32 %v4307, %v4499
      %v4501 = vpop.f32.mrb[0].mxu0
      %v4502 = vadd.f32 %v4309, %v4501
      %v4503 = vpop.f32.mrb[0].mxu0
      %v4504 = vadd.f32 %v4311, %v4503
      %4505 = vmatprep.mubr.bf16.mxu0 %v3793
      %4506 = vmatmul.mubr.bf16.gmra.mrb[0].mxu0 %v3792
      %v4507 = vpop.f32.mrb[0].mxu0
      %v4508 = vadd.f32 %v4315, %v4507
      %v4509 = vpop.f32.mrb[0].mxu0
      %v4510 = vadd.f32 %v4317, %v4509
      %v4511 = vpop.f32.mrb[0].mxu0
      %v4512 = vadd.f32 %v4319, %v4511
      %v4513 = vpop.f32.mrb[0].mxu0
      %v4514 = vadd.f32 %v4321, %v4513
      %4515 = vmatprep.mubr.bf16.mxu0 %v3797
      %4516 = vmatmul.mubr.bf16.gmra.mrb[0].mxu0 %v3796
      %v4517 = vpop.f32.mrb[0].mxu0
      %v4518 = vadd.f32 %v4325, %v4517
      %v4519 = vpop.f32.mrb[0].mxu0
      %v4520 = vadd.f32 %v4327, %v4519
      %v4521 = vpop.f32.mrb[0].mxu0
      %v4522 = vadd.f32 %v4329, %v4521
      %v4523 = vpop.f32.mrb[0].mxu0
      %v4524 = vadd.f32 %v4331, %v4523
      %4525 = vmatprep.mubr.bf16.mxu0 %v3801
      %4526 = vmatmul.mubr.bf16.gmra.mrb[0].mxu0 %v3800
      %v4527 = vpop.f32.mrb[0].mxu0
      %v4528 = vadd.f32 %v4335, %v4527
      %v4529 = vpop.f32.mrb[0].mxu0
      %v4530 = vadd.f32 %v4337, %v4529
      %v4531 = vpop.f32.mrb[0].mxu0
      %v4532 = vadd.f32 %v4339, %v4531
      %v4533 = vpop.f32.mrb[0].mxu0
      %v4534 = vadd.f32 %v4341, %v4533
      %4535 = vmatprep.mubr.bf16.mxu0 %v3805
      %4536 = vmatmul.mubr.bf16.gmra.mrb[0].mxu0 %v3804
      %v4537 = vpop.f32.mrb[0].mxu0
      %v4538 = vadd.f32 %v4345, %v4537
      %v4539 = vpop.f32.mrb[0].mxu0
      %v4540 = vadd.f32 %v4347, %v4539
      %v4541 = vpop.f32.mrb[0].mxu0
      %v4542 = vadd.f32 %v4349, %v4541
      %v4543 = vpop.f32.mrb[0].mxu0
      %v4544 = vadd.f32 %v4351, %v4543
      %4545 = vmatprep.mubr.bf16.mxu0 %v3809
      %4546 = vmatmul.mubr.bf16.gmra.mrb[0].mxu0 %v3808
      %v4547 = vpop.f32.mrb[0].mxu0
      %v4548 = vadd.f32 %v4355, %v4547
      %v4549 = vpop.f32.mrb[0].mxu0
      %v4550 = vadd.f32 %v4357, %v4549
      %v4551 = vpop.f32.mrb[0].mxu0
      %v4552 = vadd.f32 %v4359, %v4551
      %v4553 = vpop.f32.mrb[0].mxu0
      %v4554 = vadd.f32 %v4361, %v4553
      %4555 = vmatprep.mubr.bf16.mxu0 %v3813
      %4556 = vmatmul.mubr.bf16.gmra.mrb[0].mxu0 %v3812
      %v4557 = vpop.f32.mrb[0].mxu0
      %v4558 = vadd.f32 %v4365, %v4557
      %v4559 = vpop.f32.mrb[0].mxu0
      %v4560 = vadd.f32 %v4367, %v4559
      %v4561 = vpop.f32.mrb[0].mxu0
      %v4562 = vadd.f32 %v4369, %v4561
      %v4563 = vpop.f32.mrb[0].mxu0
      %v4564 = vadd.f32 %v4371, %v4563
      %4565 = vmatprep.mubr.bf16.mxu0 %v3817
      %4566 = vmatmul.mubr.bf16.gmra.mrb[0].mxu0 %v3816
      %v4567 = vpop.f32.mrb[0].mxu0
      %v4568 = vadd.f32 %v4375, %v4567
      %v4569 = vpop.f32.mrb[0].mxu0
      %v4570 = vadd.f32 %v4377, %v4569
      %v4571 = vpop.f32.mrb[0].mxu0
      %v4572 = vadd.f32 %v4379, %v4571
      %v4573 = vpop.f32.mrb[0].mxu0
      %v4574 = vadd.f32 %v4381, %v4573
      %4575 = vmatprep.mubr.bf16.mxu0 %v3821
      %4576 = vmatmul.mubr.bf16.gmra.mrb[0].mxu0 %v3820
      %v4577 = vpop.f32.mrb[0].mxu0
      %v4578 = vadd.f32 %v4385, %v4577
      %v4579 = vpop.f32.mrb[0].mxu0
      %v4580 = vadd.f32 %v4387, %v4579
      %v4581 = vpop.f32.mrb[0].mxu0
      %v4582 = vadd.f32 %v4389, %v4581
      %v4583 = vpop.f32.mrb[0].mxu0
      %v4584 = vadd.f32 %v4391, %v4583
      %4585 = vmatprep.mubr.bf16.mxu0 %v3825
      %4586 = vmatmul.mubr.bf16.gmra.mrb[0].mxu0 %v3824
      %v4587 = vpop.f32.mrb[0].mxu0
      %v4588 = vadd.f32 %v4395, %v4587
      %v4589 = vpop.f32.mrb[0].mxu0
      %v4590 = vadd.f32 %v4397, %v4589
      %v4591 = vpop.f32.mrb[0].mxu0
      %v4592 = vadd.f32 %v4399, %v4591
      %v4593 = vpop.f32.mrb[0].mxu0
      %v4594 = vadd.f32 %v4401, %v4593
      %4595 = vmatprep.mubr.bf16.mxu0 %v3829
      %4596 = vmatmul.mubr.bf16.gmra.mrb[0].mxu0 %v3828
      %v4597 = vpop.f32.mrb[0].mxu0
      %v4598 = vadd.f32 %v4405, %v4597
      %v4599 = vpop.f32.mrb[0].mxu0
      %v4600 = vadd.f32 %v4407, %v4599
      %v4601 = vpop.f32.mrb[0].mxu0
      %v4602 = vadd.f32 %v4409, %v4601
      %v4603 = vpop.f32.mrb[0].mxu0
      %v4604 = vadd.f32 %v4411, %v4603
      %4605 = vmatprep.mubr.bf16.mxu0 %v3833
      %4606 = vmatmul.mubr.bf16.gmra.mrb[0].mxu0 %v3832
      %v4607 = vpop.f32.mrb[0].mxu0
      %v4608 = vadd.f32 %v4415, %v4607
      %v4609 = vpop.f32.mrb[0].mxu0
      %v4610 = vadd.f32 %v4417, %v4609
      %v4611 = vpop.f32.mrb[0].mxu0
      %v4612 = vadd.f32 %v4419, %v4611
      %v4613 = vpop.f32.mrb[0].mxu0
      %v4614 = vadd.f32 %v4421, %v4613
      %4615 = vdwg.mxu0
      %vm4616 = vcmp.ge.f32.partialorder %v4458, 0.0
      %vm4617 = vcmp.ge.f32.partialorder %v4460, 0.0
      %vm4618 = vcmp.ge.f32.partialorder %v4462, 0.0
      %vm4619 = vcmp.ge.f32.partialorder %v4464, 0.0
      %vm4620 = vcmp.ge.f32.partialorder %v4468, 0.0
      %vm4621 = vcmp.ge.f32.partialorder %v4470, 0.0
      %vm4622 = vcmp.ge.f32.partialorder %v4472, 0.0
      %vm4623 = vcmp.ge.f32.partialorder %v4474, 0.0
      %vm4624 = vcmp.ge.f32.partialorder %v4478, 0.0
      %vm4625 = vcmp.ge.f32.partialorder %v4480, 0.0
      %vm4626 = vcmp.ge.f32.partialorder %v4482, 0.0
      %vm4627 = vcmp.ge.f32.partialorder %v4484, 0.0
      %vm4628 = vcmp.ge.f32.partialorder %v4488, 0.0
      %vm4629 = vcmp.ge.f32.partialorder %v4490, 0.0
      %vm4630 = vcmp.ge.f32.partialorder %v4492, 0.0
      %vm4631 = vcmp.ge.f32.partialorder %v4494, 0.0
      %vm4632 = vcmp.ge.f32.partialorder %v4498, 0.0
      %vm4633 = vcmp.ge.f32.partialorder %v4500, 0.0
      %vm4634 = vcmp.ge.f32.partialorder %v4502, 0.0
      %vm4635 = vcmp.ge.f32.partialorder %v4504, 0.0
      %vm4636 = vcmp.ge.f32.partialorder %v4508, 0.0
      %vm4637 = vcmp.ge.f32.partialorder %v4510, 0.0
      %vm4638 = vcmp.ge.f32.partialorder %v4512, 0.0
      %vm4639 = vcmp.ge.f32.partialorder %v4514, 0.0
      %vm4640 = vcmp.ge.f32.partialorder %v4518, 0.0
      %vm4641 = vcmp.ge.f32.partialorder %v4520, 0.0
      %vm4642 = vcmp.ge.f32.partialorder %v4522, 0.0
      %vm4643 = vcmp.ge.f32.partialorder %v4524, 0.0
      %vm4644 = vcmp.ge.f32.partialorder %v4528, 0.0
      %vm4645 = vcmp.ge.f32.partialorder %v4530, 0.0
      %vm4646 = vcmp.ge.f32.partialorder %v4532, 0.0
      %vm4647 = vcmp.ge.f32.partialorder %v4534, 0.0
      %vm4648 = vcmp.ge.f32.partialorder %v4538, 0.0
      %vm4649 = vcmp.ge.f32.partialorder %v4540, 0.0
      %vm4650 = vcmp.ge.f32.partialorder %v4542, 0.0
      %vm4651 = vcmp.ge.f32.partialorder %v4544, 0.0
      %vm4652 = vcmp.ge.f32.partialorder %v4548, 0.0
      %vm4653 = vcmp.ge.f32.partialorder %v4550, 0.0
      %vm4654 = vcmp.ge.f32.partialorder %v4552, 0.0
      %vm4655 = vcmp.ge.f32.partialorder %v4554, 0.0
      %vm4656 = vcmp.ge.f32.partialorder %v4558, 0.0
      %vm4657 = vcmp.ge.f32.partialorder %v4560, 0.0
      %vm4658 = vcmp.ge.f32.partialorder %v4562, 0.0
      %vm4659 = vcmp.ge.f32.partialorder %v4564, 0.0
      %vm4660 = vcmp.ge.f32.partialorder %v4568, 0.0
      %vm4661 = vcmp.ge.f32.partialorder %v4570, 0.0
      %vm4662 = vcmp.ge.f32.partialorder %v4572, 0.0
      %vm4663 = vcmp.ge.f32.partialorder %v4574, 0.0
      %vm4664 = vcmp.ge.f32.partialorder %v4578, 0.0
      %vm4665 = vcmp.ge.f32.partialorder %v4580, 0.0
      %vm4666 = vcmp.ge.f32.partialorder %v4582, 0.0
      %vm4667 = vcmp.ge.f32.partialorder %v4584, 0.0
      %vm4668 = vcmp.ge.f32.partialorder %v4588, 0.0
      %vm4669 = vcmp.ge.f32.partialorder %v4590, 0.0
      %vm4670 = vcmp.ge.f32.partialorder %v4592, 0.0
      %vm4671 = vcmp.ge.f32.partialorder %v4594, 0.0
      %vm4672 = vcmp.ge.f32.partialorder %v4598, 0.0
      %vm4673 = vcmp.ge.f32.partialorder %v4600, 0.0
      %vm4674 = vcmp.ge.f32.partialorder %v4602, 0.0
      %vm4675 = vcmp.ge.f32.partialorder %v4604, 0.0
      %vm4676 = vcmp.ge.f32.partialorder %v4608, 0.0
      %vm4677 = vcmp.ge.f32.partialorder %v4610, 0.0
      %vm4678 = vcmp.ge.f32.partialorder %v4612, 0.0
      %vm4679 = vcmp.ge.f32.partialorder %v4614, 0.0
      %v4680 = vmul.f32 %v4458, 0.2
      %v4681 = vmul.f32 %v4460, 0.2
      %v4682 = vmul.f32 %v4462, 0.2
      %v4683 = vmul.f32 %v4464, 0.2
      %v4684 = vmul.f32 %v4468, 0.2
      %v4685 = vmul.f32 %v4470, 0.2
      %v4686 = vmul.f32 %v4472, 0.2
      %v4687 = vmul.f32 %v4474, 0.2
      %v4688 = vmul.f32 %v4478, 0.2
      %v4689 = vmul.f32 %v4480, 0.2
      %v4690 = vmul.f32 %v4482, 0.2
      %v4691 = vmul.f32 %v4484, 0.2
      %v4692 = vmul.f32 %v4488, 0.2
      %v4693 = vmul.f32 %v4490, 0.2
      %v4694 = vmul.f32 %v4492, 0.2
      %v4695 = vmul.f32 %v4494, 0.2
      %v4696 = vmul.f32 %v4498, 0.2
      %v4697 = vmul.f32 %v4500, 0.2
      %v4698 = vmul.f32 %v4502, 0.2
      %v4699 = vmul.f32 %v4504, 0.2
      %v4700 = vmul.f32 %v4508, 0.2
      %v4701 = vmul.f32 %v4510, 0.2
      %v4702 = vmul.f32 %v4512, 0.2
      %v4703 = vmul.f32 %v4514, 0.2
      %v4704 = vmul.f32 %v4518, 0.2
      %v4705 = vmul.f32 %v4520, 0.2
      %v4706 = vmul.f32 %v4522, 0.2
      %v4707 = vmul.f32 %v4524, 0.2
      %v4708 = vmul.f32 %v4528, 0.2
      %v4709 = vmul.f32 %v4530, 0.2
      %v4710 = vmul.f32 %v4532, 0.2
      %v4711 = vmul.f32 %v4534, 0.2
      %v4712 = vmul.f32 %v4538, 0.2
      %v4713 = vmul.f32 %v4540, 0.2
      %v4714 = vmul.f32 %v4542, 0.2
      %v4715 = vmul.f32 %v4544, 0.2
      %v4716 = vmul.f32 %v4548, 0.2
      %v4717 = vmul.f32 %v4550, 0.2
      %v4718 = vmul.f32 %v4552, 0.2
      %v4719 = vmul.f32 %v4554, 0.2
      %v4720 = vmul.f32 %v4558, 0.2
      %v4721 = vmul.f32 %v4560, 0.2
      %v4722 = vmul.f32 %v4562, 0.2
      %v4723 = vmul.f32 %v4564, 0.2
      %v4724 = vmul.f32 %v4568, 0.2
      %v4725 = vmul.f32 %v4570, 0.2
      %v4726 = vmul.f32 %v4572, 0.2
      %v4727 = vmul.f32 %v4574, 0.2
      %v4728 = vmul.f32 %v4578, 0.2
      %v4729 = vmul.f32 %v4580, 0.2
      %v4730 = vmul.f32 %v4582, 0.2
      %v4731 = vmul.f32 %v4584, 0.2
      %v4732 = vmul.f32 %v4588, 0.2
      %v4733 = vmul.f32 %v4590, 0.2
      %v4734 = vmul.f32 %v4592, 0.2
      %v4735 = vmul.f32 %v4594, 0.2
      %v4736 = vmul.f32 %v4598, 0.2
      %v4737 = vmul.f32 %v4600, 0.2
      %v4738 = vmul.f32 %v4602, 0.2
      %v4739 = vmul.f32 %v4604, 0.2
      %v4740 = vmul.f32 %v4608, 0.2
      %v4741 = vmul.f32 %v4610, 0.2
      %v4742 = vmul.f32 %v4612, 0.2
      %v4743 = vmul.f32 %v4614, 0.2
      %v4744 = vsel %vm4616, %v4458, %v4680
      %v4745 = vsel %vm4617, %v4460, %v4681
      %v4746 = vsel %vm4618, %v4462, %v4682
      %v4747 = vsel %vm4619, %v4464, %v4683
      %v4748 = vsel %vm4620, %v4468, %v4684
      %v4749 = vsel %vm4621, %v4470, %v4685
      %v4750 = vsel %vm4622, %v4472, %v4686
      %v4751 = vsel %vm4623, %v4474, %v4687
      %v4752 = vsel %vm4624, %v4478, %v4688
      %v4753 = vsel %vm4625, %v4480, %v4689
      %v4754 = vsel %vm4626, %v4482, %v4690
      %v4755 = vsel %vm4627, %v4484, %v4691
      %v4756 = vsel %vm4628, %v4488, %v4692
      %v4757 = vsel %vm4629, %v4490, %v4693
      %v4758 = vsel %vm4630, %v4492, %v4694
      %v4759 = vsel %vm4631, %v4494, %v4695
      %v4760 = vsel %vm4632, %v4498, %v4696
      %v4761 = vsel %vm4633, %v4500, %v4697
      %v4762 = vsel %vm4634, %v4502, %v4698
      %v4763 = vsel %vm4635, %v4504, %v4699
      %v4764 = vsel %vm4636, %v4508, %v4700
      %v4765 = vsel %vm4637, %v4510, %v4701
      %v4766 = vsel %vm4638, %v4512, %v4702
      %v4767 = vsel %vm4639, %v4514, %v4703
      %v4768 = vsel %vm4640, %v4518, %v4704
      %v4769 = vsel %vm4641, %v4520, %v4705
      %v4770 = vsel %vm4642, %v4522, %v4706
      %v4771 = vsel %vm4643, %v4524, %v4707
      %v4772 = vsel %vm4644, %v4528, %v4708
      %v4773 = vsel %vm4645, %v4530, %v4709
      %v4774 = vsel %vm4646, %v4532, %v4710
      %v4775 = vsel %vm4647, %v4534, %v4711
      %v4776 = vsel %vm4648, %v4538, %v4712
      %v4777 = vsel %vm4649, %v4540, %v4713
      %v4778 = vsel %vm4650, %v4542, %v4714
      %v4779 = vsel %vm4651, %v4544, %v4715
      %v4780 = vsel %vm4652, %v4548, %v4716
      %v4781 = vsel %vm4653, %v4550, %v4717
      %v4782 = vsel %vm4654, %v4552, %v4718
      %v4783 = vsel %vm4655, %v4554, %v4719
      %v4784 = vsel %vm4656, %v4558, %v4720
      %v4785 = vsel %vm4657, %v4560, %v4721
      %v4786 = vsel %vm4658, %v4562, %v4722
      %v4787 = vsel %vm4659, %v4564, %v4723
      %v4788 = vsel %vm4660, %v4568, %v4724
      %v4789 = vsel %vm4661, %v4570, %v4725
      %v4790 = vsel %vm4662, %v4572, %v4726
      %v4791 = vsel %vm4663, %v4574, %v4727
      %v4792 = vsel %vm4664, %v4578, %v4728
      %v4793 = vsel %vm4665, %v4580, %v4729
      %v4794 = vsel %vm4666, %v4582, %v4730
      %v4795 = vsel %vm4667, %v4584, %v4731
      %v4796 = vsel %vm4668, %v4588, %v4732
      %v4797 = vsel %vm4669, %v4590, %v4733
      %v4798 = vsel %vm4670, %v4592, %v4734
      %v4799 = vsel %vm4671, %v4594, %v4735
      %v4800 = vsel %vm4672, %v4598, %v4736
      %v4801 = vsel %vm4673, %v4600, %v4737
      %v4802 = vsel %vm4674, %v4602, %v4738
      %v4803 = vsel %vm4675, %v4604, %v4739
      %v4804 = vsel %vm4676, %v4608, %v4740
      %v4805 = vsel %vm4677, %v4610, %v4741
      %v4806 = vsel %vm4678, %v4612, %v4742
      %v4807 = vsel %vm4679, %v4614, %v4743
      %v4808 = vpack.c.bf16 %v4746, %v4744
      %v4809 = vpack.c.bf16 %v4747, %v4745
      %v4810 = vpack.c.bf16 %v4750, %v4748
      %v4811 = vpack.c.bf16 %v4751, %v4749
      %v4812 = vpack.c.bf16 %v4754, %v4752
      %v4813 = vpack.c.bf16 %v4755, %v4753
      %v4814 = vpack.c.bf16 %v4758, %v4756
      %v4815 = vpack.c.bf16 %v4759, %v4757
      %v4816 = vpack.c.bf16 %v4762, %v4760
      %v4817 = vpack.c.bf16 %v4763, %v4761
      %v4818 = vpack.c.bf16 %v4766, %v4764
      %v4819 = vpack.c.bf16 %v4767, %v4765
      %v4820 = vpack.c.bf16 %v4770, %v4768
      %v4821 = vpack.c.bf16 %v4771, %v4769
      %v4822 = vpack.c.bf16 %v4774, %v4772
      %v4823 = vpack.c.bf16 %v4775, %v4773
      %v4824 = vpack.c.bf16 %v4778, %v4776
      %v4825 = vpack.c.bf16 %v4779, %v4777
      %v4826 = vpack.c.bf16 %v4782, %v4780
      %v4827 = vpack.c.bf16 %v4783, %v4781
      %v4828 = vpack.c.bf16 %v4786, %v4784
      %v4829 = vpack.c.bf16 %v4787, %v4785
      %v4830 = vpack.c.bf16 %v4790, %v4788
      %v4831 = vpack.c.bf16 %v4791, %v4789
      %v4832 = vpack.c.bf16 %v4794, %v4792
      %v4833 = vpack.c.bf16 %v4795, %v4793
      %v4834 = vpack.c.bf16 %v4798, %v4796
      %v4835 = vpack.c.bf16 %v4799, %v4797
      %v4836 = vpack.c.bf16 %v4802, %v4800
      %v4837 = vpack.c.bf16 %v4803, %v4801
      %v4838 = vpack.c.bf16 %v4806, %v4804
      %v4839 = vpack.c.bf16 %v4807, %v4805
      %v4840 = vld [vmem:[%s6] sm:$0xff]
      %v4842 = vunpack.c.l.b16 %v4840
      %v4843 = vunpack.c.h.b16 %v4840
      %v4844 = vpack.c.b16 %v4842, %v4842
      %v4845 = vpack.c.b16 %v4843, %v4843
      %4848 = vmatprep.subr.bf16.mxu0 %v4809
      %4849 = vmatpush1.bf16.xpose.msra.mxu0 %v4808
      %4850 = vmatprep.subr.bf16.mxu0 %v4811
      %4851 = vmatpush1.bf16.xpose.msra.mxu0 %v4810
      %4852 = vmatprep.subr.bf16.mxu0 %v4813
      %4853 = vmatpush1.bf16.xpose.msra.mxu0 %v4812
      %4854 = vmatprep.subr.bf16.mxu0 %v4815
      %4855 = vmatpush1.bf16.xpose.msra.mxu0 %v4814
      %4856 = vmatprep.subr.bf16.mxu0 %v4817
      %4857 = vmatpush1.bf16.xpose.msra.mxu0 %v4816
      %4858 = vmatprep.subr.bf16.mxu0 %v4819
      %4859 = vmatpush1.bf16.xpose.msra.mxu0 %v4818
      %4860 = vmatprep.subr.bf16.mxu0 %v4821
      %4861 = vmatpush1.bf16.xpose.msra.mxu0 %v4820
      %4862 = vmatprep.subr.bf16.mxu0 %v4823
      %4863 = vmatpush1.bf16.xpose.msra.mxu0 %v4822
      %4864 = vmatprep.subr.bf16.mxu0 %v4825
      %4865 = vmatpush1.bf16.xpose.msra.mxu0 %v4824
      %4866 = vmatprep.subr.bf16.mxu0 %v4827
      %4867 = vmatpush1.bf16.xpose.msra.mxu0 %v4826
      %4868 = vmatprep.subr.bf16.mxu0 %v4829
      %4869 = vmatpush1.bf16.xpose.msra.mxu0 %v4828
      %4870 = vmatprep.subr.bf16.mxu0 %v4831
      %4871 = vmatpush1.bf16.xpose.msra.mxu0 %v4830
      %4872 = vmatprep.subr.bf16.mxu0 %v4833
      %4873 = vmatpush1.bf16.xpose.msra.mxu0 %v4832
      %4874 = vmatprep.subr.bf16.mxu0 %v4835
      %4875 = vmatpush1.bf16.xpose.msra.mxu0 %v4834
      %4876 = vmatprep.subr.bf16.mxu0 %v4837
      %4877 = vmatpush1.bf16.xpose.msra.mxu0 %v4836
      %4878 = vmatprep.subr.bf16.mxu0 %v4839
      %4879 = vmatpush1.bf16.xpose.msra.mxu0 %v4838
      %4880 = vmatprep.mubr.bf16.mxu0 %v4845
      %4881 = vmatmul.mubr.bf16.gmra.mrb[0].mxu0 %v4844
      %v4882 = vpop.f32.mrb[0].mxu0
      %v4883 = vadd.f32 0.0, %v4882
      %v4884 = vpop.f32.mrb[0].mxu0
      %v4885 = vadd.f32 0.0, %v4884
      %v4886 = vpop.f32.mrb[0].mxu0
      %v4887 = vpop.f32.mrb[0].mxu0
      %4888 = vdwg.mxu0
      %s4889 = sld [smem:[#allocation3]]
      %v4890 = vstv %s4889
      %v4891 = vadd.f32 %v4883, %v4890
      %v4892 = vadd.f32 %v4885, %v4890
      %v4893 = vxor.u32 %v4891, 2147483648
      %v4894 = vxor.u32 %v4892, 2147483648
      %v4895 = vmul.f32 %v4893, 1.442695
      %v4896 = vpow.pop %v4895
      %v4897 = vmul.f32 %v4894, 1.442695
      %v4898 = vpow.pop %v4897
      %v4899 = vadd.f32 %v4896, 1.0
      %v4900 = vadd.f32 %v4898, 1.0
      %v4901 = vrcp.pop %v4899
      %v4902 = vmul.f32 1.0, %v4901
      %v4903 = vrcp.pop %v4900
      %v4904 = vmul.f32 1.0, %v4903
      %v4907 = vcombine.low %v4902, %v4904
      %v4909 = vunpack.c.l.s4 1966171168
      %v4910 = vunpack.c.0.s8 %v4909
      %v4911 = vlaneseq
      %v4912 = vshrl.u32 %v4911, 7
      %v4913 = vsub.s32 %v4910, %v4912
      %v4914 = vrot.slane %v4907, %v4913
      %v4916 = vunpack.c.l.s4 1966171168
      %v4917 = vunpack.c.0.s8 %v4916
      %v4918 = vlaneseq
      %v4919 = vshrl.u32 %v4918, 7
      %v4920 = vsub.s32 %v4917, %v4919
      %v4921 = vrot.slane %v4914, %v4920
      %v4923 = vlaneseq
      %vm4924 = vcmp.ge.s32.totalorder %v4923, 0
      %vm4925 = vcmp.lt.s32.totalorder %v4923, 256
      %vm4926 = vmand %vm4924, %vm4925
      %4927 = vst.msk [vmem:[%s256] sm:$0x3] %vm4926, %v4921
      %s4928 = smul.u32 2, %s19
      %p4929 = scmp.lt.s32.totalorder %s4928, 3
      %s4930 = scalar_select %p4929, %s4928, 3
      %s4931 = scalar_lea.vmem %s7, %s4930
      // Predicated region
      $region45: #{_forward_impl.1} parent=43 // pred_check
        %p4932 = pneg %p168
      $region46: #{_forward_impl.1} parent=43 // pred_check_branch
        %4934 = sbr.rel (%p4932) target = $region48
      $region47: #{_forward_impl.1} parent=43 // pred_region
        %s4935 = smul.u32 2, %s19
      $region48: #{_forward_impl.1} parent=43 // pred_fallthru
        _
    $region44: #{_forward_impl.1} parent=5 // pred_fallthru
      _
    %p4936 = scmp.le.s32.totalorder 2, %s14
    // Predicated region
    $region49: #{_forward_impl.1} parent=5 // pred_check
      %p4937 = pneg %p4936
    $region50: #{_forward_impl.1} parent=5 // pred_check_branch
      %4939 = sbr.rel (%p4937) target = $region52
    $region51: #{_forward_impl.1} parent=5 // pred_region
      %s4940 = ssub.s32 %s14, 2
      // Predicated region
      $region53: #{_forward_impl.1} parent=51 // pred_check
        %p4941 = pneg %p174
      $region54: #{_forward_impl.1} parent=51 // pred_check_branch
        %4943 = sbr.rel (%p4941) target = $region56
      $region55: #{_forward_impl.1} parent=51 // pred_region
        %s4944 = smul.u32 2, %s20
        %p4945 = scmp.lt.s32.totalorder %s4944, 3
        %s4946 = scalar_select %p4945, %s4944, 3
        %s4947 = scalar_lea.vmem %s7, %s4946
      $region56: #{_forward_impl.1} parent=51 // pred_fallthru
        _
    $region52: #{_forward_impl.1} parent=5 // pred_fallthru
      _
  $region6: #{_forward_impl.1} parent=0 // loop_footer
    %s18 = sadd.s32 1, %s14
  $region7: #{_forward_impl.1} parent=0 // loop_footer_branch
    %13 = sbr.rel target = $region3
  $region8: #{_forward_impl.1} parent=0 // loop_exit
    _

</llo_original>
